<compile_context>
chip_gen: v7x
topology: tpu7x:2x2x1
jax: 0.10.0
libtpu: 0.0.40
codegen_flags: <defaults>
</compile_context>

<pallas_src>
import jax
import jax.numpy as jnp
from jax.experimental import pallas as pl
from jax.experimental.pallas import tpu as pltpu


def nbeats_block_kernel(
    x_ref,
    w1_ref, b1_ref, w2_ref, b2_ref, w3_ref, b3_ref, w4_ref, b4_ref,
    wtheta_ref, btheta_ref, wheads_ref, bheads_ref,
    out_ref,
):
    def linear(h, w_ref, b_ref):
        return (
            jnp.dot(h, w_ref[...], preferred_element_type=jnp.float32)
            + b_ref[...]
        )

    x = x_ref[...]

    # Stem: 4 x (Linear -> ReLU); Dropout is identity in eval mode.
    h = jnp.maximum(linear(x, w1_ref, b1_ref), 0.0)
    h = jnp.maximum(linear(h, w2_ref, b2_ref), 0.0)
    h = jnp.maximum(linear(h, w3_ref, b3_ref), 0.0)
    h = jnp.maximum(linear(h, w4_ref, b4_ref), 0.0)

    # Fused theta projection: theta = [theta_b | theta_f]  (TB, 2*HID)
    theta = linear(h, wtheta_ref, btheta_ref)

    # Fused block-diagonal heads -> lane-dense (TB, out_pad) slab:
    #   slab[:, :L]    = theta_b @ W_gb + b_gb   (backcast)
    #   slab[:, L:L+H] = theta_f @ W_gf + b_gf   (forecast)
    out_ref[...] = linear(theta, wheads_ref, bheads_ref).astype(out_ref.dtype)


def init_linear_params(key, in_features, out_features, dtype=jnp.float32):
    """Deterministic PyTorch-style init: U(-1/sqrt(in), 1/sqrt(in))."""
    kw, kb = jax.random.split(key)
    bound = 1.0 / jnp.sqrt(jnp.array(in_features, dtype=jnp.float32))
    # stored as (in, out) so the kernel does x @ W
    w = jax.random.uniform(kw, (in_features, out_features), dtype,
                           minval=-bound, maxval=bound)
    b = jax.random.uniform(kb, (1, out_features), dtype,
                           minval=-bound, maxval=bound)
    return w, b


def nbeats_block(x, params, *, tb=None):
    """x: (B, H*n) float32. params: tuple of 8 (w, b) pairs in module order:
    stem1, stem2, stem3, stem4, b1, b2, g_b, g_f (weights stored as (in, out))."""
    (w1, b1), (w2, b2), (w3, b3), (w4, b4), \
        (wb1, bb1), (wb2, bb2), (wgb, bgb), (wgf, bgf) = params

    B, L = x.shape
    HID = w1.shape[1]
    H = wgf.shape[1]
    assert wgb.shape[1] == L

    # --- Fuse the two theta projections: (HID, 2*HID), exact same arithmetic.
    w_theta = jnp.concatenate([wb1, wb2], axis=1)
    b_theta = jnp.concatenate([bb1, bb2], axis=1)

    # --- Fuse the heads block-diagonally and pad lanes to a multiple of 128.
    out_w = L + H
    out_pad = ((out_w + 127) // 128) * 128
    w_heads = jnp.zeros((2 * HID, out_pad), dtype=wgb.dtype)
    w_heads = w_heads.at[:HID, :L].set(wgb)
    w_heads = w_heads.at[HID:, L:L + H].set(wgf)
    b_heads = jnp.zeros((1, out_pad), dtype=bgb.dtype)
    b_heads = b_heads.at[:, :L].set(bgb)
    b_heads = b_heads.at[:, L:L + H].set(bgf)

    # --- Batch tiling (256 fills the v6e/v7x MXU; small B falls back to B).
    if tb is None:
        tb = min(256, B)
    b_pad = pl.cdiv(B, tb) * tb
    x_in = jnp.pad(x, ((0, b_pad - B), (0, 0))) if b_pad != B else x
    grid = (b_pad // tb,)

    weights = [w1, b1, w2, b2, w3, b3, w4, b4,
               w_theta, b_theta, w_heads, b_heads]

    # Weights: full-array blocks with a constant index_map -> VMEM-resident
    # across grid steps (one-time HBM fetch).
    weight_specs = [pl.BlockSpec(a.shape, lambda i: (0, 0)) for a in weights]

    flops = 2 * b_pad * (L * HID + 3 * HID * HID
                         + HID * (2 * HID) + (2 * HID) * out_pad)
    bytes_accessed = 4 * (b_pad * L + b_pad * out_pad
                          + sum(int(a.size) for a in weights))
    cost = pl.CostEstimate(flops=flops, transcendentals=0,
                           bytes_accessed=bytes_accessed)

    out = pl.pallas_call(
        nbeats_block_kernel,
        out_shape=jax.ShapeDtypeStruct((b_pad, out_pad), x.dtype),
        grid=grid,
        in_specs=[pl.BlockSpec((tb, L), lambda i: (i, 0))] + weight_specs,
        out_specs=pl.BlockSpec((tb, out_pad), lambda i: (i, 0)),
        compiler_params=pltpu.CompilerParams(
            dimension_semantics=("parallel",)),  # dual-TC on v7x
        cost_estimate=cost,
    )(x_in, *weights)

    # Split the lane-dense slab back into (backcast, forecast) and trim padding.
    x_bc = out[:B, :L]
    x_fc = out[:B, L:L + H]
    return x_bc, x_fc

    # TODO(synk): bf16 weight storage (f32 accumulation) would halve the weight
    # HBM traffic; kept f32 here to preserve exact PyTorch-parity numerics.


def nbeats_block_ref(x, params):
    """Pure-JAX reference for correctness check."""
    (w1, b1), (w2, b2), (w3, b3), (w4, b4), (wb1, bb1), (wb2, bb2), \
        (wgb, bgb), (wgf, bgf) = params
    h = jnp.maximum(x @ w1 + b1, 0.0)
    h = jnp.maximum(h @ w2 + b2, 0.0)
    h = jnp.maximum(h @ w3 + b3, 0.0)
    h = jnp.maximum(h @ w4 + b4, 0.0)
    theta_b = h @ wb1 + bb1
    theta_f = h @ wb2 + bb2
    return theta_b @ wgb + bgb, theta_f @ wgf + bgf


if __name__ == "__main__":
    # Small shapes consistent with the module: H=8 forecast horizon, n=4
    # lookback multiplier -> input length H*n = 32; hidden width fixed at 512.
    H, n, B = 8, 4, 8
    L = H * n
    HID = 512

    key = jax.random.PRNGKey(0)
    keys = jax.random.split(key, 9)

    params = (
        init_linear_params(keys[0], L, HID),      # stem Linear 1
        init_linear_params(keys[1], HID, HID),    # stem Linear 2
        init_linear_params(keys[2], HID, HID),    # stem Linear 3
        init_linear_params(keys[3], HID, HID),    # stem Linear 4
        init_linear_params(keys[4], HID, HID),    # b1
        init_linear_params(keys[5], HID, HID),    # b2
        init_linear_params(keys[6], HID, L),      # g_b
        init_linear_params(keys[7], HID, H),      # g_f
    )

    x = jax.random.normal(keys[8], (B, L), dtype=jnp.float32)

    x_bc, x_fc = nbeats_block(x, params)
    jax.block_until_ready((x_bc, x_fc))

    x_bc_ref, x_fc_ref = nbeats_block_ref(x, params)
    assert x_bc.shape == (B, L) and x_fc.shape == (B, H)
    assert jnp.allclose(x_bc, x_bc_ref, atol=1e-4, rtol=1e-4)
    assert jnp.allclose(x_fc, x_fc_ref, atol=1e-4, rtol=1e-4)

    print("KERNEL_OK")
</pallas_src>

<mosaic_0001>
module attributes {stable_mosaic.version = 11 : i64} {
  func.func @nbeats_block_kernel(%arg0: i32, %arg1: memref<8x32xf32, #tpu.memory_space<vmem>>, %arg2: memref<32x512xf32, #tpu.memory_space<vmem>>, %arg3: memref<1x512xf32, #tpu.memory_space<vmem>>, %arg4: memref<512x512xf32, #tpu.memory_space<vmem>>, %arg5: memref<1x512xf32, #tpu.memory_space<vmem>>, %arg6: memref<512x512xf32, #tpu.memory_space<vmem>>, %arg7: memref<1x512xf32, #tpu.memory_space<vmem>>, %arg8: memref<512x512xf32, #tpu.memory_space<vmem>>, %arg9: memref<1x512xf32, #tpu.memory_space<vmem>>, %arg10: memref<512x1024xf32, #tpu.memory_space<vmem>>, %arg11: memref<1x1024xf32, #tpu.memory_space<vmem>>, %arg12: memref<1024x128xf32, #tpu.memory_space<vmem>>, %arg13: memref<1x128xf32, #tpu.memory_space<vmem>>, %arg14: memref<8x128xf32, #tpu.memory_space<vmem>>) attributes {dimension_semantics = [#tpu.dimension_semantics<parallel>], iteration_bounds = array<i64: 1>, scalar_prefetch = 0 : i64, scratch_operands = 0 : i64, tpu.core_type = #tpu.core_type<tc>, window_params = [{transform_indices = @transform_0, window_bounds = array<i64: 8, 32>}, {pipeline_mode = #tpu.pipeline_mode<synchronous>, transform_indices = @transform_1, window_bounds = array<i64: 32, 512>}, {pipeline_mode = #tpu.pipeline_mode<synchronous>, transform_indices = @transform_2, window_bounds = array<i64: 1, 512>}, {pipeline_mode = #tpu.pipeline_mode<synchronous>, transform_indices = @transform_3, window_bounds = array<i64: 512, 512>}, {pipeline_mode = #tpu.pipeline_mode<synchronous>, transform_indices = @transform_4, window_bounds = array<i64: 1, 512>}, {pipeline_mode = #tpu.pipeline_mode<synchronous>, transform_indices = @transform_5, window_bounds = array<i64: 512, 512>}, {pipeline_mode = #tpu.pipeline_mode<synchronous>, transform_indices = @transform_6, window_bounds = array<i64: 1, 512>}, {pipeline_mode = #tpu.pipeline_mode<synchronous>, transform_indices = @transform_7, window_bounds = array<i64: 512, 512>}, {pipeline_mode = #tpu.pipeline_mode<synchronous>, transform_indices = @transform_8, window_bounds = array<i64: 1, 512>}, {pipeline_mode = #tpu.pipeline_mode<synchronous>, transform_indices = @transform_9, window_bounds = array<i64: 512, 1024>}, {pipeline_mode = #tpu.pipeline_mode<synchronous>, transform_indices = @transform_10, window_bounds = array<i64: 1, 1024>}, {pipeline_mode = #tpu.pipeline_mode<synchronous>, transform_indices = @transform_11, window_bounds = array<i64: 1024, 128>}, {pipeline_mode = #tpu.pipeline_mode<synchronous>, transform_indices = @transform_12, window_bounds = array<i64: 1, 128>}, {transform_indices = @transform_13, window_bounds = array<i64: 8, 128>}]} {
    %c0 = arith.constant 0 : index
    %c0_0 = arith.constant 0 : index
    %0 = vector.load %arg1[%c0, %c0_0] : memref<8x32xf32, #tpu.memory_space<vmem>>, vector<8x32xf32>
    %c0_1 = arith.constant 0 : index
    %c0_2 = arith.constant 0 : index
    %1 = vector.load %arg2[%c0_1, %c0_2] : memref<32x512xf32, #tpu.memory_space<vmem>>, vector<32x512xf32>
    %cst = arith.constant dense<0.000000e+00> : vector<8x512xf32>
    %2 = tpu.matmul %0, %1, %cst {dimension_numbers = #tpu.dot_dimension_numbers<[1], [0], [0], [1], [0, 0, 1, 1], [], []>} : vector<8x32xf32>, vector<32x512xf32>, vector<8x512xf32> -> vector<8x512xf32>
    %c0_3 = arith.constant 0 : index
    %c0_4 = arith.constant 0 : index
    %3 = vector.load %arg3[%c0_3, %c0_4] : memref<1x512xf32, #tpu.memory_space<vmem>>, vector<1x512xf32>
    %4 = vector.broadcast %3 : vector<1x512xf32> to vector<8x512xf32>
    %5 = arith.addf %2, %4 : vector<8x512xf32>
    %cst_5 = arith.constant 0.000000e+00 : f32
    %6 = vector.broadcast %cst_5 : f32 to vector<8x512xf32>
    %7 = arith.maximumf %5, %6 : vector<8x512xf32>
    %c0_6 = arith.constant 0 : index
    %c0_7 = arith.constant 0 : index
    %8 = vector.load %arg4[%c0_6, %c0_7] : memref<512x512xf32, #tpu.memory_space<vmem>>, vector<512x512xf32>
    %cst_8 = arith.constant dense<0.000000e+00> : vector<8x512xf32>
    %9 = tpu.matmul %7, %8, %cst_8 {dimension_numbers = #tpu.dot_dimension_numbers<[1], [0], [0], [1], [0, 0, 1, 1], [], []>} : vector<8x512xf32>, vector<512x512xf32>, vector<8x512xf32> -> vector<8x512xf32>
    %c0_9 = arith.constant 0 : index
    %c0_10 = arith.constant 0 : index
    %10 = vector.load %arg5[%c0_9, %c0_10] : memref<1x512xf32, #tpu.memory_space<vmem>>, vector<1x512xf32>
    %11 = vector.broadcast %10 : vector<1x512xf32> to vector<8x512xf32>
    %12 = arith.addf %9, %11 : vector<8x512xf32>
    %cst_11 = arith.constant 0.000000e+00 : f32
    %13 = vector.broadcast %cst_11 : f32 to vector<8x512xf32>
    %14 = arith.maximumf %12, %13 : vector<8x512xf32>
    %c0_12 = arith.constant 0 : index
    %c0_13 = arith.constant 0 : index
    %15 = vector.load %arg6[%c0_12, %c0_13] : memref<512x512xf32, #tpu.memory_space<vmem>>, vector<512x512xf32>
    %cst_14 = arith.constant dense<0.000000e+00> : vector<8x512xf32>
    %16 = tpu.matmul %14, %15, %cst_14 {dimension_numbers = #tpu.dot_dimension_numbers<[1], [0], [0], [1], [0, 0, 1, 1], [], []>} : vector<8x512xf32>, vector<512x512xf32>, vector<8x512xf32> -> vector<8x512xf32>
    %c0_15 = arith.constant 0 : index
    %c0_16 = arith.constant 0 : index
    %17 = vector.load %arg7[%c0_15, %c0_16] : memref<1x512xf32, #tpu.memory_space<vmem>>, vector<1x512xf32>
    %18 = vector.broadcast %17 : vector<1x512xf32> to vector<8x512xf32>
    %19 = arith.addf %16, %18 : vector<8x512xf32>
    %cst_17 = arith.constant 0.000000e+00 : f32
    %20 = vector.broadcast %cst_17 : f32 to vector<8x512xf32>
    %21 = arith.maximumf %19, %20 : vector<8x512xf32>
    %c0_18 = arith.constant 0 : index
    %c0_19 = arith.constant 0 : index
    %22 = vector.load %arg8[%c0_18, %c0_19] : memref<512x512xf32, #tpu.memory_space<vmem>>, vector<512x512xf32>
    %cst_20 = arith.constant dense<0.000000e+00> : vector<8x512xf32>
    %23 = tpu.matmul %21, %22, %cst_20 {dimension_numbers = #tpu.dot_dimension_numbers<[1], [0], [0], [1], [0, 0, 1, 1], [], []>} : vector<8x512xf32>, vector<512x512xf32>, vector<8x512xf32> -> vector<8x512xf32>
    %c0_21 = arith.constant 0 : index
    %c0_22 = arith.constant 0 : index
    %24 = vector.load %arg9[%c0_21, %c0_22] : memref<1x512xf32, #tpu.memory_space<vmem>>, vector<1x512xf32>
    %25 = vector.broadcast %24 : vector<1x512xf32> to vector<8x512xf32>
    %26 = arith.addf %23, %25 : vector<8x512xf32>
    %cst_23 = arith.constant 0.000000e+00 : f32
    %27 = vector.broadcast %cst_23 : f32 to vector<8x512xf32>
    %28 = arith.maximumf %26, %27 : vector<8x512xf32>
    %c0_24 = arith.constant 0 : index
    %c0_25 = arith.constant 0 : index
    %29 = vector.load %arg10[%c0_24, %c0_25] : memref<512x1024xf32, #tpu.memory_space<vmem>>, vector<512x1024xf32>
    %cst_26 = arith.constant dense<0.000000e+00> : vector<8x1024xf32>
    %30 = tpu.matmul %28, %29, %cst_26 {dimension_numbers = #tpu.dot_dimension_numbers<[1], [0], [0], [1], [0, 0, 1, 1], [], []>} : vector<8x512xf32>, vector<512x1024xf32>, vector<8x1024xf32> -> vector<8x1024xf32>
    %c0_27 = arith.constant 0 : index
    %c0_28 = arith.constant 0 : index
    %31 = vector.load %arg11[%c0_27, %c0_28] : memref<1x1024xf32, #tpu.memory_space<vmem>>, vector<1x1024xf32>
    %32 = vector.broadcast %31 : vector<1x1024xf32> to vector<8x1024xf32>
    %33 = arith.addf %30, %32 : vector<8x1024xf32>
    %c0_29 = arith.constant 0 : index
    %c0_30 = arith.constant 0 : index
    %34 = vector.load %arg12[%c0_29, %c0_30] : memref<1024x128xf32, #tpu.memory_space<vmem>>, vector<1024x128xf32>
    %cst_31 = arith.constant dense<0.000000e+00> : vector<8x128xf32>
    %35 = tpu.matmul %33, %34, %cst_31 {dimension_numbers = #tpu.dot_dimension_numbers<[1], [0], [0], [1], [0, 0, 1, 1], [], []>} : vector<8x1024xf32>, vector<1024x128xf32>, vector<8x128xf32> -> vector<8x128xf32>
    %c0_32 = arith.constant 0 : index
    %c0_33 = arith.constant 0 : index
    %36 = vector.load %arg13[%c0_32, %c0_33] : memref<1x128xf32, #tpu.memory_space<vmem>>, vector<1x128xf32>
    %37 = vector.broadcast %36 : vector<1x128xf32> to vector<8x128xf32>
    %38 = arith.addf %35, %37 : vector<8x128xf32>
    %c0_34 = arith.constant 0 : index
    %c0_35 = arith.constant 0 : index
    %39 = vector.load %arg14[%c0_34, %c0_35] : memref<8x128xf32, #tpu.memory_space<vmem>>, vector<8x128xf32>
    tpu.vector_store %arg14[%c0_34, %c0_35], %38 {strides = array<i32>} : memref<8x128xf32, #tpu.memory_space<vmem>>, vector<8x128xf32>,
    return
  }
  func.func @transform_0(%arg0: i32) -> (i32, i32) {
    %c0_i32 = arith.constant 0 : i32
    %c0_i32_0 = arith.constant 0 : i32
    return %arg0, %c0_i32 : i32, i32
  }
  func.func @transform_1(%arg0: i32) -> (i32, i32) {
    %c0_i32 = arith.constant 0 : i32
    %c0_i32_0 = arith.constant 0 : i32
    %c0_i32_1 = arith.constant 0 : i32
    return %c0_i32, %c0_i32_0 : i32, i32
  }
  func.func @transform_2(%arg0: i32) -> (i32, i32) {
    %c0_i32 = arith.constant 0 : i32
    %c0_i32_0 = arith.constant 0 : i32
    %c0_i32_1 = arith.constant 0 : i32
    return %c0_i32, %c0_i32_0 : i32, i32
  }
  func.func @transform_3(%arg0: i32) -> (i32, i32) {
    %c0_i32 = arith.constant 0 : i32
    %c0_i32_0 = arith.constant 0 : i32
    %c0_i32_1 = arith.constant 0 : i32
    return %c0_i32, %c0_i32_0 : i32, i32
  }
  func.func @transform_4(%arg0: i32) -> (i32, i32) {
    %c0_i32 = arith.constant 0 : i32
    %c0_i32_0 = arith.constant 0 : i32
    %c0_i32_1 = arith.constant 0 : i32
    return %c0_i32, %c0_i32_0 : i32, i32
  }
  func.func @transform_5(%arg0: i32) -> (i32, i32) {
    %c0_i32 = arith.constant 0 : i32
    %c0_i32_0 = arith.constant 0 : i32
    %c0_i32_1 = arith.constant 0 : i32
    return %c0_i32, %c0_i32_0 : i32, i32
  }
  func.func @transform_6(%arg0: i32) -> (i32, i32) {
    %c0_i32 = arith.constant 0 : i32
    %c0_i32_0 = arith.constant 0 : i32
    %c0_i32_1 = arith.constant 0 : i32
    return %c0_i32, %c0_i32_0 : i32, i32
  }
  func.func @transform_7(%arg0: i32) -> (i32, i32) {
    %c0_i32 = arith.constant 0 : i32
    %c0_i32_0 = arith.constant 0 : i32
    %c0_i32_1 = arith.constant 0 : i32
    return %c0_i32, %c0_i32_0 : i32, i32
  }
  func.func @transform_8(%arg0: i32) -> (i32, i32) {
    %c0_i32 = arith.constant 0 : i32
    %c0_i32_0 = arith.constant 0 : i32
    %c0_i32_1 = arith.constant 0 : i32
    return %c0_i32, %c0_i32_0 : i32, i32
  }
  func.func @transform_9(%arg0: i32) -> (i32, i32) {
    %c0_i32 = arith.constant 0 : i32
    %c0_i32_0 = arith.constant 0 : i32
    %c0_i32_1 = arith.constant 0 : i32
    return %c0_i32, %c0_i32_0 : i32, i32
  }
  func.func @transform_10(%arg0: i32) -> (i32, i32) {
    %c0_i32 = arith.constant 0 : i32
    %c0_i32_0 = arith.constant 0 : i32
    %c0_i32_1 = arith.constant 0 : i32
    return %c0_i32, %c0_i32_0 : i32, i32
  }
  func.func @transform_11(%arg0: i32) -> (i32, i32) {
    %c0_i32 = arith.constant 0 : i32
    %c0_i32_0 = arith.constant 0 : i32
    %c0_i32_1 = arith.constant 0 : i32
    return %c0_i32, %c0_i32_0 : i32, i32
  }
  func.func @transform_12(%arg0: i32) -> (i32, i32) {
    %c0_i32 = arith.constant 0 : i32
    %c0_i32_0 = arith.constant 0 : i32
    %c0_i32_1 = arith.constant 0 : i32
    return %c0_i32, %c0_i32_0 : i32, i32
  }
  func.func @transform_13(%arg0: i32) -> (i32, i32) {
    %c0_i32 = arith.constant 0 : i32
    %c0_i32_0 = arith.constant 0 : i32
    return %arg0, %c0_i32 : i32, i32
  }
}

</mosaic_0001>

<llo_original>
// kernel: tpu_custom_call.1
$region0: #{tpu_custom_call.1}
  #allocation0 [shape = 'u32[]', space=smem, size = 0x4, offset = 0x4, fixed_abs, tag = 'smem constant byte address 0x4 - core index']
  #allocation1 [shape = 'u32[144,128]{1,0:T(1,128)}', space=vmem, size = 0x12000, scoped, tag = 'internal scratch']
  %s0 = inlined_call_operand.hbm [shape: f32[8,32], index: 0, kind: input, shape index: {}]
  %s1 = inlined_call_operand.hbm [shape: f32[32,512], index: 1, kind: input, shape index: {}]
  %s2 = inlined_call_operand.hbm [shape: f32[1,512], index: 2, kind: input, shape index: {}]
  %s3 = inlined_call_operand.hbm [shape: f32[512,512], index: 3, kind: input, shape index: {}]
  %s4 = inlined_call_operand.hbm [shape: f32[1,512], index: 4, kind: input, shape index: {}]
  %s5 = inlined_call_operand.hbm [shape: f32[512,512], index: 5, kind: input, shape index: {}]
  %s6 = inlined_call_operand.hbm [shape: f32[1,512], index: 6, kind: input, shape index: {}]
  %s7 = inlined_call_operand.hbm [shape: f32[512,512], index: 7, kind: input, shape index: {}]
  %s8 = inlined_call_operand.hbm [shape: f32[1,512], index: 8, kind: input, shape index: {}]
  %s9 = inlined_call_operand.hbm [shape: f32[512,1024], index: 9, kind: input, shape index: {}]
  %s10 = inlined_call_operand.hbm [shape: f32[1,1024], index: 10, kind: input, shape index: {}]
  %s11 = inlined_call_operand.hbm [shape: f32[1024,128], index: 11, kind: input, shape index: {}]
  %s12 = inlined_call_operand.hbm [shape: f32[1,128], index: 12, kind: input, shape index: {}]
  %s13 = inlined_call_operand.hbm [shape: f32[8,128], index: 13, kind: output, shape index: {}]
  %s14 = sld [smem:[#allocation0]]
  $region114: #{tpu_custom_call.1} parent=0
    _
  %s16 = ssub.s32 1, %s14
  %s17 = scalar_select 0, %s16, %s14
  $region1: #{tpu_custom_call.1} parent=0
    #allocation2 [shape = 'u8[4096]{0}', space=vmem, size = 0x1000, scoped, tag = 'input window, operand 0, single buffered']
    #allocation3 [shape = 's32[1]{0}', space=sflag, size = 0x4, scoped, tag = 'scoped memory for tpu_custom_call.1']
    #allocation4 [shape = 's32[1]{0}', space=sflag, size = 0x4, scoped, tag = 'scoped memory for tpu_custom_call.1']
    #allocation5 [shape = 'u8[65536]{0}', space=vmem, size = 0x10000, scoped, tag = 'input window, operand 1, single buffered']
    #allocation6 [shape = 's32[1]{0}', space=sflag, size = 0x4, scoped, tag = 'scoped memory for tpu_custom_call.1']
    #allocation7 [shape = 'u8[2048]{0}', space=vmem, size = 0x800, scoped, tag = 'input window, operand 2, single buffered']
    #allocation8 [shape = 'u8[1048576]{0}', space=vmem, size = 0x100000, scoped, tag = 'input window, operand 3, single buffered']
    #allocation9 [shape = 's32[1]{0}', space=sflag, size = 0x4, scoped, tag = 'scoped memory for tpu_custom_call.1']
    #allocation10 [shape = 'u8[2048]{0}', space=vmem, size = 0x800, scoped, tag = 'input window, operand 4, single buffered']
    #allocation11 [shape = 'u8[1048576]{0}', space=vmem, size = 0x100000, scoped, tag = 'input window, operand 5, single buffered']
    #allocation12 [shape = 's32[1]{0}', space=sflag, size = 0x4, scoped, tag = 'scoped memory for tpu_custom_call.1']
    #allocation13 [shape = 'u8[2048]{0}', space=vmem, size = 0x800, scoped, tag = 'input window, operand 6, single buffered']
    #allocation14 [shape = 'u8[1048576]{0}', space=vmem, size = 0x100000, scoped, tag = 'input window, operand 7, single buffered']
    #allocation15 [shape = 's32[1]{0}', space=sflag, size = 0x4, scoped, tag = 'scoped memory for tpu_custom_call.1']
    #allocation16 [shape = 'u8[2048]{0}', space=vmem, size = 0x800, scoped, tag = 'input window, operand 8, single buffered']
    #allocation17 [shape = 'u8[2097152]{0}', space=vmem, size = 0x200000, scoped, tag = 'input window, operand 9, single buffered']
    #allocation18 [shape = 's32[1]{0}', space=sflag, size = 0x4, scoped, tag = 'scoped memory for tpu_custom_call.1']
    #allocation19 [shape = 'u8[4096]{0}', space=vmem, size = 0x1000, scoped, tag = 'input window, operand 10, single buffered']
    #allocation20 [shape = 'u8[524288]{0}', space=vmem, size = 0x80000, scoped, tag = 'input window, operand 11, single buffered']
    #allocation21 [shape = 's32[1]{0}', space=sflag, size = 0x4, scoped, tag = 'scoped memory for tpu_custom_call.1']
    #allocation22 [shape = 'u8[512]{0}', space=vmem, size = 0x400, scoped, tag = 'input window, operand 12, single buffered']
    #allocation23 [shape = 'u8[4096]{0}', space=vmem, size = 0x1000, scoped, tag = 'output window, operand 0, single buffered']
    %18 = vsyncpa [#allocation3], 0
    %19 = vsyncpa [#allocation6], 0
    %20 = vsyncpa [#allocation9], 0
    %21 = vsyncpa [#allocation12], 0
    %22 = vsyncpa [#allocation15], 0
    %23 = vsyncpa [#allocation18], 0
    %24 = vsyncpa [#allocation21], 0
    %25 = vsyncpa [#allocation4], 0
    // Predicated region
    $region2: #{tpu_custom_call.1} parent=1 // pred_check
      _
    $region3: #{tpu_custom_call.1} parent=1 // pred_check_branch
      %27 = sbr.rel (0) target = $region5
    $region4: #{tpu_custom_call.1} parent=1 // pred_region
      %s29 = ssub.s32 128, 128
      %30 = vsyncadd [#allocation3], %s29
      %s32 = sshll.u32 [#allocation2], 4
      %s33 = int_to_ptr.vmem [resolvable:$true] %s32
      %35 = dma.hbm_to_vmem [thread:$0]  %s0, 128, %s33, [#allocation3]
    $region5: #{tpu_custom_call.1} parent=1 // pred_fallthru
      _
    // Predicated region
    $region6: #{tpu_custom_call.1} parent=1 // pred_check
      _
    $region7: #{tpu_custom_call.1} parent=1 // pred_check_branch
      %37 = sbr.rel (0) target = $region9
    $region8: #{tpu_custom_call.1} parent=1 // pred_region
      %s39 = ssub.s32 2048, 2048
      %40 = vsyncadd [#allocation6], %s39
      %s41 = sshll.u32 [#allocation5], 4
      %s42 = int_to_ptr.vmem [resolvable:$true] %s41
      %47 = dma.hbm_to_vmem [thread:$0]  %s1, 2048, %s42, [#allocation6], 512, 512, 32
    $region9: #{tpu_custom_call.1} parent=1 // pred_fallthru
      _
    // Predicated region
    $region10: #{tpu_custom_call.1} parent=1 // pred_check
      _
    $region11: #{tpu_custom_call.1} parent=1 // pred_check_branch
      %49 = sbr.rel (0) target = $region13
    $region12: #{tpu_custom_call.1} parent=1 // pred_region
      %s51 = ssub.s32 64, 64
      %52 = vsyncadd [#allocation6], %s51
      %s54 = sshll.u32 [#allocation7], 4
      %s55 = int_to_ptr.vmem [resolvable:$true] %s54
      %57 = dma.hbm_to_vmem [thread:$0]  %s2, 64, %s55, [#allocation6]
    $region13: #{tpu_custom_call.1} parent=1 // pred_fallthru
      _
    // Predicated region
    $region14: #{tpu_custom_call.1} parent=1 // pred_check
      _
    $region15: #{tpu_custom_call.1} parent=1 // pred_check_branch
      %59 = sbr.rel (0) target = $region17
    $region16: #{tpu_custom_call.1} parent=1 // pred_region
      %s61 = ssub.s32 32768, 32768
      %62 = vsyncadd [#allocation9], %s61
      %s63 = sshll.u32 [#allocation8], 4
      %s64 = int_to_ptr.vmem [resolvable:$true] %s63
      %69 = dma.hbm_to_vmem [thread:$0]  %s3, 32768, %s64, [#allocation9], 512, 512, 32
    $region17: #{tpu_custom_call.1} parent=1 // pred_fallthru
      _
    // Predicated region
    $region18: #{tpu_custom_call.1} parent=1 // pred_check
      _
    $region19: #{tpu_custom_call.1} parent=1 // pred_check_branch
      %71 = sbr.rel (0) target = $region21
    $region20: #{tpu_custom_call.1} parent=1 // pred_region
      %s73 = ssub.s32 64, 64
      %74 = vsyncadd [#allocation9], %s73
      %s76 = sshll.u32 [#allocation10], 4
      %s77 = int_to_ptr.vmem [resolvable:$true] %s76
      %79 = dma.hbm_to_vmem [thread:$0]  %s4, 64, %s77, [#allocation9]
    $region21: #{tpu_custom_call.1} parent=1 // pred_fallthru
      _
    // Predicated region
    $region22: #{tpu_custom_call.1} parent=1 // pred_check
      _
    $region23: #{tpu_custom_call.1} parent=1 // pred_check_branch
      %81 = sbr.rel (0) target = $region25
    $region24: #{tpu_custom_call.1} parent=1 // pred_region
      %s83 = ssub.s32 32768, 32768
      %84 = vsyncadd [#allocation12], %s83
      %s85 = sshll.u32 [#allocation11], 4
      %s86 = int_to_ptr.vmem [resolvable:$true] %s85
      %91 = dma.hbm_to_vmem [thread:$0]  %s5, 32768, %s86, [#allocation12], 512, 512, 32
    $region25: #{tpu_custom_call.1} parent=1 // pred_fallthru
      _
    // Predicated region
    $region26: #{tpu_custom_call.1} parent=1 // pred_check
      _
    $region27: #{tpu_custom_call.1} parent=1 // pred_check_branch
      %93 = sbr.rel (0) target = $region29
    $region28: #{tpu_custom_call.1} parent=1 // pred_region
      %s95 = ssub.s32 64, 64
      %96 = vsyncadd [#allocation12], %s95
      %s98 = sshll.u32 [#allocation13], 4
      %s99 = int_to_ptr.vmem [resolvable:$true] %s98
      %101 = dma.hbm_to_vmem [thread:$0]  %s6, 64, %s99, [#allocation12]
    $region29: #{tpu_custom_call.1} parent=1 // pred_fallthru
      _
    // Predicated region
    $region30: #{tpu_custom_call.1} parent=1 // pred_check
      _
    $region31: #{tpu_custom_call.1} parent=1 // pred_check_branch
      %103 = sbr.rel (0) target = $region33
    $region32: #{tpu_custom_call.1} parent=1 // pred_region
      %s105 = ssub.s32 32768, 32768
      %106 = vsyncadd [#allocation15], %s105
      %s107 = sshll.u32 [#allocation14], 4
      %s108 = int_to_ptr.vmem [resolvable:$true] %s107
      %113 = dma.hbm_to_vmem [thread:$0]  %s7, 32768, %s108, [#allocation15], 512, 512, 32
    $region33: #{tpu_custom_call.1} parent=1 // pred_fallthru
      _
    // Predicated region
    $region34: #{tpu_custom_call.1} parent=1 // pred_check
      _
    $region35: #{tpu_custom_call.1} parent=1 // pred_check_branch
      %115 = sbr.rel (0) target = $region37
    $region36: #{tpu_custom_call.1} parent=1 // pred_region
      %s117 = ssub.s32 64, 64
      %118 = vsyncadd [#allocation15], %s117
      %s120 = sshll.u32 [#allocation16], 4
      %s121 = int_to_ptr.vmem [resolvable:$true] %s120
      %123 = dma.hbm_to_vmem [thread:$0]  %s8, 64, %s121, [#allocation15]
    $region37: #{tpu_custom_call.1} parent=1 // pred_fallthru
      _
    // Predicated region
    $region38: #{tpu_custom_call.1} parent=1 // pred_check
      _
    $region39: #{tpu_custom_call.1} parent=1 // pred_check_branch
      %125 = sbr.rel (0) target = $region41
    $region40: #{tpu_custom_call.1} parent=1 // pred_region
      %s127 = ssub.s32 65536, 65536
      %128 = vsyncadd [#allocation18], %s127
      %s129 = sshll.u32 [#allocation17], 4
      %s130 = int_to_ptr.vmem [resolvable:$true] %s129
      %135 = dma.hbm_to_vmem [thread:$0]  %s9, 65536, %s130, [#allocation18], 1024, 1024, 64
    $region41: #{tpu_custom_call.1} parent=1 // pred_fallthru
      _
    // Predicated region
    $region42: #{tpu_custom_call.1} parent=1 // pred_check
      _
    $region43: #{tpu_custom_call.1} parent=1 // pred_check_branch
      %137 = sbr.rel (0) target = $region45
    $region44: #{tpu_custom_call.1} parent=1 // pred_region
      %s139 = ssub.s32 128, 128
      %140 = vsyncadd [#allocation18], %s139
      %s142 = sshll.u32 [#allocation19], 4
      %s143 = int_to_ptr.vmem [resolvable:$true] %s142
      %145 = dma.hbm_to_vmem [thread:$0]  %s10, 128, %s143, [#allocation18]
    $region45: #{tpu_custom_call.1} parent=1 // pred_fallthru
      _
    // Predicated region
    $region46: #{tpu_custom_call.1} parent=1 // pred_check
      _
    $region47: #{tpu_custom_call.1} parent=1 // pred_check_branch
      %147 = sbr.rel (0) target = $region49
    $region48: #{tpu_custom_call.1} parent=1 // pred_region
      %s149 = ssub.s32 16384, 16384
      %150 = vsyncadd [#allocation21], %s149
      %s151 = sshll.u32 [#allocation20], 4
      %s152 = int_to_ptr.vmem [resolvable:$true] %s151
      %157 = dma.hbm_to_vmem [thread:$0]  %s11, 16384, %s152, [#allocation21], 128, 128, 8
    $region49: #{tpu_custom_call.1} parent=1 // pred_fallthru
      _
    // Predicated region
    $region50: #{tpu_custom_call.1} parent=1 // pred_check
      _
    $region51: #{tpu_custom_call.1} parent=1 // pred_check_branch
      %159 = sbr.rel (0) target = $region53
    $region52: #{tpu_custom_call.1} parent=1 // pred_region
      %s161 = ssub.s32 16, 16
      %162 = vsyncadd [#allocation21], %s161
      %s164 = sshll.u32 [#allocation22], 4
      %s165 = int_to_ptr.vmem [resolvable:$true] %s164
      %167 = dma.hbm_to_vmem [thread:$0]  %s12, 16, %s165, [#allocation21]
    $region53: #{tpu_custom_call.1} parent=1 // pred_fallthru
      _
    // Predicated region
    $region54: #{tpu_custom_call.1} parent=1 // pred_check
      _
    $region55: #{tpu_custom_call.1} parent=1 // pred_check_branch
      %169 = sbr.rel (0) target = $region57
    $region56: #{tpu_custom_call.1} parent=1 // pred_region
      %170 = dma.done [#allocation3], 128
    $region57: #{tpu_custom_call.1} parent=1 // pred_fallthru
      _
    // Predicated region
    $region58: #{tpu_custom_call.1} parent=1 // pred_check
      _
    $region59: #{tpu_custom_call.1} parent=1 // pred_check_branch
      %172 = sbr.rel (0) target = $region61
    $region60: #{tpu_custom_call.1} parent=1 // pred_region
      %173 = dma.done [#allocation6], 2048
    $region61: #{tpu_custom_call.1} parent=1 // pred_fallthru
      _
    // Predicated region
    $region62: #{tpu_custom_call.1} parent=1 // pred_check
      _
    $region63: #{tpu_custom_call.1} parent=1 // pred_check_branch
      %175 = sbr.rel (0) target = $region65
    $region64: #{tpu_custom_call.1} parent=1 // pred_region
      %176 = dma.done [#allocation6], 64
    $region65: #{tpu_custom_call.1} parent=1 // pred_fallthru
      _
    // Predicated region
    $region66: #{tpu_custom_call.1} parent=1 // pred_check
      _
    $region67: #{tpu_custom_call.1} parent=1 // pred_check_branch
      %178 = sbr.rel (0) target = $region69
    $region68: #{tpu_custom_call.1} parent=1 // pred_region
      %179 = dma.done [#allocation9], 32768
    $region69: #{tpu_custom_call.1} parent=1 // pred_fallthru
      _
    // Predicated region
    $region70: #{tpu_custom_call.1} parent=1 // pred_check
      _
    $region71: #{tpu_custom_call.1} parent=1 // pred_check_branch
      %181 = sbr.rel (0) target = $region73
    $region72: #{tpu_custom_call.1} parent=1 // pred_region
      %182 = dma.done [#allocation9], 64
    $region73: #{tpu_custom_call.1} parent=1 // pred_fallthru
      _
    // Predicated region
    $region74: #{tpu_custom_call.1} parent=1 // pred_check
      _
    $region75: #{tpu_custom_call.1} parent=1 // pred_check_branch
      %184 = sbr.rel (0) target = $region77
    $region76: #{tpu_custom_call.1} parent=1 // pred_region
      %185 = dma.done [#allocation12], 32768
    $region77: #{tpu_custom_call.1} parent=1 // pred_fallthru
      _
    // Predicated region
    $region78: #{tpu_custom_call.1} parent=1 // pred_check
      _
    $region79: #{tpu_custom_call.1} parent=1 // pred_check_branch
      %187 = sbr.rel (0) target = $region81
    $region80: #{tpu_custom_call.1} parent=1 // pred_region
      %188 = dma.done [#allocation12], 64
    $region81: #{tpu_custom_call.1} parent=1 // pred_fallthru
      _
    // Predicated region
    $region82: #{tpu_custom_call.1} parent=1 // pred_check
      _
    $region83: #{tpu_custom_call.1} parent=1 // pred_check_branch
      %190 = sbr.rel (0) target = $region85
    $region84: #{tpu_custom_call.1} parent=1 // pred_region
      %191 = dma.done [#allocation15], 32768
    $region85: #{tpu_custom_call.1} parent=1 // pred_fallthru
      _
    // Predicated region
    $region86: #{tpu_custom_call.1} parent=1 // pred_check
      _
    $region87: #{tpu_custom_call.1} parent=1 // pred_check_branch
      %193 = sbr.rel (0) target = $region89
    $region88: #{tpu_custom_call.1} parent=1 // pred_region
      %194 = dma.done [#allocation15], 64
    $region89: #{tpu_custom_call.1} parent=1 // pred_fallthru
      _
    // Predicated region
    $region90: #{tpu_custom_call.1} parent=1 // pred_check
      _
    $region91: #{tpu_custom_call.1} parent=1 // pred_check_branch
      %196 = sbr.rel (0) target = $region93
    $region92: #{tpu_custom_call.1} parent=1 // pred_region
      %197 = dma.done [#allocation18], 65536
    $region93: #{tpu_custom_call.1} parent=1 // pred_fallthru
      _
    // Predicated region
    $region94: #{tpu_custom_call.1} parent=1 // pred_check
      _
    $region95: #{tpu_custom_call.1} parent=1 // pred_check_branch
      %199 = sbr.rel (0) target = $region97
    $region96: #{tpu_custom_call.1} parent=1 // pred_region
      %200 = dma.done [#allocation18], 128
    $region97: #{tpu_custom_call.1} parent=1 // pred_fallthru
      _
    // Predicated region
    $region98: #{tpu_custom_call.1} parent=1 // pred_check
      _
    $region99: #{tpu_custom_call.1} parent=1 // pred_check_branch
      %202 = sbr.rel (0) target = $region101
    $region100: #{tpu_custom_call.1} parent=1 // pred_region
      %203 = dma.done [#allocation21], 16384
    $region101: #{tpu_custom_call.1} parent=1 // pred_fallthru
      _
    // Predicated region
    $region102: #{tpu_custom_call.1} parent=1 // pred_check
      _
    $region103: #{tpu_custom_call.1} parent=1 // pred_check_branch
      %205 = sbr.rel (0) target = $region105
    $region104: #{tpu_custom_call.1} parent=1 // pred_region
      %206 = dma.done [#allocation21], 16
    $region105: #{tpu_custom_call.1} parent=1 // pred_fallthru
      _
    %v207 = vld [vmem:[#allocation2] sm:$0xff]
    %v208 = vld [vmem:[#allocation5] sm:$0xff]
    %v209 = vld [vmem:[#allocation5 + $0x8] sm:$0xff]
    %v210 = vld [vmem:[#allocation5 + $0x10] sm:$0xff]
    %v211 = vld [vmem:[#allocation5 + $0x18] sm:$0xff]
    %v212 = vld [vmem:[#allocation5 + $0x20] sm:$0xff]
    %v213 = vld [vmem:[#allocation5 + $0x28] sm:$0xff]
    %v214 = vld [vmem:[#allocation5 + $0x30] sm:$0xff]
    %v215 = vld [vmem:[#allocation5 + $0x38] sm:$0xff]
    %v216 = vld [vmem:[#allocation5 + $0x40] sm:$0xff]
    %v217 = vld [vmem:[#allocation5 + $0x48] sm:$0xff]
    %v218 = vld [vmem:[#allocation5 + $0x50] sm:$0xff]
    %v219 = vld [vmem:[#allocation5 + $0x58] sm:$0xff]
    %v220 = vld [vmem:[#allocation5 + $0x60] sm:$0xff]
    %v221 = vld [vmem:[#allocation5 + $0x68] sm:$0xff]
    %v222 = vld [vmem:[#allocation5 + $0x70] sm:$0xff]
    %v223 = vld [vmem:[#allocation5 + $0x78] sm:$0xff]
    %v224 = vld [vmem:[#allocation7] sm:$0xf]
    %v226 = vlaneseq
    %v227 = vshrl.u32 %v226, 7
    %v228 = vsub.s32 0, %v227
    %v229 = vrot.slane %v224, %v228
    %v230 = vlaneseq
    %v231 = vshrl.u32 %v230, 7
    %v232 = vsub.s32 1, %v231
    %v233 = vrot.slane %v224, %v232
    %v234 = vlaneseq
    %v235 = vshrl.u32 %v234, 7
    %v236 = vsub.s32 2, %v235
    %v237 = vrot.slane %v224, %v236
    %v238 = vlaneseq
    %v239 = vshrl.u32 %v238, 7
    %v240 = vsub.s32 3, %v239
    %v241 = vrot.slane %v224, %v240
    %vm246 = vcmask 261120
    %v248 = vsel %vm246, %v207, 0
    %250 = vmatprep.subr.mxu0 %v209
    %251 = vmatpush1.msra.mxu0 %v208
    %252 = vmatprep.subr.mxu0 %v213
    %253 = vmatpush1.msra.mxu0 %v212
    %254 = vmatprep.subr.mxu0 %v217
    %255 = vmatpush1.msra.mxu0 %v216
    %256 = vmatprep.subr.mxu0 %v221
    %257 = vmatpush1.msra.mxu0 %v220
    %258 = vmatprep.subr.mxu0 0.0
    %259 = vmatpush1.msra.mxu0 0.0
    %260 = vmatprep.subr.mxu0 0.0
    %261 = vmatpush1.msra.mxu0 0.0
    %262 = vmatprep.subr.mxu0 0.0
    %263 = vmatpush1.msra.mxu0 0.0
    %264 = vmatprep.subr.mxu0 0.0
    %265 = vmatpush1.msra.mxu0 0.0
    %266 = vmatprep.subr.mxu0 0.0
    %267 = vmatpush1.msra.mxu0 0.0
    %268 = vmatprep.subr.mxu0 0.0
    %269 = vmatpush1.msra.mxu0 0.0
    %270 = vmatprep.subr.mxu0 0.0
    %271 = vmatpush1.msra.mxu0 0.0
    %272 = vmatprep.subr.mxu0 0.0
    %273 = vmatpush1.msra.mxu0 0.0
    %274 = vmatprep.subr.mxu0 0.0
    %275 = vmatpush1.msra.mxu0 0.0
    %276 = vmatprep.subr.mxu0 0.0
    %277 = vmatpush1.msra.mxu0 0.0
    %278 = vmatprep.subr.mxu0 0.0
    %279 = vmatpush1.msra.mxu0 0.0
    %280 = vmatprep.subr.mxu0 0.0
    %281 = vmatpush1.msra.mxu0 0.0
    %282 = vmatprep.subr.mxu0 0.0
    %283 = vmatpush1.msra.mxu0 0.0
    %284 = vmatprep.subr.mxu0 0.0
    %285 = vmatpush1.msra.mxu0 0.0
    %286 = vmatprep.subr.mxu0 0.0
    %287 = vmatpush1.msra.mxu0 0.0
    %288 = vmatprep.subr.mxu0 0.0
    %289 = vmatpush1.msra.mxu0 0.0
    %290 = vmatprep.subr.mxu0 0.0
    %291 = vmatpush1.msra.mxu0 0.0
    %292 = vmatprep.subr.mxu0 0.0
    %293 = vmatpush1.msra.mxu0 0.0
    %294 = vmatprep.subr.mxu0 0.0
    %295 = vmatpush1.msra.mxu0 0.0
    %296 = vmatprep.subr.mxu0 0.0
    %297 = vmatpush1.msra.mxu0 0.0
    %298 = vmatprep.subr.mxu0 0.0
    %299 = vmatpush1.msra.mxu0 0.0
    %300 = vmatprep.subr.mxu0 0.0
    %301 = vmatpush1.msra.mxu0 0.0
    %302 = vmatprep.subr.mxu0 0.0
    %303 = vmatpush1.msra.mxu0 0.0
    %304 = vmatprep.subr.mxu0 0.0
    %305 = vmatpush1.msra.mxu0 0.0
    %306 = vmatprep.subr.mxu0 0.0
    %307 = vmatpush1.msra.mxu0 0.0
    %308 = vmatprep.subr.mxu0 0.0
    %309 = vmatpush1.msra.mxu0 0.0
    %310 = vmatprep.subr.mxu0 0.0
    %311 = vmatpush1.msra.mxu0 0.0
    %312 = vmatprep.subr.mxu0 0.0
    %313 = vmatpush1.msra.mxu0 0.0
    %314 = vmatprep.mubr.f32.mxu0 0.0
    %315 = vmatmul.mubr.f32.gmra.mrb[0].mxu0 %v248
    %v316 = vpop.f32.mrb[0].mxu0
    %v317 = vadd.f32 %v229, %v316
    %v318 = vpop.f32.mrb[0].mxu0
    %v319 = vadd.f32 %v233, %v318
    %320 = vdwg.mxu0
    %321 = vmatprep.subr.mxu0 %v211
    %322 = vmatpush1.msra.mxu0 %v210
    %323 = vmatprep.subr.mxu0 %v215
    %324 = vmatpush1.msra.mxu0 %v214
    %325 = vmatprep.subr.mxu0 %v219
    %326 = vmatpush1.msra.mxu0 %v218
    %327 = vmatprep.subr.mxu0 %v223
    %328 = vmatpush1.msra.mxu0 %v222
    %329 = vmatprep.subr.mxu0 0.0
    %330 = vmatpush1.msra.mxu0 0.0
    %331 = vmatprep.subr.mxu0 0.0
    %332 = vmatpush1.msra.mxu0 0.0
    %333 = vmatprep.subr.mxu0 0.0
    %334 = vmatpush1.msra.mxu0 0.0
    %335 = vmatprep.subr.mxu0 0.0
    %336 = vmatpush1.msra.mxu0 0.0
    %337 = vmatprep.subr.mxu0 0.0
    %338 = vmatpush1.msra.mxu0 0.0
    %339 = vmatprep.subr.mxu0 0.0
    %340 = vmatpush1.msra.mxu0 0.0
    %341 = vmatprep.subr.mxu0 0.0
    %342 = vmatpush1.msra.mxu0 0.0
    %343 = vmatprep.subr.mxu0 0.0
    %344 = vmatpush1.msra.mxu0 0.0
    %345 = vmatprep.subr.mxu0 0.0
    %346 = vmatpush1.msra.mxu0 0.0
    %347 = vmatprep.subr.mxu0 0.0
    %348 = vmatpush1.msra.mxu0 0.0
    %349 = vmatprep.subr.mxu0 0.0
    %350 = vmatpush1.msra.mxu0 0.0
    %351 = vmatprep.subr.mxu0 0.0
    %352 = vmatpush1.msra.mxu0 0.0
    %353 = vmatprep.subr.mxu0 0.0
    %354 = vmatpush1.msra.mxu0 0.0
    %355 = vmatprep.subr.mxu0 0.0
    %356 = vmatpush1.msra.mxu0 0.0
    %357 = vmatprep.subr.mxu0 0.0
    %358 = vmatpush1.msra.mxu0 0.0
    %359 = vmatprep.subr.mxu0 0.0
    %360 = vmatpush1.msra.mxu0 0.0
    %361 = vmatprep.subr.mxu0 0.0
    %362 = vmatpush1.msra.mxu0 0.0
    %363 = vmatprep.subr.mxu0 0.0
    %364 = vmatpush1.msra.mxu0 0.0
    %365 = vmatprep.subr.mxu0 0.0
    %366 = vmatpush1.msra.mxu0 0.0
    %367 = vmatprep.subr.mxu0 0.0
    %368 = vmatpush1.msra.mxu0 0.0
    %369 = vmatprep.subr.mxu0 0.0
    %370 = vmatpush1.msra.mxu0 0.0
    %371 = vmatprep.subr.mxu0 0.0
    %372 = vmatpush1.msra.mxu0 0.0
    %373 = vmatprep.subr.mxu0 0.0
    %374 = vmatpush1.msra.mxu0 0.0
    %375 = vmatprep.subr.mxu0 0.0
    %376 = vmatpush1.msra.mxu0 0.0
    %377 = vmatprep.subr.mxu0 0.0
    %378 = vmatpush1.msra.mxu0 0.0
    %379 = vmatprep.subr.mxu0 0.0
    %380 = vmatpush1.msra.mxu0 0.0
    %381 = vmatprep.subr.mxu0 0.0
    %382 = vmatpush1.msra.mxu0 0.0
    %383 = vmatprep.subr.mxu0 0.0
    %384 = vmatpush1.msra.mxu0 0.0
    %385 = vmatprep.mubr.f32.mxu0 0.0
    %386 = vmatmul.mubr.f32.gmra.mrb[0].mxu0 %v248
    %v387 = vpop.f32.mrb[0].mxu0
    %v388 = vadd.f32 %v237, %v387
    %v389 = vpop.f32.mrb[0].mxu0
    %v390 = vadd.f32 %v241, %v389
    %391 = vdwg.mxu0
    %v392 = vmax.f32 %v317, 0.0
    %v393 = vmax.f32 %v319, 0.0
    %v394 = vmax.f32 %v388, 0.0
    %v395 = vmax.f32 %v390, 0.0
    %v396 = vld [vmem:[#allocation8] sm:$0xff]
    %v397 = vld [vmem:[#allocation8 + $0x8] sm:$0xff]
    %v398 = vld [vmem:[#allocation8 + $0x10] sm:$0xff]
    %v399 = vld [vmem:[#allocation8 + $0x18] sm:$0xff]
    %v400 = vld [vmem:[#allocation8 + $0x20] sm:$0xff]
    %v401 = vld [vmem:[#allocation8 + $0x28] sm:$0xff]
    %v402 = vld [vmem:[#allocation8 + $0x30] sm:$0xff]
    %v403 = vld [vmem:[#allocation8 + $0x38] sm:$0xff]
    %v404 = vld [vmem:[#allocation8 + $0x40] sm:$0xff]
    %v405 = vld [vmem:[#allocation8 + $0x48] sm:$0xff]
    %v406 = vld [vmem:[#allocation8 + $0x50] sm:$0xff]
    %v407 = vld [vmem:[#allocation8 + $0x58] sm:$0xff]
    %v408 = vld [vmem:[#allocation8 + $0x60] sm:$0xff]
    %v409 = vld [vmem:[#allocation8 + $0x68] sm:$0xff]
    %v410 = vld [vmem:[#allocation8 + $0x70] sm:$0xff]
    %v411 = vld [vmem:[#allocation8 + $0x78] sm:$0xff]
    %v412 = vld [vmem:[#allocation8 + $0x80] sm:$0xff]
    %v413 = vld [vmem:[#allocation8 + $0x88] sm:$0xff]
    %v414 = vld [vmem:[#allocation8 + $0x90] sm:$0xff]
    %v415 = vld [vmem:[#allocation8 + $0x98] sm:$0xff]
    %v416 = vld [vmem:[#allocation8 + $0xa0] sm:$0xff]
    %v417 = vld [vmem:[#allocation8 + $0xa8] sm:$0xff]
    %v418 = vld [vmem:[#allocation8 + $0xb0] sm:$0xff]
    %v419 = vld [vmem:[#allocation8 + $0xb8] sm:$0xff]
    %v420 = vld [vmem:[#allocation8 + $0xc0] sm:$0xff]
    %v421 = vld [vmem:[#allocation8 + $0xc8] sm:$0xff]
    %v422 = vld [vmem:[#allocation8 + $0xd0] sm:$0xff]
    %v423 = vld [vmem:[#allocation8 + $0xd8] sm:$0xff]
    %v424 = vld [vmem:[#allocation8 + $0xe0] sm:$0xff]
    %v425 = vld [vmem:[#allocation8 + $0xe8] sm:$0xff]
    %v426 = vld [vmem:[#allocation8 + $0xf0] sm:$0xff]
    %v427 = vld [vmem:[#allocation8 + $0xf8] sm:$0xff]
    %v428 = vld [vmem:[#allocation8 + $0x100] sm:$0xff]
    %v429 = vld [vmem:[#allocation8 + $0x108] sm:$0xff]
    %v430 = vld [vmem:[#allocation8 + $0x110] sm:$0xff]
    %v431 = vld [vmem:[#allocation8 + $0x118] sm:$0xff]
    %v432 = vld [vmem:[#allocation8 + $0x120] sm:$0xff]
    %v433 = vld [vmem:[#allocation8 + $0x128] sm:$0xff]
    %v434 = vld [vmem:[#allocation8 + $0x130] sm:$0xff]
    %v435 = vld [vmem:[#allocation8 + $0x138] sm:$0xff]
    %v436 = vld [vmem:[#allocation8 + $0x140] sm:$0xff]
    %v437 = vld [vmem:[#allocation8 + $0x148] sm:$0xff]
    %v438 = vld [vmem:[#allocation8 + $0x150] sm:$0xff]
    %v439 = vld [vmem:[#allocation8 + $0x158] sm:$0xff]
    %v440 = vld [vmem:[#allocation8 + $0x160] sm:$0xff]
    %v441 = vld [vmem:[#allocation8 + $0x168] sm:$0xff]
    %v442 = vld [vmem:[#allocation8 + $0x170] sm:$0xff]
    %v443 = vld [vmem:[#allocation8 + $0x178] sm:$0xff]
    %v444 = vld [vmem:[#allocation8 + $0x180] sm:$0xff]
    %v445 = vld [vmem:[#allocation8 + $0x188] sm:$0xff]
    %v446 = vld [vmem:[#allocation8 + $0x190] sm:$0xff]
    %v447 = vld [vmem:[#allocation8 + $0x198] sm:$0xff]
    %v448 = vld [vmem:[#allocation8 + $0x1a0] sm:$0xff]
    %v449 = vld [vmem:[#allocation8 + $0x1a8] sm:$0xff]
    %v450 = vld [vmem:[#allocation8 + $0x1b0] sm:$0xff]
    %v451 = vld [vmem:[#allocation8 + $0x1b8] sm:$0xff]
    %v452 = vld [vmem:[#allocation8 + $0x1c0] sm:$0xff]
    %v453 = vld [vmem:[#allocation8 + $0x1c8] sm:$0xff]
    %v454 = vld [vmem:[#allocation8 + $0x1d0] sm:$0xff]
    %v455 = vld [vmem:[#allocation8 + $0x1d8] sm:$0xff]
    %v456 = vld [vmem:[#allocation8 + $0x1e0] sm:$0xff]
    %v457 = vld [vmem:[#allocation8 + $0x1e8] sm:$0xff]
    %v458 = vld [vmem:[#allocation8 + $0x1f0] sm:$0xff]
    %v459 = vld [vmem:[#allocation8 + $0x1f8] sm:$0xff]
    %v460 = vld [vmem:[#allocation8 + $0x200] sm:$0xff]
    %v461 = vld [vmem:[#allocation8 + $0x208] sm:$0xff]
    %v462 = vld [vmem:[#allocation8 + $0x210] sm:$0xff]
    %v463 = vld [vmem:[#allocation8 + $0x218] sm:$0xff]
    %v464 = vld [vmem:[#allocation8 + $0x220] sm:$0xff]
    %v465 = vld [vmem:[#allocation8 + $0x228] sm:$0xff]
    %v466 = vld [vmem:[#allocation8 + $0x230] sm:$0xff]
    %v467 = vld [vmem:[#allocation8 + $0x238] sm:$0xff]
    %v468 = vld [vmem:[#allocation8 + $0x240] sm:$0xff]
    %v469 = vld [vmem:[#allocation8 + $0x248] sm:$0xff]
    %v470 = vld [vmem:[#allocation8 + $0x250] sm:$0xff]
    %v471 = vld [vmem:[#allocation8 + $0x258] sm:$0xff]
    %v472 = vld [vmem:[#allocation8 + $0x260] sm:$0xff]
    %v473 = vld [vmem:[#allocation8 + $0x268] sm:$0xff]
    %v474 = vld [vmem:[#allocation8 + $0x270] sm:$0xff]
    %v475 = vld [vmem:[#allocation8 + $0x278] sm:$0xff]
    %v476 = vld [vmem:[#allocation8 + $0x280] sm:$0xff]
    %v477 = vld [vmem:[#allocation8 + $0x288] sm:$0xff]
    %v478 = vld [vmem:[#allocation8 + $0x290] sm:$0xff]
    %v479 = vld [vmem:[#allocation8 + $0x298] sm:$0xff]
    %v480 = vld [vmem:[#allocation8 + $0x2a0] sm:$0xff]
    %v481 = vld [vmem:[#allocation8 + $0x2a8] sm:$0xff]
    %v482 = vld [vmem:[#allocation8 + $0x2b0] sm:$0xff]
    %v483 = vld [vmem:[#allocation8 + $0x2b8] sm:$0xff]
    %v484 = vld [vmem:[#allocation8 + $0x2c0] sm:$0xff]
    %v485 = vld [vmem:[#allocation8 + $0x2c8] sm:$0xff]
    %v486 = vld [vmem:[#allocation8 + $0x2d0] sm:$0xff]
    %v487 = vld [vmem:[#allocation8 + $0x2d8] sm:$0xff]
    %v488 = vld [vmem:[#allocation8 + $0x2e0] sm:$0xff]
    %v489 = vld [vmem:[#allocation8 + $0x2e8] sm:$0xff]
    %v490 = vld [vmem:[#allocation8 + $0x2f0] sm:$0xff]
    %v491 = vld [vmem:[#allocation8 + $0x2f8] sm:$0xff]
    %v492 = vld [vmem:[#allocation8 + $0x300] sm:$0xff]
    %v493 = vld [vmem:[#allocation8 + $0x308] sm:$0xff]
    %v494 = vld [vmem:[#allocation8 + $0x310] sm:$0xff]
    %v495 = vld [vmem:[#allocation8 + $0x318] sm:$0xff]
    %v496 = vld [vmem:[#allocation8 + $0x320] sm:$0xff]
    %v497 = vld [vmem:[#allocation8 + $0x328] sm:$0xff]
    %v498 = vld [vmem:[#allocation8 + $0x330] sm:$0xff]
    %v499 = vld [vmem:[#allocation8 + $0x338] sm:$0xff]
    %v500 = vld [vmem:[#allocation8 + $0x340] sm:$0xff]
    %v501 = vld [vmem:[#allocation8 + $0x348] sm:$0xff]
    %v502 = vld [vmem:[#allocation8 + $0x350] sm:$0xff]
    %v503 = vld [vmem:[#allocation8 + $0x358] sm:$0xff]
    %v504 = vld [vmem:[#allocation8 + $0x360] sm:$0xff]
    %v505 = vld [vmem:[#allocation8 + $0x368] sm:$0xff]
    %v506 = vld [vmem:[#allocation8 + $0x370] sm:$0xff]
    %v507 = vld [vmem:[#allocation8 + $0x378] sm:$0xff]
    %v508 = vld [vmem:[#allocation8 + $0x380] sm:$0xff]
    %v509 = vld [vmem:[#allocation8 + $0x388] sm:$0xff]
    %v510 = vld [vmem:[#allocation8 + $0x390] sm:$0xff]
    %v511 = vld [vmem:[#allocation8 + $0x398] sm:$0xff]
    %v512 = vld [vmem:[#allocation8 + $0x3a0] sm:$0xff]
    %v513 = vld [vmem:[#allocation8 + $0x3a8] sm:$0xff]
    %v514 = vld [vmem:[#allocation8 + $0x3b0] sm:$0xff]
    %v515 = vld [vmem:[#allocation8 + $0x3b8] sm:$0xff]
    %v516 = vld [vmem:[#allocation8 + $0x3c0] sm:$0xff]
    %v517 = vld [vmem:[#allocation8 + $0x3c8] sm:$0xff]
    %v518 = vld [vmem:[#allocation8 + $0x3d0] sm:$0xff]
    %v519 = vld [vmem:[#allocation8 + $0x3d8] sm:$0xff]
    %v520 = vld [vmem:[#allocation8 + $0x3e0] sm:$0xff]
    %v521 = vld [vmem:[#allocation8 + $0x3e8] sm:$0xff]
    %v522 = vld [vmem:[#allocation8 + $0x3f0] sm:$0xff]
    %v523 = vld [vmem:[#allocation8 + $0x3f8] sm:$0xff]
    %v524 = vld [vmem:[#allocation8 + $0x400] sm:$0xff]
    %v525 = vld [vmem:[#allocation8 + $0x408] sm:$0xff]
    %v526 = vld [vmem:[#allocation8 + $0x410] sm:$0xff]
    %v527 = vld [vmem:[#allocation8 + $0x418] sm:$0xff]
    %v528 = vld [vmem:[#allocation8 + $0x420] sm:$0xff]
    %v529 = vld [vmem:[#allocation8 + $0x428] sm:$0xff]
    %v530 = vld [vmem:[#allocation8 + $0x430] sm:$0xff]
    %v531 = vld [vmem:[#allocation8 + $0x438] sm:$0xff]
    %v532 = vld [vmem:[#allocation8 + $0x440] sm:$0xff]
    %v533 = vld [vmem:[#allocation8 + $0x448] sm:$0xff]
    %v534 = vld [vmem:[#allocation8 + $0x450] sm:$0xff]
    %v535 = vld [vmem:[#allocation8 + $0x458] sm:$0xff]
    %v536 = vld [vmem:[#allocation8 + $0x460] sm:$0xff]
    %v537 = vld [vmem:[#allocation8 + $0x468] sm:$0xff]
    %v538 = vld [vmem:[#allocation8 + $0x470] sm:$0xff]
    %v539 = vld [vmem:[#allocation8 + $0x478] sm:$0xff]
    %v540 = vld [vmem:[#allocation8 + $0x480] sm:$0xff]
    %v541 = vld [vmem:[#allocation8 + $0x488] sm:$0xff]
    %v542 = vld [vmem:[#allocation8 + $0x490] sm:$0xff]
    %v543 = vld [vmem:[#allocation8 + $0x498] sm:$0xff]
    %v544 = vld [vmem:[#allocation8 + $0x4a0] sm:$0xff]
    %v545 = vld [vmem:[#allocation8 + $0x4a8] sm:$0xff]
    %v546 = vld [vmem:[#allocation8 + $0x4b0] sm:$0xff]
    %v547 = vld [vmem:[#allocation8 + $0x4b8] sm:$0xff]
    %v548 = vld [vmem:[#allocation8 + $0x4c0] sm:$0xff]
    %v549 = vld [vmem:[#allocation8 + $0x4c8] sm:$0xff]
    %v550 = vld [vmem:[#allocation8 + $0x4d0] sm:$0xff]
    %v551 = vld [vmem:[#allocation8 + $0x4d8] sm:$0xff]
    %v552 = vld [vmem:[#allocation8 + $0x4e0] sm:$0xff]
    %v553 = vld [vmem:[#allocation8 + $0x4e8] sm:$0xff]
    %v554 = vld [vmem:[#allocation8 + $0x4f0] sm:$0xff]
    %v555 = vld [vmem:[#allocation8 + $0x4f8] sm:$0xff]
    %v556 = vld [vmem:[#allocation8 + $0x500] sm:$0xff]
    %v557 = vld [vmem:[#allocation8 + $0x508] sm:$0xff]
    %v558 = vld [vmem:[#allocation8 + $0x510] sm:$0xff]
    %v559 = vld [vmem:[#allocation8 + $0x518] sm:$0xff]
    %v560 = vld [vmem:[#allocation8 + $0x520] sm:$0xff]
    %v561 = vld [vmem:[#allocation8 + $0x528] sm:$0xff]
    %v562 = vld [vmem:[#allocation8 + $0x530] sm:$0xff]
    %v563 = vld [vmem:[#allocation8 + $0x538] sm:$0xff]
    %v564 = vld [vmem:[#allocation8 + $0x540] sm:$0xff]
    %v565 = vld [vmem:[#allocation8 + $0x548] sm:$0xff]
    %v566 = vld [vmem:[#allocation8 + $0x550] sm:$0xff]
    %v567 = vld [vmem:[#allocation8 + $0x558] sm:$0xff]
    %v568 = vld [vmem:[#allocation8 + $0x560] sm:$0xff]
    %v569 = vld [vmem:[#allocation8 + $0x568] sm:$0xff]
    %v570 = vld [vmem:[#allocation8 + $0x570] sm:$0xff]
    %v571 = vld [vmem:[#allocation8 + $0x578] sm:$0xff]
    %v572 = vld [vmem:[#allocation8 + $0x580] sm:$0xff]
    %v573 = vld [vmem:[#allocation8 + $0x588] sm:$0xff]
    %v574 = vld [vmem:[#allocation8 + $0x590] sm:$0xff]
    %v575 = vld [vmem:[#allocation8 + $0x598] sm:$0xff]
    %v576 = vld [vmem:[#allocation8 + $0x5a0] sm:$0xff]
    %v577 = vld [vmem:[#allocation8 + $0x5a8] sm:$0xff]
    %v578 = vld [vmem:[#allocation8 + $0x5b0] sm:$0xff]
    %v579 = vld [vmem:[#allocation8 + $0x5b8] sm:$0xff]
    %v580 = vld [vmem:[#allocation8 + $0x5c0] sm:$0xff]
    %v581 = vld [vmem:[#allocation8 + $0x5c8] sm:$0xff]
    %v582 = vld [vmem:[#allocation8 + $0x5d0] sm:$0xff]
    %v583 = vld [vmem:[#allocation8 + $0x5d8] sm:$0xff]
    %v584 = vld [vmem:[#allocation8 + $0x5e0] sm:$0xff]
    %v585 = vld [vmem:[#allocation8 + $0x5e8] sm:$0xff]
    %v586 = vld [vmem:[#allocation8 + $0x5f0] sm:$0xff]
    %v587 = vld [vmem:[#allocation8 + $0x5f8] sm:$0xff]
    %v588 = vld [vmem:[#allocation8 + $0x600] sm:$0xff]
    %v589 = vld [vmem:[#allocation8 + $0x608] sm:$0xff]
    %v590 = vld [vmem:[#allocation8 + $0x610] sm:$0xff]
    %v591 = vld [vmem:[#allocation8 + $0x618] sm:$0xff]
    %v592 = vld [vmem:[#allocation8 + $0x620] sm:$0xff]
    %v593 = vld [vmem:[#allocation8 + $0x628] sm:$0xff]
    %v594 = vld [vmem:[#allocation8 + $0x630] sm:$0xff]
    %v595 = vld [vmem:[#allocation8 + $0x638] sm:$0xff]
    %v596 = vld [vmem:[#allocation8 + $0x640] sm:$0xff]
    %v597 = vld [vmem:[#allocation8 + $0x648] sm:$0xff]
    %v598 = vld [vmem:[#allocation8 + $0x650] sm:$0xff]
    %v599 = vld [vmem:[#allocation8 + $0x658] sm:$0xff]
    %v600 = vld [vmem:[#allocation8 + $0x660] sm:$0xff]
    %v601 = vld [vmem:[#allocation8 + $0x668] sm:$0xff]
    %v602 = vld [vmem:[#allocation8 + $0x670] sm:$0xff]
    %v603 = vld [vmem:[#allocation8 + $0x678] sm:$0xff]
    %v604 = vld [vmem:[#allocation8 + $0x680] sm:$0xff]
    %v605 = vld [vmem:[#allocation8 + $0x688] sm:$0xff]
    %v606 = vld [vmem:[#allocation8 + $0x690] sm:$0xff]
    %v607 = vld [vmem:[#allocation8 + $0x698] sm:$0xff]
    %v608 = vld [vmem:[#allocation8 + $0x6a0] sm:$0xff]
    %v609 = vld [vmem:[#allocation8 + $0x6a8] sm:$0xff]
    %v610 = vld [vmem:[#allocation8 + $0x6b0] sm:$0xff]
    %v611 = vld [vmem:[#allocation8 + $0x6b8] sm:$0xff]
    %v612 = vld [vmem:[#allocation8 + $0x6c0] sm:$0xff]
    %v613 = vld [vmem:[#allocation8 + $0x6c8] sm:$0xff]
    %v614 = vld [vmem:[#allocation8 + $0x6d0] sm:$0xff]
    %v615 = vld [vmem:[#allocation8 + $0x6d8] sm:$0xff]
    %v616 = vld [vmem:[#allocation8 + $0x6e0] sm:$0xff]
    %v617 = vld [vmem:[#allocation8 + $0x6e8] sm:$0xff]
    %v618 = vld [vmem:[#allocation8 + $0x6f0] sm:$0xff]
    %v619 = vld [vmem:[#allocation8 + $0x6f8] sm:$0xff]
    %v620 = vld [vmem:[#allocation8 + $0x700] sm:$0xff]
    %v621 = vld [vmem:[#allocation8 + $0x708] sm:$0xff]
    %v622 = vld [vmem:[#allocation8 + $0x710] sm:$0xff]
    %v623 = vld [vmem:[#allocation8 + $0x718] sm:$0xff]
    %v624 = vld [vmem:[#allocation8 + $0x720] sm:$0xff]
    %v625 = vld [vmem:[#allocation8 + $0x728] sm:$0xff]
    %v626 = vld [vmem:[#allocation8 + $0x730] sm:$0xff]
    %v627 = vld [vmem:[#allocation8 + $0x738] sm:$0xff]
    %v628 = vld [vmem:[#allocation8 + $0x740] sm:$0xff]
    %v629 = vld [vmem:[#allocation8 + $0x748] sm:$0xff]
    %v630 = vld [vmem:[#allocation8 + $0x750] sm:$0xff]
    %v631 = vld [vmem:[#allocation8 + $0x758] sm:$0xff]
    %v632 = vld [vmem:[#allocation8 + $0x760] sm:$0xff]
    %v633 = vld [vmem:[#allocation8 + $0x768] sm:$0xff]
    %v634 = vld [vmem:[#allocation8 + $0x770] sm:$0xff]
    %v635 = vld [vmem:[#allocation8 + $0x778] sm:$0xff]
    %v636 = vld [vmem:[#allocation8 + $0x780] sm:$0xff]
    %v637 = vld [vmem:[#allocation8 + $0x788] sm:$0xff]
    %v638 = vld [vmem:[#allocation8 + $0x790] sm:$0xff]
    %v639 = vld [vmem:[#allocation8 + $0x798] sm:$0xff]
    %v640 = vld [vmem:[#allocation8 + $0x7a0] sm:$0xff]
    %v641 = vld [vmem:[#allocation8 + $0x7a8] sm:$0xff]
    %v642 = vld [vmem:[#allocation8 + $0x7b0] sm:$0xff]
    %v643 = vld [vmem:[#allocation8 + $0x7b8] sm:$0xff]
    %v644 = vld [vmem:[#allocation8 + $0x7c0] sm:$0xff]
    %v645 = vld [vmem:[#allocation8 + $0x7c8] sm:$0xff]
    %v646 = vld [vmem:[#allocation8 + $0x7d0] sm:$0xff]
    %v647 = vld [vmem:[#allocation8 + $0x7d8] sm:$0xff]
    %v648 = vld [vmem:[#allocation8 + $0x7e0] sm:$0xff]
    %v649 = vld [vmem:[#allocation8 + $0x7e8] sm:$0xff]
    %v650 = vld [vmem:[#allocation8 + $0x7f0] sm:$0xff]
    %v651 = vld [vmem:[#allocation8 + $0x7f8] sm:$0xff]
    %v652 = vld [vmem:[#allocation10] sm:$0xf]
    %v654 = vlaneseq
    %v655 = vshrl.u32 %v654, 7
    %v656 = vsub.s32 0, %v655
    %v657 = vrot.slane %v652, %v656
    %v658 = vlaneseq
    %v659 = vshrl.u32 %v658, 7
    %v660 = vsub.s32 1, %v659
    %v661 = vrot.slane %v652, %v660
    %v662 = vlaneseq
    %v663 = vshrl.u32 %v662, 7
    %v664 = vsub.s32 2, %v663
    %v665 = vrot.slane %v652, %v664
    %v666 = vlaneseq
    %v667 = vshrl.u32 %v666, 7
    %v668 = vsub.s32 3, %v667
    %v669 = vrot.slane %v652, %v668
    %674 = vmatprep.subr.mxu0 %v397
    %675 = vmatpush1.msra.mxu0 %v396
    %676 = vmatprep.subr.mxu0 %v401
    %677 = vmatpush1.msra.mxu0 %v400
    %678 = vmatprep.subr.mxu0 %v405
    %679 = vmatpush1.msra.mxu0 %v404
    %680 = vmatprep.subr.mxu0 %v409
    %681 = vmatpush1.msra.mxu0 %v408
    %682 = vmatprep.subr.mxu0 %v413
    %683 = vmatpush1.msra.mxu0 %v412
    %684 = vmatprep.subr.mxu0 %v417
    %685 = vmatpush1.msra.mxu0 %v416
    %686 = vmatprep.subr.mxu0 %v421
    %687 = vmatpush1.msra.mxu0 %v420
    %688 = vmatprep.subr.mxu0 %v425
    %689 = vmatpush1.msra.mxu0 %v424
    %690 = vmatprep.subr.mxu0 %v429
    %691 = vmatpush1.msra.mxu0 %v428
    %692 = vmatprep.subr.mxu0 %v433
    %693 = vmatpush1.msra.mxu0 %v432
    %694 = vmatprep.subr.mxu0 %v437
    %695 = vmatpush1.msra.mxu0 %v436
    %696 = vmatprep.subr.mxu0 %v441
    %697 = vmatpush1.msra.mxu0 %v440
    %698 = vmatprep.subr.mxu0 %v445
    %699 = vmatpush1.msra.mxu0 %v444
    %700 = vmatprep.subr.mxu0 %v449
    %701 = vmatpush1.msra.mxu0 %v448
    %702 = vmatprep.subr.mxu0 %v453
    %703 = vmatpush1.msra.mxu0 %v452
    %704 = vmatprep.subr.mxu0 %v457
    %705 = vmatpush1.msra.mxu0 %v456
    %706 = vmatprep.subr.mxu0 %v461
    %707 = vmatpush1.msra.mxu0 %v460
    %708 = vmatprep.subr.mxu0 %v465
    %709 = vmatpush1.msra.mxu0 %v464
    %710 = vmatprep.subr.mxu0 %v469
    %711 = vmatpush1.msra.mxu0 %v468
    %712 = vmatprep.subr.mxu0 %v473
    %713 = vmatpush1.msra.mxu0 %v472
    %714 = vmatprep.subr.mxu0 %v477
    %715 = vmatpush1.msra.mxu0 %v476
    %716 = vmatprep.subr.mxu0 %v481
    %717 = vmatpush1.msra.mxu0 %v480
    %718 = vmatprep.subr.mxu0 %v485
    %719 = vmatpush1.msra.mxu0 %v484
    %720 = vmatprep.subr.mxu0 %v489
    %721 = vmatpush1.msra.mxu0 %v488
    %722 = vmatprep.subr.mxu0 %v493
    %723 = vmatpush1.msra.mxu0 %v492
    %724 = vmatprep.subr.mxu0 %v497
    %725 = vmatpush1.msra.mxu0 %v496
    %726 = vmatprep.subr.mxu0 %v501
    %727 = vmatpush1.msra.mxu0 %v500
    %728 = vmatprep.subr.mxu0 %v505
    %729 = vmatpush1.msra.mxu0 %v504
    %730 = vmatprep.subr.mxu0 %v509
    %731 = vmatpush1.msra.mxu0 %v508
    %732 = vmatprep.subr.mxu0 %v513
    %733 = vmatpush1.msra.mxu0 %v512
    %734 = vmatprep.subr.mxu0 %v517
    %735 = vmatpush1.msra.mxu0 %v516
    %736 = vmatprep.subr.mxu0 %v521
    %737 = vmatpush1.msra.mxu0 %v520
    %738 = vmatprep.mubr.f32.mxu0 %v393
    %739 = vmatmul.mubr.f32.gmra.mrb[0].mxu0 %v392
    %v740 = vpop.f32.mrb[0].mxu0
    %v741 = vadd.f32 %v657, %v740
    %v742 = vpop.f32.mrb[0].mxu0
    %v743 = vadd.f32 %v661, %v742
    %744 = vdwg.mxu0
    %745 = vmatprep.subr.mxu0 %v525
    %746 = vmatpush1.msra.mxu0 %v524
    %747 = vmatprep.subr.mxu0 %v529
    %748 = vmatpush1.msra.mxu0 %v528
    %749 = vmatprep.subr.mxu0 %v533
    %750 = vmatpush1.msra.mxu0 %v532
    %751 = vmatprep.subr.mxu0 %v537
    %752 = vmatpush1.msra.mxu0 %v536
    %753 = vmatprep.subr.mxu0 %v541
    %754 = vmatpush1.msra.mxu0 %v540
    %755 = vmatprep.subr.mxu0 %v545
    %756 = vmatpush1.msra.mxu0 %v544
    %757 = vmatprep.subr.mxu0 %v549
    %758 = vmatpush1.msra.mxu0 %v548
    %759 = vmatprep.subr.mxu0 %v553
    %760 = vmatpush1.msra.mxu0 %v552
    %761 = vmatprep.subr.mxu0 %v557
    %762 = vmatpush1.msra.mxu0 %v556
    %763 = vmatprep.subr.mxu0 %v561
    %764 = vmatpush1.msra.mxu0 %v560
    %765 = vmatprep.subr.mxu0 %v565
    %766 = vmatpush1.msra.mxu0 %v564
    %767 = vmatprep.subr.mxu0 %v569
    %768 = vmatpush1.msra.mxu0 %v568
    %769 = vmatprep.subr.mxu0 %v573
    %770 = vmatpush1.msra.mxu0 %v572
    %771 = vmatprep.subr.mxu0 %v577
    %772 = vmatpush1.msra.mxu0 %v576
    %773 = vmatprep.subr.mxu0 %v581
    %774 = vmatpush1.msra.mxu0 %v580
    %775 = vmatprep.subr.mxu0 %v585
    %776 = vmatpush1.msra.mxu0 %v584
    %777 = vmatprep.subr.mxu0 %v589
    %778 = vmatpush1.msra.mxu0 %v588
    %779 = vmatprep.subr.mxu0 %v593
    %780 = vmatpush1.msra.mxu0 %v592
    %781 = vmatprep.subr.mxu0 %v597
    %782 = vmatpush1.msra.mxu0 %v596
    %783 = vmatprep.subr.mxu0 %v601
    %784 = vmatpush1.msra.mxu0 %v600
    %785 = vmatprep.subr.mxu0 %v605
    %786 = vmatpush1.msra.mxu0 %v604
    %787 = vmatprep.subr.mxu0 %v609
    %788 = vmatpush1.msra.mxu0 %v608
    %789 = vmatprep.subr.mxu0 %v613
    %790 = vmatpush1.msra.mxu0 %v612
    %791 = vmatprep.subr.mxu0 %v617
    %792 = vmatpush1.msra.mxu0 %v616
    %793 = vmatprep.subr.mxu0 %v621
    %794 = vmatpush1.msra.mxu0 %v620
    %795 = vmatprep.subr.mxu0 %v625
    %796 = vmatpush1.msra.mxu0 %v624
    %797 = vmatprep.subr.mxu0 %v629
    %798 = vmatpush1.msra.mxu0 %v628
    %799 = vmatprep.subr.mxu0 %v633
    %800 = vmatpush1.msra.mxu0 %v632
    %801 = vmatprep.subr.mxu0 %v637
    %802 = vmatpush1.msra.mxu0 %v636
    %803 = vmatprep.subr.mxu0 %v641
    %804 = vmatpush1.msra.mxu0 %v640
    %805 = vmatprep.subr.mxu0 %v645
    %806 = vmatpush1.msra.mxu0 %v644
    %807 = vmatprep.subr.mxu0 %v649
    %808 = vmatpush1.msra.mxu0 %v648
    %809 = vmatprep.mubr.f32.mxu0 %v395
    %810 = vmatmul.mubr.f32.gmra.mrb[0].mxu0 %v394
    %v811 = vpop.f32.mrb[0].mxu0
    %v812 = vadd.f32 %v741, %v811
    %v813 = vpop.f32.mrb[0].mxu0
    %v814 = vadd.f32 %v743, %v813
    %815 = vdwg.mxu0
    %816 = vmatprep.subr.mxu0 %v399
    %817 = vmatpush1.msra.mxu0 %v398
    %818 = vmatprep.subr.mxu0 %v403
    %819 = vmatpush1.msra.mxu0 %v402
    %820 = vmatprep.subr.mxu0 %v407
    %821 = vmatpush1.msra.mxu0 %v406
    %822 = vmatprep.subr.mxu0 %v411
    %823 = vmatpush1.msra.mxu0 %v410
    %824 = vmatprep.subr.mxu0 %v415
    %825 = vmatpush1.msra.mxu0 %v414
    %826 = vmatprep.subr.mxu0 %v419
    %827 = vmatpush1.msra.mxu0 %v418
    %828 = vmatprep.subr.mxu0 %v423
    %829 = vmatpush1.msra.mxu0 %v422
    %830 = vmatprep.subr.mxu0 %v427
    %831 = vmatpush1.msra.mxu0 %v426
    %832 = vmatprep.subr.mxu0 %v431
    %833 = vmatpush1.msra.mxu0 %v430
    %834 = vmatprep.subr.mxu0 %v435
    %835 = vmatpush1.msra.mxu0 %v434
    %836 = vmatprep.subr.mxu0 %v439
    %837 = vmatpush1.msra.mxu0 %v438
    %838 = vmatprep.subr.mxu0 %v443
    %839 = vmatpush1.msra.mxu0 %v442
    %840 = vmatprep.subr.mxu0 %v447
    %841 = vmatpush1.msra.mxu0 %v446
    %842 = vmatprep.subr.mxu0 %v451
    %843 = vmatpush1.msra.mxu0 %v450
    %844 = vmatprep.subr.mxu0 %v455
    %845 = vmatpush1.msra.mxu0 %v454
    %846 = vmatprep.subr.mxu0 %v459
    %847 = vmatpush1.msra.mxu0 %v458
    %848 = vmatprep.subr.mxu0 %v463
    %849 = vmatpush1.msra.mxu0 %v462
    %850 = vmatprep.subr.mxu0 %v467
    %851 = vmatpush1.msra.mxu0 %v466
    %852 = vmatprep.subr.mxu0 %v471
    %853 = vmatpush1.msra.mxu0 %v470
    %854 = vmatprep.subr.mxu0 %v475
    %855 = vmatpush1.msra.mxu0 %v474
    %856 = vmatprep.subr.mxu0 %v479
    %857 = vmatpush1.msra.mxu0 %v478
    %858 = vmatprep.subr.mxu0 %v483
    %859 = vmatpush1.msra.mxu0 %v482
    %860 = vmatprep.subr.mxu0 %v487
    %861 = vmatpush1.msra.mxu0 %v486
    %862 = vmatprep.subr.mxu0 %v491
    %863 = vmatpush1.msra.mxu0 %v490
    %864 = vmatprep.subr.mxu0 %v495
    %865 = vmatpush1.msra.mxu0 %v494
    %866 = vmatprep.subr.mxu0 %v499
    %867 = vmatpush1.msra.mxu0 %v498
    %868 = vmatprep.subr.mxu0 %v503
    %869 = vmatpush1.msra.mxu0 %v502
    %870 = vmatprep.subr.mxu0 %v507
    %871 = vmatpush1.msra.mxu0 %v506
    %872 = vmatprep.subr.mxu0 %v511
    %873 = vmatpush1.msra.mxu0 %v510
    %874 = vmatprep.subr.mxu0 %v515
    %875 = vmatpush1.msra.mxu0 %v514
    %876 = vmatprep.subr.mxu0 %v519
    %877 = vmatpush1.msra.mxu0 %v518
    %878 = vmatprep.subr.mxu0 %v523
    %879 = vmatpush1.msra.mxu0 %v522
    %880 = vmatprep.mubr.f32.mxu0 %v393
    %881 = vmatmul.mubr.f32.gmra.mrb[0].mxu0 %v392
    %v882 = vpop.f32.mrb[0].mxu0
    %v883 = vadd.f32 %v665, %v882
    %v884 = vpop.f32.mrb[0].mxu0
    %v885 = vadd.f32 %v669, %v884
    %886 = vdwg.mxu0
    %887 = vmatprep.subr.mxu0 %v527
    %888 = vmatpush1.msra.mxu0 %v526
    %889 = vmatprep.subr.mxu0 %v531
    %890 = vmatpush1.msra.mxu0 %v530
    %891 = vmatprep.subr.mxu0 %v535
    %892 = vmatpush1.msra.mxu0 %v534
    %893 = vmatprep.subr.mxu0 %v539
    %894 = vmatpush1.msra.mxu0 %v538
    %895 = vmatprep.subr.mxu0 %v543
    %896 = vmatpush1.msra.mxu0 %v542
    %897 = vmatprep.subr.mxu0 %v547
    %898 = vmatpush1.msra.mxu0 %v546
    %899 = vmatprep.subr.mxu0 %v551
    %900 = vmatpush1.msra.mxu0 %v550
    %901 = vmatprep.subr.mxu0 %v555
    %902 = vmatpush1.msra.mxu0 %v554
    %903 = vmatprep.subr.mxu0 %v559
    %904 = vmatpush1.msra.mxu0 %v558
    %905 = vmatprep.subr.mxu0 %v563
    %906 = vmatpush1.msra.mxu0 %v562
    %907 = vmatprep.subr.mxu0 %v567
    %908 = vmatpush1.msra.mxu0 %v566
    %909 = vmatprep.subr.mxu0 %v571
    %910 = vmatpush1.msra.mxu0 %v570
    %911 = vmatprep.subr.mxu0 %v575
    %912 = vmatpush1.msra.mxu0 %v574
    %913 = vmatprep.subr.mxu0 %v579
    %914 = vmatpush1.msra.mxu0 %v578
    %915 = vmatprep.subr.mxu0 %v583
    %916 = vmatpush1.msra.mxu0 %v582
    %917 = vmatprep.subr.mxu0 %v587
    %918 = vmatpush1.msra.mxu0 %v586
    %919 = vmatprep.subr.mxu0 %v591
    %920 = vmatpush1.msra.mxu0 %v590
    %921 = vmatprep.subr.mxu0 %v595
    %922 = vmatpush1.msra.mxu0 %v594
    %923 = vmatprep.subr.mxu0 %v599
    %924 = vmatpush1.msra.mxu0 %v598
    %925 = vmatprep.subr.mxu0 %v603
    %926 = vmatpush1.msra.mxu0 %v602
    %927 = vmatprep.subr.mxu0 %v607
    %928 = vmatpush1.msra.mxu0 %v606
    %929 = vmatprep.subr.mxu0 %v611
    %930 = vmatpush1.msra.mxu0 %v610
    %931 = vmatprep.subr.mxu0 %v615
    %932 = vmatpush1.msra.mxu0 %v614
    %933 = vmatprep.subr.mxu0 %v619
    %934 = vmatpush1.msra.mxu0 %v618
    %935 = vmatprep.subr.mxu0 %v623
    %936 = vmatpush1.msra.mxu0 %v622
    %937 = vmatprep.subr.mxu0 %v627
    %938 = vmatpush1.msra.mxu0 %v626
    %939 = vmatprep.subr.mxu0 %v631
    %940 = vmatpush1.msra.mxu0 %v630
    %941 = vmatprep.subr.mxu0 %v635
    %942 = vmatpush1.msra.mxu0 %v634
    %943 = vmatprep.subr.mxu0 %v639
    %944 = vmatpush1.msra.mxu0 %v638
    %945 = vmatprep.subr.mxu0 %v643
    %946 = vmatpush1.msra.mxu0 %v642
    %947 = vmatprep.subr.mxu0 %v647
    %948 = vmatpush1.msra.mxu0 %v646
    %949 = vmatprep.subr.mxu0 %v651
    %950 = vmatpush1.msra.mxu0 %v650
    %951 = vmatprep.mubr.f32.mxu0 %v395
    %952 = vmatmul.mubr.f32.gmra.mrb[0].mxu0 %v394
    %v953 = vpop.f32.mrb[0].mxu0
    %v954 = vadd.f32 %v883, %v953
    %v955 = vpop.f32.mrb[0].mxu0
    %v956 = vadd.f32 %v885, %v955
    %957 = vdwg.mxu0
    %v958 = vmax.f32 %v812, 0.0
    %v959 = vmax.f32 %v814, 0.0
    %v960 = vmax.f32 %v954, 0.0
    %v961 = vmax.f32 %v956, 0.0
    %v962 = vld [vmem:[#allocation11] sm:$0xff]
    %v963 = vld [vmem:[#allocation11 + $0x8] sm:$0xff]
    %v964 = vld [vmem:[#allocation11 + $0x10] sm:$0xff]
    %v965 = vld [vmem:[#allocation11 + $0x18] sm:$0xff]
    %v966 = vld [vmem:[#allocation11 + $0x20] sm:$0xff]
    %v967 = vld [vmem:[#allocation11 + $0x28] sm:$0xff]
    %v968 = vld [vmem:[#allocation11 + $0x30] sm:$0xff]
    %v969 = vld [vmem:[#allocation11 + $0x38] sm:$0xff]
    %v970 = vld [vmem:[#allocation11 + $0x40] sm:$0xff]
    %v971 = vld [vmem:[#allocation11 + $0x48] sm:$0xff]
    %v972 = vld [vmem:[#allocation11 + $0x50] sm:$0xff]
    %v973 = vld [vmem:[#allocation11 + $0x58] sm:$0xff]
    %v974 = vld [vmem:[#allocation11 + $0x60] sm:$0xff]
    %v975 = vld [vmem:[#allocation11 + $0x68] sm:$0xff]
    %v976 = vld [vmem:[#allocation11 + $0x70] sm:$0xff]
    %v977 = vld [vmem:[#allocation11 + $0x78] sm:$0xff]
    %v978 = vld [vmem:[#allocation11 + $0x80] sm:$0xff]
    %v979 = vld [vmem:[#allocation11 + $0x88] sm:$0xff]
    %v980 = vld [vmem:[#allocation11 + $0x90] sm:$0xff]
    %v981 = vld [vmem:[#allocation11 + $0x98] sm:$0xff]
    %v982 = vld [vmem:[#allocation11 + $0xa0] sm:$0xff]
    %v983 = vld [vmem:[#allocation11 + $0xa8] sm:$0xff]
    %v984 = vld [vmem:[#allocation11 + $0xb0] sm:$0xff]
    %v985 = vld [vmem:[#allocation11 + $0xb8] sm:$0xff]
    %v986 = vld [vmem:[#allocation11 + $0xc0] sm:$0xff]
    %v987 = vld [vmem:[#allocation11 + $0xc8] sm:$0xff]
    %v988 = vld [vmem:[#allocation11 + $0xd0] sm:$0xff]
    %v989 = vld [vmem:[#allocation11 + $0xd8] sm:$0xff]
    %v990 = vld [vmem:[#allocation11 + $0xe0] sm:$0xff]
    %v991 = vld [vmem:[#allocation11 + $0xe8] sm:$0xff]
    %v992 = vld [vmem:[#allocation11 + $0xf0] sm:$0xff]
    %v993 = vld [vmem:[#allocation11 + $0xf8] sm:$0xff]
    %v994 = vld [vmem:[#allocation11 + $0x100] sm:$0xff]
    %v995 = vld [vmem:[#allocation11 + $0x108] sm:$0xff]
    %v996 = vld [vmem:[#allocation11 + $0x110] sm:$0xff]
    %v997 = vld [vmem:[#allocation11 + $0x118] sm:$0xff]
    %v998 = vld [vmem:[#allocation11 + $0x120] sm:$0xff]
    %v999 = vld [vmem:[#allocation11 + $0x128] sm:$0xff]
    %v1000 = vld [vmem:[#allocation11 + $0x130] sm:$0xff]
    %v1001 = vld [vmem:[#allocation11 + $0x138] sm:$0xff]
    %v1002 = vld [vmem:[#allocation11 + $0x140] sm:$0xff]
    %v1003 = vld [vmem:[#allocation11 + $0x148] sm:$0xff]
    %v1004 = vld [vmem:[#allocation11 + $0x150] sm:$0xff]
    %v1005 = vld [vmem:[#allocation11 + $0x158] sm:$0xff]
    %v1006 = vld [vmem:[#allocation11 + $0x160] sm:$0xff]
    %v1007 = vld [vmem:[#allocation11 + $0x168] sm:$0xff]
    %v1008 = vld [vmem:[#allocation11 + $0x170] sm:$0xff]
    %v1009 = vld [vmem:[#allocation11 + $0x178] sm:$0xff]
    %v1010 = vld [vmem:[#allocation11 + $0x180] sm:$0xff]
    %v1011 = vld [vmem:[#allocation11 + $0x188] sm:$0xff]
    %v1012 = vld [vmem:[#allocation11 + $0x190] sm:$0xff]
    %v1013 = vld [vmem:[#allocation11 + $0x198] sm:$0xff]
    %v1014 = vld [vmem:[#allocation11 + $0x1a0] sm:$0xff]
    %v1015 = vld [vmem:[#allocation11 + $0x1a8] sm:$0xff]
    %v1016 = vld [vmem:[#allocation11 + $0x1b0] sm:$0xff]
    %v1017 = vld [vmem:[#allocation11 + $0x1b8] sm:$0xff]
    %v1018 = vld [vmem:[#allocation11 + $0x1c0] sm:$0xff]
    %v1019 = vld [vmem:[#allocation11 + $0x1c8] sm:$0xff]
    %v1020 = vld [vmem:[#allocation11 + $0x1d0] sm:$0xff]
    %v1021 = vld [vmem:[#allocation11 + $0x1d8] sm:$0xff]
    %v1022 = vld [vmem:[#allocation11 + $0x1e0] sm:$0xff]
    %v1023 = vld [vmem:[#allocation11 + $0x1e8] sm:$0xff]
    %v1024 = vld [vmem:[#allocation11 + $0x1f0] sm:$0xff]
    %v1025 = vld [vmem:[#allocation11 + $0x1f8] sm:$0xff]
    %v1026 = vld [vmem:[#allocation11 + $0x200] sm:$0xff]
    %v1027 = vld [vmem:[#allocation11 + $0x208] sm:$0xff]
    %v1028 = vld [vmem:[#allocation11 + $0x210] sm:$0xff]
    %v1029 = vld [vmem:[#allocation11 + $0x218] sm:$0xff]
    %v1030 = vld [vmem:[#allocation11 + $0x220] sm:$0xff]
    %v1031 = vld [vmem:[#allocation11 + $0x228] sm:$0xff]
    %v1032 = vld [vmem:[#allocation11 + $0x230] sm:$0xff]
    %v1033 = vld [vmem:[#allocation11 + $0x238] sm:$0xff]
    %v1034 = vld [vmem:[#allocation11 + $0x240] sm:$0xff]
    %v1035 = vld [vmem:[#allocation11 + $0x248] sm:$0xff]
    %v1036 = vld [vmem:[#allocation11 + $0x250] sm:$0xff]
    %v1037 = vld [vmem:[#allocation11 + $0x258] sm:$0xff]
    %v1038 = vld [vmem:[#allocation11 + $0x260] sm:$0xff]
    %v1039 = vld [vmem:[#allocation11 + $0x268] sm:$0xff]
    %v1040 = vld [vmem:[#allocation11 + $0x270] sm:$0xff]
    %v1041 = vld [vmem:[#allocation11 + $0x278] sm:$0xff]
    %v1042 = vld [vmem:[#allocation11 + $0x280] sm:$0xff]
    %v1043 = vld [vmem:[#allocation11 + $0x288] sm:$0xff]
    %v1044 = vld [vmem:[#allocation11 + $0x290] sm:$0xff]
    %v1045 = vld [vmem:[#allocation11 + $0x298] sm:$0xff]
    %v1046 = vld [vmem:[#allocation11 + $0x2a0] sm:$0xff]
    %v1047 = vld [vmem:[#allocation11 + $0x2a8] sm:$0xff]
    %v1048 = vld [vmem:[#allocation11 + $0x2b0] sm:$0xff]
    %v1049 = vld [vmem:[#allocation11 + $0x2b8] sm:$0xff]
    %v1050 = vld [vmem:[#allocation11 + $0x2c0] sm:$0xff]
    %v1051 = vld [vmem:[#allocation11 + $0x2c8] sm:$0xff]
    %v1052 = vld [vmem:[#allocation11 + $0x2d0] sm:$0xff]
    %v1053 = vld [vmem:[#allocation11 + $0x2d8] sm:$0xff]
    %v1054 = vld [vmem:[#allocation11 + $0x2e0] sm:$0xff]
    %v1055 = vld [vmem:[#allocation11 + $0x2e8] sm:$0xff]
    %v1056 = vld [vmem:[#allocation11 + $0x2f0] sm:$0xff]
    %v1057 = vld [vmem:[#allocation11 + $0x2f8] sm:$0xff]
    %v1058 = vld [vmem:[#allocation11 + $0x300] sm:$0xff]
    %v1059 = vld [vmem:[#allocation11 + $0x308] sm:$0xff]
    %v1060 = vld [vmem:[#allocation11 + $0x310] sm:$0xff]
    %v1061 = vld [vmem:[#allocation11 + $0x318] sm:$0xff]
    %v1062 = vld [vmem:[#allocation11 + $0x320] sm:$0xff]
    %v1063 = vld [vmem:[#allocation11 + $0x328] sm:$0xff]
    %v1064 = vld [vmem:[#allocation11 + $0x330] sm:$0xff]
    %v1065 = vld [vmem:[#allocation11 + $0x338] sm:$0xff]
    %v1066 = vld [vmem:[#allocation11 + $0x340] sm:$0xff]
    %v1067 = vld [vmem:[#allocation11 + $0x348] sm:$0xff]
    %v1068 = vld [vmem:[#allocation11 + $0x350] sm:$0xff]
    %v1069 = vld [vmem:[#allocation11 + $0x358] sm:$0xff]
    %v1070 = vld [vmem:[#allocation11 + $0x360] sm:$0xff]
    %v1071 = vld [vmem:[#allocation11 + $0x368] sm:$0xff]
    %v1072 = vld [vmem:[#allocation11 + $0x370] sm:$0xff]
    %v1073 = vld [vmem:[#allocation11 + $0x378] sm:$0xff]
    %v1074 = vld [vmem:[#allocation11 + $0x380] sm:$0xff]
    %v1075 = vld [vmem:[#allocation11 + $0x388] sm:$0xff]
    %v1076 = vld [vmem:[#allocation11 + $0x390] sm:$0xff]
    %v1077 = vld [vmem:[#allocation11 + $0x398] sm:$0xff]
    %v1078 = vld [vmem:[#allocation11 + $0x3a0] sm:$0xff]
    %v1079 = vld [vmem:[#allocation11 + $0x3a8] sm:$0xff]
    %v1080 = vld [vmem:[#allocation11 + $0x3b0] sm:$0xff]
    %v1081 = vld [vmem:[#allocation11 + $0x3b8] sm:$0xff]
    %v1082 = vld [vmem:[#allocation11 + $0x3c0] sm:$0xff]
    %v1083 = vld [vmem:[#allocation11 + $0x3c8] sm:$0xff]
    %v1084 = vld [vmem:[#allocation11 + $0x3d0] sm:$0xff]
    %v1085 = vld [vmem:[#allocation11 + $0x3d8] sm:$0xff]
    %v1086 = vld [vmem:[#allocation11 + $0x3e0] sm:$0xff]
    %v1087 = vld [vmem:[#allocation11 + $0x3e8] sm:$0xff]
    %v1088 = vld [vmem:[#allocation11 + $0x3f0] sm:$0xff]
    %v1089 = vld [vmem:[#allocation11 + $0x3f8] sm:$0xff]
    %v1090 = vld [vmem:[#allocation11 + $0x400] sm:$0xff]
    %v1091 = vld [vmem:[#allocation11 + $0x408] sm:$0xff]
    %v1092 = vld [vmem:[#allocation11 + $0x410] sm:$0xff]
    %v1093 = vld [vmem:[#allocation11 + $0x418] sm:$0xff]
    %v1094 = vld [vmem:[#allocation11 + $0x420] sm:$0xff]
    %v1095 = vld [vmem:[#allocation11 + $0x428] sm:$0xff]
    %v1096 = vld [vmem:[#allocation11 + $0x430] sm:$0xff]
    %v1097 = vld [vmem:[#allocation11 + $0x438] sm:$0xff]
    %v1098 = vld [vmem:[#allocation11 + $0x440] sm:$0xff]
    %v1099 = vld [vmem:[#allocation11 + $0x448] sm:$0xff]
    %v1100 = vld [vmem:[#allocation11 + $0x450] sm:$0xff]
    %v1101 = vld [vmem:[#allocation11 + $0x458] sm:$0xff]
    %v1102 = vld [vmem:[#allocation11 + $0x460] sm:$0xff]
    %v1103 = vld [vmem:[#allocation11 + $0x468] sm:$0xff]
    %v1104 = vld [vmem:[#allocation11 + $0x470] sm:$0xff]
    %v1105 = vld [vmem:[#allocation11 + $0x478] sm:$0xff]
    %v1106 = vld [vmem:[#allocation11 + $0x480] sm:$0xff]
    %v1107 = vld [vmem:[#allocation11 + $0x488] sm:$0xff]
    %v1108 = vld [vmem:[#allocation11 + $0x490] sm:$0xff]
    %v1109 = vld [vmem:[#allocation11 + $0x498] sm:$0xff]
    %v1110 = vld [vmem:[#allocation11 + $0x4a0] sm:$0xff]
    %v1111 = vld [vmem:[#allocation11 + $0x4a8] sm:$0xff]
    %v1112 = vld [vmem:[#allocation11 + $0x4b0] sm:$0xff]
    %v1113 = vld [vmem:[#allocation11 + $0x4b8] sm:$0xff]
    %v1114 = vld [vmem:[#allocation11 + $0x4c0] sm:$0xff]
    %v1115 = vld [vmem:[#allocation11 + $0x4c8] sm:$0xff]
    %v1116 = vld [vmem:[#allocation11 + $0x4d0] sm:$0xff]
    %v1117 = vld [vmem:[#allocation11 + $0x4d8] sm:$0xff]
    %v1118 = vld [vmem:[#allocation11 + $0x4e0] sm:$0xff]
    %v1119 = vld [vmem:[#allocation11 + $0x4e8] sm:$0xff]
    %v1120 = vld [vmem:[#allocation11 + $0x4f0] sm:$0xff]
    %v1121 = vld [vmem:[#allocation11 + $0x4f8] sm:$0xff]
    %v1122 = vld [vmem:[#allocation11 + $0x500] sm:$0xff]
    %v1123 = vld [vmem:[#allocation11 + $0x508] sm:$0xff]
    %v1124 = vld [vmem:[#allocation11 + $0x510] sm:$0xff]
    %v1125 = vld [vmem:[#allocation11 + $0x518] sm:$0xff]
    %v1126 = vld [vmem:[#allocation11 + $0x520] sm:$0xff]
    %v1127 = vld [vmem:[#allocation11 + $0x528] sm:$0xff]
    %v1128 = vld [vmem:[#allocation11 + $0x530] sm:$0xff]
    %v1129 = vld [vmem:[#allocation11 + $0x538] sm:$0xff]
    %v1130 = vld [vmem:[#allocation11 + $0x540] sm:$0xff]
    %v1131 = vld [vmem:[#allocation11 + $0x548] sm:$0xff]
    %v1132 = vld [vmem:[#allocation11 + $0x550] sm:$0xff]
    %v1133 = vld [vmem:[#allocation11 + $0x558] sm:$0xff]
    %v1134 = vld [vmem:[#allocation11 + $0x560] sm:$0xff]
    %v1135 = vld [vmem:[#allocation11 + $0x568] sm:$0xff]
    %v1136 = vld [vmem:[#allocation11 + $0x570] sm:$0xff]
    %v1137 = vld [vmem:[#allocation11 + $0x578] sm:$0xff]
    %v1138 = vld [vmem:[#allocation11 + $0x580] sm:$0xff]
    %v1139 = vld [vmem:[#allocation11 + $0x588] sm:$0xff]
    %v1140 = vld [vmem:[#allocation11 + $0x590] sm:$0xff]
    %v1141 = vld [vmem:[#allocation11 + $0x598] sm:$0xff]
    %v1142 = vld [vmem:[#allocation11 + $0x5a0] sm:$0xff]
    %v1143 = vld [vmem:[#allocation11 + $0x5a8] sm:$0xff]
    %v1144 = vld [vmem:[#allocation11 + $0x5b0] sm:$0xff]
    %v1145 = vld [vmem:[#allocation11 + $0x5b8] sm:$0xff]
    %v1146 = vld [vmem:[#allocation11 + $0x5c0] sm:$0xff]
    %v1147 = vld [vmem:[#allocation11 + $0x5c8] sm:$0xff]
    %v1148 = vld [vmem:[#allocation11 + $0x5d0] sm:$0xff]
    %v1149 = vld [vmem:[#allocation11 + $0x5d8] sm:$0xff]
    %v1150 = vld [vmem:[#allocation11 + $0x5e0] sm:$0xff]
    %v1151 = vld [vmem:[#allocation11 + $0x5e8] sm:$0xff]
    %v1152 = vld [vmem:[#allocation11 + $0x5f0] sm:$0xff]
    %v1153 = vld [vmem:[#allocation11 + $0x5f8] sm:$0xff]
    %v1154 = vld [vmem:[#allocation11 + $0x600] sm:$0xff]
    %v1155 = vld [vmem:[#allocation11 + $0x608] sm:$0xff]
    %v1156 = vld [vmem:[#allocation11 + $0x610] sm:$0xff]
    %v1157 = vld [vmem:[#allocation11 + $0x618] sm:$0xff]
    %v1158 = vld [vmem:[#allocation11 + $0x620] sm:$0xff]
    %v1159 = vld [vmem:[#allocation11 + $0x628] sm:$0xff]
    %v1160 = vld [vmem:[#allocation11 + $0x630] sm:$0xff]
    %v1161 = vld [vmem:[#allocation11 + $0x638] sm:$0xff]
    %v1162 = vld [vmem:[#allocation11 + $0x640] sm:$0xff]
    %v1163 = vld [vmem:[#allocation11 + $0x648] sm:$0xff]
    %v1164 = vld [vmem:[#allocation11 + $0x650] sm:$0xff]
    %v1165 = vld [vmem:[#allocation11 + $0x658] sm:$0xff]
    %v1166 = vld [vmem:[#allocation11 + $0x660] sm:$0xff]
    %v1167 = vld [vmem:[#allocation11 + $0x668] sm:$0xff]
    %v1168 = vld [vmem:[#allocation11 + $0x670] sm:$0xff]
    %v1169 = vld [vmem:[#allocation11 + $0x678] sm:$0xff]
    %v1170 = vld [vmem:[#allocation11 + $0x680] sm:$0xff]
    %v1171 = vld [vmem:[#allocation11 + $0x688] sm:$0xff]
    %v1172 = vld [vmem:[#allocation11 + $0x690] sm:$0xff]
    %v1173 = vld [vmem:[#allocation11 + $0x698] sm:$0xff]
    %v1174 = vld [vmem:[#allocation11 + $0x6a0] sm:$0xff]
    %v1175 = vld [vmem:[#allocation11 + $0x6a8] sm:$0xff]
    %v1176 = vld [vmem:[#allocation11 + $0x6b0] sm:$0xff]
    %v1177 = vld [vmem:[#allocation11 + $0x6b8] sm:$0xff]
    %v1178 = vld [vmem:[#allocation11 + $0x6c0] sm:$0xff]
    %v1179 = vld [vmem:[#allocation11 + $0x6c8] sm:$0xff]
    %v1180 = vld [vmem:[#allocation11 + $0x6d0] sm:$0xff]
    %v1181 = vld [vmem:[#allocation11 + $0x6d8] sm:$0xff]
    %v1182 = vld [vmem:[#allocation11 + $0x6e0] sm:$0xff]
    %v1183 = vld [vmem:[#allocation11 + $0x6e8] sm:$0xff]
    %v1184 = vld [vmem:[#allocation11 + $0x6f0] sm:$0xff]
    %v1185 = vld [vmem:[#allocation11 + $0x6f8] sm:$0xff]
    %v1186 = vld [vmem:[#allocation11 + $0x700] sm:$0xff]
    %v1187 = vld [vmem:[#allocation11 + $0x708] sm:$0xff]
    %v1188 = vld [vmem:[#allocation11 + $0x710] sm:$0xff]
    %v1189 = vld [vmem:[#allocation11 + $0x718] sm:$0xff]
    %v1190 = vld [vmem:[#allocation11 + $0x720] sm:$0xff]
    %v1191 = vld [vmem:[#allocation11 + $0x728] sm:$0xff]
    %v1192 = vld [vmem:[#allocation11 + $0x730] sm:$0xff]
    %v1193 = vld [vmem:[#allocation11 + $0x738] sm:$0xff]
    %v1194 = vld [vmem:[#allocation11 + $0x740] sm:$0xff]
    %v1195 = vld [vmem:[#allocation11 + $0x748] sm:$0xff]
    %v1196 = vld [vmem:[#allocation11 + $0x750] sm:$0xff]
    %v1197 = vld [vmem:[#allocation11 + $0x758] sm:$0xff]
    %v1198 = vld [vmem:[#allocation11 + $0x760] sm:$0xff]
    %v1199 = vld [vmem:[#allocation11 + $0x768] sm:$0xff]
    %v1200 = vld [vmem:[#allocation11 + $0x770] sm:$0xff]
    %v1201 = vld [vmem:[#allocation11 + $0x778] sm:$0xff]
    %v1202 = vld [vmem:[#allocation11 + $0x780] sm:$0xff]
    %v1203 = vld [vmem:[#allocation11 + $0x788] sm:$0xff]
    %v1204 = vld [vmem:[#allocation11 + $0x790] sm:$0xff]
    %v1205 = vld [vmem:[#allocation11 + $0x798] sm:$0xff]
    %v1206 = vld [vmem:[#allocation11 + $0x7a0] sm:$0xff]
    %v1207 = vld [vmem:[#allocation11 + $0x7a8] sm:$0xff]
    %v1208 = vld [vmem:[#allocation11 + $0x7b0] sm:$0xff]
    %v1209 = vld [vmem:[#allocation11 + $0x7b8] sm:$0xff]
    %v1210 = vld [vmem:[#allocation11 + $0x7c0] sm:$0xff]
    %v1211 = vld [vmem:[#allocation11 + $0x7c8] sm:$0xff]
    %v1212 = vld [vmem:[#allocation11 + $0x7d0] sm:$0xff]
    %v1213 = vld [vmem:[#allocation11 + $0x7d8] sm:$0xff]
    %v1214 = vld [vmem:[#allocation11 + $0x7e0] sm:$0xff]
    %v1215 = vld [vmem:[#allocation11 + $0x7e8] sm:$0xff]
    %v1216 = vld [vmem:[#allocation11 + $0x7f0] sm:$0xff]
    %v1217 = vld [vmem:[#allocation11 + $0x7f8] sm:$0xff]
    %v1218 = vld [vmem:[#allocation13] sm:$0xf]
    %v1220 = vlaneseq
    %v1221 = vshrl.u32 %v1220, 7
    %v1222 = vsub.s32 0, %v1221
    %v1223 = vrot.slane %v1218, %v1222
    %v1224 = vlaneseq
    %v1225 = vshrl.u32 %v1224, 7
    %v1226 = vsub.s32 1, %v1225
    %v1227 = vrot.slane %v1218, %v1226
    %v1228 = vlaneseq
    %v1229 = vshrl.u32 %v1228, 7
    %v1230 = vsub.s32 2, %v1229
    %v1231 = vrot.slane %v1218, %v1230
    %v1232 = vlaneseq
    %v1233 = vshrl.u32 %v1232, 7
    %v1234 = vsub.s32 3, %v1233
    %v1235 = vrot.slane %v1218, %v1234
    %1240 = vmatprep.subr.mxu0 %v963
    %1241 = vmatpush1.msra.mxu0 %v962
    %1242 = vmatprep.subr.mxu0 %v967
    %1243 = vmatpush1.msra.mxu0 %v966
    %1244 = vmatprep.subr.mxu0 %v971
    %1245 = vmatpush1.msra.mxu0 %v970
    %1246 = vmatprep.subr.mxu0 %v975
    %1247 = vmatpush1.msra.mxu0 %v974
    %1248 = vmatprep.subr.mxu0 %v979
    %1249 = vmatpush1.msra.mxu0 %v978
    %1250 = vmatprep.subr.mxu0 %v983
    %1251 = vmatpush1.msra.mxu0 %v982
    %1252 = vmatprep.subr.mxu0 %v987
    %1253 = vmatpush1.msra.mxu0 %v986
    %1254 = vmatprep.subr.mxu0 %v991
    %1255 = vmatpush1.msra.mxu0 %v990
    %1256 = vmatprep.subr.mxu0 %v995
    %1257 = vmatpush1.msra.mxu0 %v994
    %1258 = vmatprep.subr.mxu0 %v999
    %1259 = vmatpush1.msra.mxu0 %v998
    %1260 = vmatprep.subr.mxu0 %v1003
    %1261 = vmatpush1.msra.mxu0 %v1002
    %1262 = vmatprep.subr.mxu0 %v1007
    %1263 = vmatpush1.msra.mxu0 %v1006
    %1264 = vmatprep.subr.mxu0 %v1011
    %1265 = vmatpush1.msra.mxu0 %v1010
    %1266 = vmatprep.subr.mxu0 %v1015
    %1267 = vmatpush1.msra.mxu0 %v1014
    %1268 = vmatprep.subr.mxu0 %v1019
    %1269 = vmatpush1.msra.mxu0 %v1018
    %1270 = vmatprep.subr.mxu0 %v1023
    %1271 = vmatpush1.msra.mxu0 %v1022
    %1272 = vmatprep.subr.mxu0 %v1027
    %1273 = vmatpush1.msra.mxu0 %v1026
    %1274 = vmatprep.subr.mxu0 %v1031
    %1275 = vmatpush1.msra.mxu0 %v1030
    %1276 = vmatprep.subr.mxu0 %v1035
    %1277 = vmatpush1.msra.mxu0 %v1034
    %1278 = vmatprep.subr.mxu0 %v1039
    %1279 = vmatpush1.msra.mxu0 %v1038
    %1280 = vmatprep.subr.mxu0 %v1043
    %1281 = vmatpush1.msra.mxu0 %v1042
    %1282 = vmatprep.subr.mxu0 %v1047
    %1283 = vmatpush1.msra.mxu0 %v1046
    %1284 = vmatprep.subr.mxu0 %v1051
    %1285 = vmatpush1.msra.mxu0 %v1050
    %1286 = vmatprep.subr.mxu0 %v1055
    %1287 = vmatpush1.msra.mxu0 %v1054
    %1288 = vmatprep.subr.mxu0 %v1059
    %1289 = vmatpush1.msra.mxu0 %v1058
    %1290 = vmatprep.subr.mxu0 %v1063
    %1291 = vmatpush1.msra.mxu0 %v1062
    %1292 = vmatprep.subr.mxu0 %v1067
    %1293 = vmatpush1.msra.mxu0 %v1066
    %1294 = vmatprep.subr.mxu0 %v1071
    %1295 = vmatpush1.msra.mxu0 %v1070
    %1296 = vmatprep.subr.mxu0 %v1075
    %1297 = vmatpush1.msra.mxu0 %v1074
    %1298 = vmatprep.subr.mxu0 %v1079
    %1299 = vmatpush1.msra.mxu0 %v1078
    %1300 = vmatprep.subr.mxu0 %v1083
    %1301 = vmatpush1.msra.mxu0 %v1082
    %1302 = vmatprep.subr.mxu0 %v1087
    %1303 = vmatpush1.msra.mxu0 %v1086
    %1304 = vmatprep.mubr.f32.mxu0 %v959
    %1305 = vmatmul.mubr.f32.gmra.mrb[0].mxu0 %v958
    %v1306 = vpop.f32.mrb[0].mxu0
    %v1307 = vadd.f32 %v1223, %v1306
    %v1308 = vpop.f32.mrb[0].mxu0
    %v1309 = vadd.f32 %v1227, %v1308
    %1310 = vdwg.mxu0
    %1311 = vmatprep.subr.mxu0 %v1091
    %1312 = vmatpush1.msra.mxu0 %v1090
    %1313 = vmatprep.subr.mxu0 %v1095
    %1314 = vmatpush1.msra.mxu0 %v1094
    %1315 = vmatprep.subr.mxu0 %v1099
    %1316 = vmatpush1.msra.mxu0 %v1098
    %1317 = vmatprep.subr.mxu0 %v1103
    %1318 = vmatpush1.msra.mxu0 %v1102
    %1319 = vmatprep.subr.mxu0 %v1107
    %1320 = vmatpush1.msra.mxu0 %v1106
    %1321 = vmatprep.subr.mxu0 %v1111
    %1322 = vmatpush1.msra.mxu0 %v1110
    %1323 = vmatprep.subr.mxu0 %v1115
    %1324 = vmatpush1.msra.mxu0 %v1114
    %1325 = vmatprep.subr.mxu0 %v1119
    %1326 = vmatpush1.msra.mxu0 %v1118
    %1327 = vmatprep.subr.mxu0 %v1123
    %1328 = vmatpush1.msra.mxu0 %v1122
    %1329 = vmatprep.subr.mxu0 %v1127
    %1330 = vmatpush1.msra.mxu0 %v1126
    %1331 = vmatprep.subr.mxu0 %v1131
    %1332 = vmatpush1.msra.mxu0 %v1130
    %1333 = vmatprep.subr.mxu0 %v1135
    %1334 = vmatpush1.msra.mxu0 %v1134
    %1335 = vmatprep.subr.mxu0 %v1139
    %1336 = vmatpush1.msra.mxu0 %v1138
    %1337 = vmatprep.subr.mxu0 %v1143
    %1338 = vmatpush1.msra.mxu0 %v1142
    %1339 = vmatprep.subr.mxu0 %v1147
    %1340 = vmatpush1.msra.mxu0 %v1146
    %1341 = vmatprep.subr.mxu0 %v1151
    %1342 = vmatpush1.msra.mxu0 %v1150
    %1343 = vmatprep.subr.mxu0 %v1155
    %1344 = vmatpush1.msra.mxu0 %v1154
    %1345 = vmatprep.subr.mxu0 %v1159
    %1346 = vmatpush1.msra.mxu0 %v1158
    %1347 = vmatprep.subr.mxu0 %v1163
    %1348 = vmatpush1.msra.mxu0 %v1162
    %1349 = vmatprep.subr.mxu0 %v1167
    %1350 = vmatpush1.msra.mxu0 %v1166
    %1351 = vmatprep.subr.mxu0 %v1171
    %1352 = vmatpush1.msra.mxu0 %v1170
    %1353 = vmatprep.subr.mxu0 %v1175
    %1354 = vmatpush1.msra.mxu0 %v1174
    %1355 = vmatprep.subr.mxu0 %v1179
    %1356 = vmatpush1.msra.mxu0 %v1178
    %1357 = vmatprep.subr.mxu0 %v1183
    %1358 = vmatpush1.msra.mxu0 %v1182
    %1359 = vmatprep.subr.mxu0 %v1187
    %1360 = vmatpush1.msra.mxu0 %v1186
    %1361 = vmatprep.subr.mxu0 %v1191
    %1362 = vmatpush1.msra.mxu0 %v1190
    %1363 = vmatprep.subr.mxu0 %v1195
    %1364 = vmatpush1.msra.mxu0 %v1194
    %1365 = vmatprep.subr.mxu0 %v1199
    %1366 = vmatpush1.msra.mxu0 %v1198
    %1367 = vmatprep.subr.mxu0 %v1203
    %1368 = vmatpush1.msra.mxu0 %v1202
    %1369 = vmatprep.subr.mxu0 %v1207
    %1370 = vmatpush1.msra.mxu0 %v1206
    %1371 = vmatprep.subr.mxu0 %v1211
    %1372 = vmatpush1.msra.mxu0 %v1210
    %1373 = vmatprep.subr.mxu0 %v1215
    %1374 = vmatpush1.msra.mxu0 %v1214
    %1375 = vmatprep.mubr.f32.mxu0 %v961
    %1376 = vmatmul.mubr.f32.gmra.mrb[0].mxu0 %v960
    %v1377 = vpop.f32.mrb[0].mxu0
    %v1378 = vadd.f32 %v1307, %v1377
    %v1379 = vpop.f32.mrb[0].mxu0
    %v1380 = vadd.f32 %v1309, %v1379
    %1381 = vdwg.mxu0
    %1382 = vmatprep.subr.mxu0 %v965
    %1383 = vmatpush1.msra.mxu0 %v964
    %1384 = vmatprep.subr.mxu0 %v969
    %1385 = vmatpush1.msra.mxu0 %v968
    %1386 = vmatprep.subr.mxu0 %v973
    %1387 = vmatpush1.msra.mxu0 %v972
    %1388 = vmatprep.subr.mxu0 %v977
    %1389 = vmatpush1.msra.mxu0 %v976
    %1390 = vmatprep.subr.mxu0 %v981
    %1391 = vmatpush1.msra.mxu0 %v980
    %1392 = vmatprep.subr.mxu0 %v985
    %1393 = vmatpush1.msra.mxu0 %v984
    %1394 = vmatprep.subr.mxu0 %v989
    %1395 = vmatpush1.msra.mxu0 %v988
    %1396 = vmatprep.subr.mxu0 %v993
    %1397 = vmatpush1.msra.mxu0 %v992
    %1398 = vmatprep.subr.mxu0 %v997
    %1399 = vmatpush1.msra.mxu0 %v996
    %1400 = vmatprep.subr.mxu0 %v1001
    %1401 = vmatpush1.msra.mxu0 %v1000
    %1402 = vmatprep.subr.mxu0 %v1005
    %1403 = vmatpush1.msra.mxu0 %v1004
    %1404 = vmatprep.subr.mxu0 %v1009
    %1405 = vmatpush1.msra.mxu0 %v1008
    %1406 = vmatprep.subr.mxu0 %v1013
    %1407 = vmatpush1.msra.mxu0 %v1012
    %1408 = vmatprep.subr.mxu0 %v1017
    %1409 = vmatpush1.msra.mxu0 %v1016
    %1410 = vmatprep.subr.mxu0 %v1021
    %1411 = vmatpush1.msra.mxu0 %v1020
    %1412 = vmatprep.subr.mxu0 %v1025
    %1413 = vmatpush1.msra.mxu0 %v1024
    %1414 = vmatprep.subr.mxu0 %v1029
    %1415 = vmatpush1.msra.mxu0 %v1028
    %1416 = vmatprep.subr.mxu0 %v1033
    %1417 = vmatpush1.msra.mxu0 %v1032
    %1418 = vmatprep.subr.mxu0 %v1037
    %1419 = vmatpush1.msra.mxu0 %v1036
    %1420 = vmatprep.subr.mxu0 %v1041
    %1421 = vmatpush1.msra.mxu0 %v1040
    %1422 = vmatprep.subr.mxu0 %v1045
    %1423 = vmatpush1.msra.mxu0 %v1044
    %1424 = vmatprep.subr.mxu0 %v1049
    %1425 = vmatpush1.msra.mxu0 %v1048
    %1426 = vmatprep.subr.mxu0 %v1053
    %1427 = vmatpush1.msra.mxu0 %v1052
    %1428 = vmatprep.subr.mxu0 %v1057
    %1429 = vmatpush1.msra.mxu0 %v1056
    %1430 = vmatprep.subr.mxu0 %v1061
    %1431 = vmatpush1.msra.mxu0 %v1060
    %1432 = vmatprep.subr.mxu0 %v1065
    %1433 = vmatpush1.msra.mxu0 %v1064
    %1434 = vmatprep.subr.mxu0 %v1069
    %1435 = vmatpush1.msra.mxu0 %v1068
    %1436 = vmatprep.subr.mxu0 %v1073
    %1437 = vmatpush1.msra.mxu0 %v1072
    %1438 = vmatprep.subr.mxu0 %v1077
    %1439 = vmatpush1.msra.mxu0 %v1076
    %1440 = vmatprep.subr.mxu0 %v1081
    %1441 = vmatpush1.msra.mxu0 %v1080
    %1442 = vmatprep.subr.mxu0 %v1085
    %1443 = vmatpush1.msra.mxu0 %v1084
    %1444 = vmatprep.subr.mxu0 %v1089
    %1445 = vmatpush1.msra.mxu0 %v1088
    %1446 = vmatprep.mubr.f32.mxu0 %v959
    %1447 = vmatmul.mubr.f32.gmra.mrb[0].mxu0 %v958
    %v1448 = vpop.f32.mrb[0].mxu0
    %v1449 = vadd.f32 %v1231, %v1448
    %v1450 = vpop.f32.mrb[0].mxu0
    %v1451 = vadd.f32 %v1235, %v1450
    %1452 = vdwg.mxu0
    %1453 = vmatprep.subr.mxu0 %v1093
    %1454 = vmatpush1.msra.mxu0 %v1092
    %1455 = vmatprep.subr.mxu0 %v1097
    %1456 = vmatpush1.msra.mxu0 %v1096
    %1457 = vmatprep.subr.mxu0 %v1101
    %1458 = vmatpush1.msra.mxu0 %v1100
    %1459 = vmatprep.subr.mxu0 %v1105
    %1460 = vmatpush1.msra.mxu0 %v1104
    %1461 = vmatprep.subr.mxu0 %v1109
    %1462 = vmatpush1.msra.mxu0 %v1108
    %1463 = vmatprep.subr.mxu0 %v1113
    %1464 = vmatpush1.msra.mxu0 %v1112
    %1465 = vmatprep.subr.mxu0 %v1117
    %1466 = vmatpush1.msra.mxu0 %v1116
    %1467 = vmatprep.subr.mxu0 %v1121
    %1468 = vmatpush1.msra.mxu0 %v1120
    %1469 = vmatprep.subr.mxu0 %v1125
    %1470 = vmatpush1.msra.mxu0 %v1124
    %1471 = vmatprep.subr.mxu0 %v1129
    %1472 = vmatpush1.msra.mxu0 %v1128
    %1473 = vmatprep.subr.mxu0 %v1133
    %1474 = vmatpush1.msra.mxu0 %v1132
    %1475 = vmatprep.subr.mxu0 %v1137
    %1476 = vmatpush1.msra.mxu0 %v1136
    %1477 = vmatprep.subr.mxu0 %v1141
    %1478 = vmatpush1.msra.mxu0 %v1140
    %1479 = vmatprep.subr.mxu0 %v1145
    %1480 = vmatpush1.msra.mxu0 %v1144
    %1481 = vmatprep.subr.mxu0 %v1149
    %1482 = vmatpush1.msra.mxu0 %v1148
    %1483 = vmatprep.subr.mxu0 %v1153
    %1484 = vmatpush1.msra.mxu0 %v1152
    %1485 = vmatprep.subr.mxu0 %v1157
    %1486 = vmatpush1.msra.mxu0 %v1156
    %1487 = vmatprep.subr.mxu0 %v1161
    %1488 = vmatpush1.msra.mxu0 %v1160
    %1489 = vmatprep.subr.mxu0 %v1165
    %1490 = vmatpush1.msra.mxu0 %v1164
    %1491 = vmatprep.subr.mxu0 %v1169
    %1492 = vmatpush1.msra.mxu0 %v1168
    %1493 = vmatprep.subr.mxu0 %v1173
    %1494 = vmatpush1.msra.mxu0 %v1172
    %1495 = vmatprep.subr.mxu0 %v1177
    %1496 = vmatpush1.msra.mxu0 %v1176
    %1497 = vmatprep.subr.mxu0 %v1181
    %1498 = vmatpush1.msra.mxu0 %v1180
    %1499 = vmatprep.subr.mxu0 %v1185
    %1500 = vmatpush1.msra.mxu0 %v1184
    %1501 = vmatprep.subr.mxu0 %v1189
    %1502 = vmatpush1.msra.mxu0 %v1188
    %1503 = vmatprep.subr.mxu0 %v1193
    %1504 = vmatpush1.msra.mxu0 %v1192
    %1505 = vmatprep.subr.mxu0 %v1197
    %1506 = vmatpush1.msra.mxu0 %v1196
    %1507 = vmatprep.subr.mxu0 %v1201
    %1508 = vmatpush1.msra.mxu0 %v1200
    %1509 = vmatprep.subr.mxu0 %v1205
    %1510 = vmatpush1.msra.mxu0 %v1204
    %1511 = vmatprep.subr.mxu0 %v1209
    %1512 = vmatpush1.msra.mxu0 %v1208
    %1513 = vmatprep.subr.mxu0 %v1213
    %1514 = vmatpush1.msra.mxu0 %v1212
    %1515 = vmatprep.subr.mxu0 %v1217
    %1516 = vmatpush1.msra.mxu0 %v1216
    %1517 = vmatprep.mubr.f32.mxu0 %v961
    %1518 = vmatmul.mubr.f32.gmra.mrb[0].mxu0 %v960
    %v1519 = vpop.f32.mrb[0].mxu0
    %v1520 = vadd.f32 %v1449, %v1519
    %v1521 = vpop.f32.mrb[0].mxu0
    %v1522 = vadd.f32 %v1451, %v1521
    %1523 = vdwg.mxu0
    %v1524 = vmax.f32 %v1378, 0.0
    %v1525 = vmax.f32 %v1380, 0.0
    %v1526 = vmax.f32 %v1520, 0.0
    %v1527 = vmax.f32 %v1522, 0.0
    %v1528 = vld [vmem:[#allocation14] sm:$0xff]
    %v1529 = vld [vmem:[#allocation14 + $0x8] sm:$0xff]
    %v1530 = vld [vmem:[#allocation14 + $0x10] sm:$0xff]
    %v1531 = vld [vmem:[#allocation14 + $0x18] sm:$0xff]
    %v1532 = vld [vmem:[#allocation14 + $0x20] sm:$0xff]
    %v1533 = vld [vmem:[#allocation14 + $0x28] sm:$0xff]
    %v1534 = vld [vmem:[#allocation14 + $0x30] sm:$0xff]
    %v1535 = vld [vmem:[#allocation14 + $0x38] sm:$0xff]
    %v1536 = vld [vmem:[#allocation14 + $0x40] sm:$0xff]
    %v1537 = vld [vmem:[#allocation14 + $0x48] sm:$0xff]
    %v1538 = vld [vmem:[#allocation14 + $0x50] sm:$0xff]
    %v1539 = vld [vmem:[#allocation14 + $0x58] sm:$0xff]
    %v1540 = vld [vmem:[#allocation14 + $0x60] sm:$0xff]
    %v1541 = vld [vmem:[#allocation14 + $0x68] sm:$0xff]
    %v1542 = vld [vmem:[#allocation14 + $0x70] sm:$0xff]
    %v1543 = vld [vmem:[#allocation14 + $0x78] sm:$0xff]
    %v1544 = vld [vmem:[#allocation14 + $0x80] sm:$0xff]
    %v1545 = vld [vmem:[#allocation14 + $0x88] sm:$0xff]
    %v1546 = vld [vmem:[#allocation14 + $0x90] sm:$0xff]
    %v1547 = vld [vmem:[#allocation14 + $0x98] sm:$0xff]
    %v1548 = vld [vmem:[#allocation14 + $0xa0] sm:$0xff]
    %v1549 = vld [vmem:[#allocation14 + $0xa8] sm:$0xff]
    %v1550 = vld [vmem:[#allocation14 + $0xb0] sm:$0xff]
    %v1551 = vld [vmem:[#allocation14 + $0xb8] sm:$0xff]
    %v1552 = vld [vmem:[#allocation14 + $0xc0] sm:$0xff]
    %v1553 = vld [vmem:[#allocation14 + $0xc8] sm:$0xff]
    %v1554 = vld [vmem:[#allocation14 + $0xd0] sm:$0xff]
    %v1555 = vld [vmem:[#allocation14 + $0xd8] sm:$0xff]
    %v1556 = vld [vmem:[#allocation14 + $0xe0] sm:$0xff]
    %v1557 = vld [vmem:[#allocation14 + $0xe8] sm:$0xff]
    %v1558 = vld [vmem:[#allocation14 + $0xf0] sm:$0xff]
    %v1559 = vld [vmem:[#allocation14 + $0xf8] sm:$0xff]
    %v1560 = vld [vmem:[#allocation14 + $0x100] sm:$0xff]
    %v1561 = vld [vmem:[#allocation14 + $0x108] sm:$0xff]
    %v1562 = vld [vmem:[#allocation14 + $0x110] sm:$0xff]
    %v1563 = vld [vmem:[#allocation14 + $0x118] sm:$0xff]
    %v1564 = vld [vmem:[#allocation14 + $0x120] sm:$0xff]
    %v1565 = vld [vmem:[#allocation14 + $0x128] sm:$0xff]
    %v1566 = vld [vmem:[#allocation14 + $0x130] sm:$0xff]
    %v1567 = vld [vmem:[#allocation14 + $0x138] sm:$0xff]
    %v1568 = vld [vmem:[#allocation14 + $0x140] sm:$0xff]
    %v1569 = vld [vmem:[#allocation14 + $0x148] sm:$0xff]
    %v1570 = vld [vmem:[#allocation14 + $0x150] sm:$0xff]
    %v1571 = vld [vmem:[#allocation14 + $0x158] sm:$0xff]
    %v1572 = vld [vmem:[#allocation14 + $0x160] sm:$0xff]
    %v1573 = vld [vmem:[#allocation14 + $0x168] sm:$0xff]
    %v1574 = vld [vmem:[#allocation14 + $0x170] sm:$0xff]
    %v1575 = vld [vmem:[#allocation14 + $0x178] sm:$0xff]
    %v1576 = vld [vmem:[#allocation14 + $0x180] sm:$0xff]
    %v1577 = vld [vmem:[#allocation14 + $0x188] sm:$0xff]
    %v1578 = vld [vmem:[#allocation14 + $0x190] sm:$0xff]
    %v1579 = vld [vmem:[#allocation14 + $0x198] sm:$0xff]
    %v1580 = vld [vmem:[#allocation14 + $0x1a0] sm:$0xff]
    %v1581 = vld [vmem:[#allocation14 + $0x1a8] sm:$0xff]
    %v1582 = vld [vmem:[#allocation14 + $0x1b0] sm:$0xff]
    %v1583 = vld [vmem:[#allocation14 + $0x1b8] sm:$0xff]
    %v1584 = vld [vmem:[#allocation14 + $0x1c0] sm:$0xff]
    %v1585 = vld [vmem:[#allocation14 + $0x1c8] sm:$0xff]
    %v1586 = vld [vmem:[#allocation14 + $0x1d0] sm:$0xff]
    %v1587 = vld [vmem:[#allocation14 + $0x1d8] sm:$0xff]
    %v1588 = vld [vmem:[#allocation14 + $0x1e0] sm:$0xff]
    %v1589 = vld [vmem:[#allocation14 + $0x1e8] sm:$0xff]
    %v1590 = vld [vmem:[#allocation14 + $0x1f0] sm:$0xff]
    %v1591 = vld [vmem:[#allocation14 + $0x1f8] sm:$0xff]
    %v1592 = vld [vmem:[#allocation14 + $0x200] sm:$0xff]
    %v1593 = vld [vmem:[#allocation14 + $0x208] sm:$0xff]
    %v1594 = vld [vmem:[#allocation14 + $0x210] sm:$0xff]
    %v1595 = vld [vmem:[#allocation14 + $0x218] sm:$0xff]
    %v1596 = vld [vmem:[#allocation14 + $0x220] sm:$0xff]
    %v1597 = vld [vmem:[#allocation14 + $0x228] sm:$0xff]
    %v1598 = vld [vmem:[#allocation14 + $0x230] sm:$0xff]
    %v1599 = vld [vmem:[#allocation14 + $0x238] sm:$0xff]
    %v1600 = vld [vmem:[#allocation14 + $0x240] sm:$0xff]
    %v1601 = vld [vmem:[#allocation14 + $0x248] sm:$0xff]
    %v1602 = vld [vmem:[#allocation14 + $0x250] sm:$0xff]
    %v1603 = vld [vmem:[#allocation14 + $0x258] sm:$0xff]
    %v1604 = vld [vmem:[#allocation14 + $0x260] sm:$0xff]
    %v1605 = vld [vmem:[#allocation14 + $0x268] sm:$0xff]
    %v1606 = vld [vmem:[#allocation14 + $0x270] sm:$0xff]
    %v1607 = vld [vmem:[#allocation14 + $0x278] sm:$0xff]
    %v1608 = vld [vmem:[#allocation14 + $0x280] sm:$0xff]
    %v1609 = vld [vmem:[#allocation14 + $0x288] sm:$0xff]
    %v1610 = vld [vmem:[#allocation14 + $0x290] sm:$0xff]
    %v1611 = vld [vmem:[#allocation14 + $0x298] sm:$0xff]
    %v1612 = vld [vmem:[#allocation14 + $0x2a0] sm:$0xff]
    %v1613 = vld [vmem:[#allocation14 + $0x2a8] sm:$0xff]
    %v1614 = vld [vmem:[#allocation14 + $0x2b0] sm:$0xff]
    %v1615 = vld [vmem:[#allocation14 + $0x2b8] sm:$0xff]
    %v1616 = vld [vmem:[#allocation14 + $0x2c0] sm:$0xff]
    %v1617 = vld [vmem:[#allocation14 + $0x2c8] sm:$0xff]
    %v1618 = vld [vmem:[#allocation14 + $0x2d0] sm:$0xff]
    %v1619 = vld [vmem:[#allocation14 + $0x2d8] sm:$0xff]
    %v1620 = vld [vmem:[#allocation14 + $0x2e0] sm:$0xff]
    %v1621 = vld [vmem:[#allocation14 + $0x2e8] sm:$0xff]
    %v1622 = vld [vmem:[#allocation14 + $0x2f0] sm:$0xff]
    %v1623 = vld [vmem:[#allocation14 + $0x2f8] sm:$0xff]
    %v1624 = vld [vmem:[#allocation14 + $0x300] sm:$0xff]
    %v1625 = vld [vmem:[#allocation14 + $0x308] sm:$0xff]
    %v1626 = vld [vmem:[#allocation14 + $0x310] sm:$0xff]
    %v1627 = vld [vmem:[#allocation14 + $0x318] sm:$0xff]
    %v1628 = vld [vmem:[#allocation14 + $0x320] sm:$0xff]
    %v1629 = vld [vmem:[#allocation14 + $0x328] sm:$0xff]
    %v1630 = vld [vmem:[#allocation14 + $0x330] sm:$0xff]
    %v1631 = vld [vmem:[#allocation14 + $0x338] sm:$0xff]
    %v1632 = vld [vmem:[#allocation14 + $0x340] sm:$0xff]
    %v1633 = vld [vmem:[#allocation14 + $0x348] sm:$0xff]
    %v1634 = vld [vmem:[#allocation14 + $0x350] sm:$0xff]
    %v1635 = vld [vmem:[#allocation14 + $0x358] sm:$0xff]
    %v1636 = vld [vmem:[#allocation14 + $0x360] sm:$0xff]
    %v1637 = vld [vmem:[#allocation14 + $0x368] sm:$0xff]
    %v1638 = vld [vmem:[#allocation14 + $0x370] sm:$0xff]
    %v1639 = vld [vmem:[#allocation14 + $0x378] sm:$0xff]
    %v1640 = vld [vmem:[#allocation14 + $0x380] sm:$0xff]
    %v1641 = vld [vmem:[#allocation14 + $0x388] sm:$0xff]
    %v1642 = vld [vmem:[#allocation14 + $0x390] sm:$0xff]
    %v1643 = vld [vmem:[#allocation14 + $0x398] sm:$0xff]
    %v1644 = vld [vmem:[#allocation14 + $0x3a0] sm:$0xff]
    %v1645 = vld [vmem:[#allocation14 + $0x3a8] sm:$0xff]
    %v1646 = vld [vmem:[#allocation14 + $0x3b0] sm:$0xff]
    %v1647 = vld [vmem:[#allocation14 + $0x3b8] sm:$0xff]
    %v1648 = vld [vmem:[#allocation14 + $0x3c0] sm:$0xff]
    %v1649 = vld [vmem:[#allocation14 + $0x3c8] sm:$0xff]
    %v1650 = vld [vmem:[#allocation14 + $0x3d0] sm:$0xff]
    %v1651 = vld [vmem:[#allocation14 + $0x3d8] sm:$0xff]
    %v1652 = vld [vmem:[#allocation14 + $0x3e0] sm:$0xff]
    %v1653 = vld [vmem:[#allocation14 + $0x3e8] sm:$0xff]
    %v1654 = vld [vmem:[#allocation14 + $0x3f0] sm:$0xff]
    %v1655 = vld [vmem:[#allocation14 + $0x3f8] sm:$0xff]
    %v1656 = vld [vmem:[#allocation14 + $0x400] sm:$0xff]
    %v1657 = vld [vmem:[#allocation14 + $0x408] sm:$0xff]
    %v1658 = vld [vmem:[#allocation14 + $0x410] sm:$0xff]
    %v1659 = vld [vmem:[#allocation14 + $0x418] sm:$0xff]
    %v1660 = vld [vmem:[#allocation14 + $0x420] sm:$0xff]
    %v1661 = vld [vmem:[#allocation14 + $0x428] sm:$0xff]
    %v1662 = vld [vmem:[#allocation14 + $0x430] sm:$0xff]
    %v1663 = vld [vmem:[#allocation14 + $0x438] sm:$0xff]
    %v1664 = vld [vmem:[#allocation14 + $0x440] sm:$0xff]
    %v1665 = vld [vmem:[#allocation14 + $0x448] sm:$0xff]
    %v1666 = vld [vmem:[#allocation14 + $0x450] sm:$0xff]
    %v1667 = vld [vmem:[#allocation14 + $0x458] sm:$0xff]
    %v1668 = vld [vmem:[#allocation14 + $0x460] sm:$0xff]
    %v1669 = vld [vmem:[#allocation14 + $0x468] sm:$0xff]
    %v1670 = vld [vmem:[#allocation14 + $0x470] sm:$0xff]
    %v1671 = vld [vmem:[#allocation14 + $0x478] sm:$0xff]
    %v1672 = vld [vmem:[#allocation14 + $0x480] sm:$0xff]
    %v1673 = vld [vmem:[#allocation14 + $0x488] sm:$0xff]
    %v1674 = vld [vmem:[#allocation14 + $0x490] sm:$0xff]
    %v1675 = vld [vmem:[#allocation14 + $0x498] sm:$0xff]
    %v1676 = vld [vmem:[#allocation14 + $0x4a0] sm:$0xff]
    %v1677 = vld [vmem:[#allocation14 + $0x4a8] sm:$0xff]
    %v1678 = vld [vmem:[#allocation14 + $0x4b0] sm:$0xff]
    %v1679 = vld [vmem:[#allocation14 + $0x4b8] sm:$0xff]
    %v1680 = vld [vmem:[#allocation14 + $0x4c0] sm:$0xff]
    %v1681 = vld [vmem:[#allocation14 + $0x4c8] sm:$0xff]
    %v1682 = vld [vmem:[#allocation14 + $0x4d0] sm:$0xff]
    %v1683 = vld [vmem:[#allocation14 + $0x4d8] sm:$0xff]
    %v1684 = vld [vmem:[#allocation14 + $0x4e0] sm:$0xff]
    %v1685 = vld [vmem:[#allocation14 + $0x4e8] sm:$0xff]
    %v1686 = vld [vmem:[#allocation14 + $0x4f0] sm:$0xff]
    %v1687 = vld [vmem:[#allocation14 + $0x4f8] sm:$0xff]
    %v1688 = vld [vmem:[#allocation14 + $0x500] sm:$0xff]
    %v1689 = vld [vmem:[#allocation14 + $0x508] sm:$0xff]
    %v1690 = vld [vmem:[#allocation14 + $0x510] sm:$0xff]
    %v1691 = vld [vmem:[#allocation14 + $0x518] sm:$0xff]
    %v1692 = vld [vmem:[#allocation14 + $0x520] sm:$0xff]
    %v1693 = vld [vmem:[#allocation14 + $0x528] sm:$0xff]
    %v1694 = vld [vmem:[#allocation14 + $0x530] sm:$0xff]
    %v1695 = vld [vmem:[#allocation14 + $0x538] sm:$0xff]
    %v1696 = vld [vmem:[#allocation14 + $0x540] sm:$0xff]
    %v1697 = vld [vmem:[#allocation14 + $0x548] sm:$0xff]
    %v1698 = vld [vmem:[#allocation14 + $0x550] sm:$0xff]
    %v1699 = vld [vmem:[#allocation14 + $0x558] sm:$0xff]
    %v1700 = vld [vmem:[#allocation14 + $0x560] sm:$0xff]
    %v1701 = vld [vmem:[#allocation14 + $0x568] sm:$0xff]
    %v1702 = vld [vmem:[#allocation14 + $0x570] sm:$0xff]
    %v1703 = vld [vmem:[#allocation14 + $0x578] sm:$0xff]
    %v1704 = vld [vmem:[#allocation14 + $0x580] sm:$0xff]
    %v1705 = vld [vmem:[#allocation14 + $0x588] sm:$0xff]
    %v1706 = vld [vmem:[#allocation14 + $0x590] sm:$0xff]
    %v1707 = vld [vmem:[#allocation14 + $0x598] sm:$0xff]
    %v1708 = vld [vmem:[#allocation14 + $0x5a0] sm:$0xff]
    %v1709 = vld [vmem:[#allocation14 + $0x5a8] sm:$0xff]
    %v1710 = vld [vmem:[#allocation14 + $0x5b0] sm:$0xff]
    %v1711 = vld [vmem:[#allocation14 + $0x5b8] sm:$0xff]
    %v1712 = vld [vmem:[#allocation14 + $0x5c0] sm:$0xff]
    %v1713 = vld [vmem:[#allocation14 + $0x5c8] sm:$0xff]
    %v1714 = vld [vmem:[#allocation14 + $0x5d0] sm:$0xff]
    %v1715 = vld [vmem:[#allocation14 + $0x5d8] sm:$0xff]
    %v1716 = vld [vmem:[#allocation14 + $0x5e0] sm:$0xff]
    %v1717 = vld [vmem:[#allocation14 + $0x5e8] sm:$0xff]
    %v1718 = vld [vmem:[#allocation14 + $0x5f0] sm:$0xff]
    %v1719 = vld [vmem:[#allocation14 + $0x5f8] sm:$0xff]
    %v1720 = vld [vmem:[#allocation14 + $0x600] sm:$0xff]
    %v1721 = vld [vmem:[#allocation14 + $0x608] sm:$0xff]
    %v1722 = vld [vmem:[#allocation14 + $0x610] sm:$0xff]
    %v1723 = vld [vmem:[#allocation14 + $0x618] sm:$0xff]
    %v1724 = vld [vmem:[#allocation14 + $0x620] sm:$0xff]
    %v1725 = vld [vmem:[#allocation14 + $0x628] sm:$0xff]
    %v1726 = vld [vmem:[#allocation14 + $0x630] sm:$0xff]
    %v1727 = vld [vmem:[#allocation14 + $0x638] sm:$0xff]
    %v1728 = vld [vmem:[#allocation14 + $0x640] sm:$0xff]
    %v1729 = vld [vmem:[#allocation14 + $0x648] sm:$0xff]
    %v1730 = vld [vmem:[#allocation14 + $0x650] sm:$0xff]
    %v1731 = vld [vmem:[#allocation14 + $0x658] sm:$0xff]
    %v1732 = vld [vmem:[#allocation14 + $0x660] sm:$0xff]
    %v1733 = vld [vmem:[#allocation14 + $0x668] sm:$0xff]
    %v1734 = vld [vmem:[#allocation14 + $0x670] sm:$0xff]
    %v1735 = vld [vmem:[#allocation14 + $0x678] sm:$0xff]
    %v1736 = vld [vmem:[#allocation14 + $0x680] sm:$0xff]
    %v1737 = vld [vmem:[#allocation14 + $0x688] sm:$0xff]
    %v1738 = vld [vmem:[#allocation14 + $0x690] sm:$0xff]
    %v1739 = vld [vmem:[#allocation14 + $0x698] sm:$0xff]
    %v1740 = vld [vmem:[#allocation14 + $0x6a0] sm:$0xff]
    %v1741 = vld [vmem:[#allocation14 + $0x6a8] sm:$0xff]
    %v1742 = vld [vmem:[#allocation14 + $0x6b0] sm:$0xff]
    %v1743 = vld [vmem:[#allocation14 + $0x6b8] sm:$0xff]
    %v1744 = vld [vmem:[#allocation14 + $0x6c0] sm:$0xff]
    %v1745 = vld [vmem:[#allocation14 + $0x6c8] sm:$0xff]
    %v1746 = vld [vmem:[#allocation14 + $0x6d0] sm:$0xff]
    %v1747 = vld [vmem:[#allocation14 + $0x6d8] sm:$0xff]
    %v1748 = vld [vmem:[#allocation14 + $0x6e0] sm:$0xff]
    %v1749 = vld [vmem:[#allocation14 + $0x6e8] sm:$0xff]
    %v1750 = vld [vmem:[#allocation14 + $0x6f0] sm:$0xff]
    %v1751 = vld [vmem:[#allocation14 + $0x6f8] sm:$0xff]
    %v1752 = vld [vmem:[#allocation14 + $0x700] sm:$0xff]
    %v1753 = vld [vmem:[#allocation14 + $0x708] sm:$0xff]
    %v1754 = vld [vmem:[#allocation14 + $0x710] sm:$0xff]
    %v1755 = vld [vmem:[#allocation14 + $0x718] sm:$0xff]
    %v1756 = vld [vmem:[#allocation14 + $0x720] sm:$0xff]
    %v1757 = vld [vmem:[#allocation14 + $0x728] sm:$0xff]
    %v1758 = vld [vmem:[#allocation14 + $0x730] sm:$0xff]
    %v1759 = vld [vmem:[#allocation14 + $0x738] sm:$0xff]
    %v1760 = vld [vmem:[#allocation14 + $0x740] sm:$0xff]
    %v1761 = vld [vmem:[#allocation14 + $0x748] sm:$0xff]
    %v1762 = vld [vmem:[#allocation14 + $0x750] sm:$0xff]
    %v1763 = vld [vmem:[#allocation14 + $0x758] sm:$0xff]
    %v1764 = vld [vmem:[#allocation14 + $0x760] sm:$0xff]
    %v1765 = vld [vmem:[#allocation14 + $0x768] sm:$0xff]
    %v1766 = vld [vmem:[#allocation14 + $0x770] sm:$0xff]
    %v1767 = vld [vmem:[#allocation14 + $0x778] sm:$0xff]
    %v1768 = vld [vmem:[#allocation14 + $0x780] sm:$0xff]
    %v1769 = vld [vmem:[#allocation14 + $0x788] sm:$0xff]
    %v1770 = vld [vmem:[#allocation14 + $0x790] sm:$0xff]
    %v1771 = vld [vmem:[#allocation14 + $0x798] sm:$0xff]
    %v1772 = vld [vmem:[#allocation14 + $0x7a0] sm:$0xff]
    %v1773 = vld [vmem:[#allocation14 + $0x7a8] sm:$0xff]
    %v1774 = vld [vmem:[#allocation14 + $0x7b0] sm:$0xff]
    %v1775 = vld [vmem:[#allocation14 + $0x7b8] sm:$0xff]
    %v1776 = vld [vmem:[#allocation14 + $0x7c0] sm:$0xff]
    %v1777 = vld [vmem:[#allocation14 + $0x7c8] sm:$0xff]
    %v1778 = vld [vmem:[#allocation14 + $0x7d0] sm:$0xff]
    %v1779 = vld [vmem:[#allocation14 + $0x7d8] sm:$0xff]
    %v1780 = vld [vmem:[#allocation14 + $0x7e0] sm:$0xff]
    %v1781 = vld [vmem:[#allocation14 + $0x7e8] sm:$0xff]
    %v1782 = vld [vmem:[#allocation14 + $0x7f0] sm:$0xff]
    %v1783 = vld [vmem:[#allocation14 + $0x7f8] sm:$0xff]
    %v1784 = vld [vmem:[#allocation16] sm:$0xf]
    %v1786 = vlaneseq
    %v1787 = vshrl.u32 %v1786, 7
    %v1788 = vsub.s32 0, %v1787
    %v1789 = vrot.slane %v1784, %v1788
    %v1790 = vlaneseq
    %v1791 = vshrl.u32 %v1790, 7
    %v1792 = vsub.s32 1, %v1791
    %v1793 = vrot.slane %v1784, %v1792
    %v1794 = vlaneseq
    %v1795 = vshrl.u32 %v1794, 7
    %v1796 = vsub.s32 2, %v1795
    %v1797 = vrot.slane %v1784, %v1796
    %v1798 = vlaneseq
    %v1799 = vshrl.u32 %v1798, 7
    %v1800 = vsub.s32 3, %v1799
    %v1801 = vrot.slane %v1784, %v1800
    %1806 = vmatprep.subr.mxu0 %v1529
    %1807 = vmatpush1.msra.mxu0 %v1528
    %1808 = vmatprep.subr.mxu0 %v1533
    %1809 = vmatpush1.msra.mxu0 %v1532
    %1810 = vmatprep.subr.mxu0 %v1537
    %1811 = vmatpush1.msra.mxu0 %v1536
    %1812 = vmatprep.subr.mxu0 %v1541
    %1813 = vmatpush1.msra.mxu0 %v1540
    %1814 = vmatprep.subr.mxu0 %v1545
    %1815 = vmatpush1.msra.mxu0 %v1544
    %1816 = vmatprep.subr.mxu0 %v1549
    %1817 = vmatpush1.msra.mxu0 %v1548
    %1818 = vmatprep.subr.mxu0 %v1553
    %1819 = vmatpush1.msra.mxu0 %v1552
    %1820 = vmatprep.subr.mxu0 %v1557
    %1821 = vmatpush1.msra.mxu0 %v1556
    %1822 = vmatprep.subr.mxu0 %v1561
    %1823 = vmatpush1.msra.mxu0 %v1560
    %1824 = vmatprep.subr.mxu0 %v1565
    %1825 = vmatpush1.msra.mxu0 %v1564
    %1826 = vmatprep.subr.mxu0 %v1569
    %1827 = vmatpush1.msra.mxu0 %v1568
    %1828 = vmatprep.subr.mxu0 %v1573
    %1829 = vmatpush1.msra.mxu0 %v1572
    %1830 = vmatprep.subr.mxu0 %v1577
    %1831 = vmatpush1.msra.mxu0 %v1576
    %1832 = vmatprep.subr.mxu0 %v1581
    %1833 = vmatpush1.msra.mxu0 %v1580
    %1834 = vmatprep.subr.mxu0 %v1585
    %1835 = vmatpush1.msra.mxu0 %v1584
    %1836 = vmatprep.subr.mxu0 %v1589
    %1837 = vmatpush1.msra.mxu0 %v1588
    %1838 = vmatprep.subr.mxu0 %v1593
    %1839 = vmatpush1.msra.mxu0 %v1592
    %1840 = vmatprep.subr.mxu0 %v1597
    %1841 = vmatpush1.msra.mxu0 %v1596
    %1842 = vmatprep.subr.mxu0 %v1601
    %1843 = vmatpush1.msra.mxu0 %v1600
    %1844 = vmatprep.subr.mxu0 %v1605
    %1845 = vmatpush1.msra.mxu0 %v1604
    %1846 = vmatprep.subr.mxu0 %v1609
    %1847 = vmatpush1.msra.mxu0 %v1608
    %1848 = vmatprep.subr.mxu0 %v1613
    %1849 = vmatpush1.msra.mxu0 %v1612
    %1850 = vmatprep.subr.mxu0 %v1617
    %1851 = vmatpush1.msra.mxu0 %v1616
    %1852 = vmatprep.subr.mxu0 %v1621
    %1853 = vmatpush1.msra.mxu0 %v1620
    %1854 = vmatprep.subr.mxu0 %v1625
    %1855 = vmatpush1.msra.mxu0 %v1624
    %1856 = vmatprep.subr.mxu0 %v1629
    %1857 = vmatpush1.msra.mxu0 %v1628
    %1858 = vmatprep.subr.mxu0 %v1633
    %1859 = vmatpush1.msra.mxu0 %v1632
    %1860 = vmatprep.subr.mxu0 %v1637
    %1861 = vmatpush1.msra.mxu0 %v1636
    %1862 = vmatprep.subr.mxu0 %v1641
    %1863 = vmatpush1.msra.mxu0 %v1640
    %1864 = vmatprep.subr.mxu0 %v1645
    %1865 = vmatpush1.msra.mxu0 %v1644
    %1866 = vmatprep.subr.mxu0 %v1649
    %1867 = vmatpush1.msra.mxu0 %v1648
    %1868 = vmatprep.subr.mxu0 %v1653
    %1869 = vmatpush1.msra.mxu0 %v1652
    %1870 = vmatprep.mubr.f32.mxu0 %v1525
    %1871 = vmatmul.mubr.f32.gmra.mrb[0].mxu0 %v1524
    %v1872 = vpop.f32.mrb[0].mxu0
    %v1873 = vadd.f32 %v1789, %v1872
    %v1874 = vpop.f32.mrb[0].mxu0
    %v1875 = vadd.f32 %v1793, %v1874
    %1876 = vdwg.mxu0
    %1877 = vmatprep.subr.mxu0 %v1657
    %1878 = vmatpush1.msra.mxu0 %v1656
    %1879 = vmatprep.subr.mxu0 %v1661
    %1880 = vmatpush1.msra.mxu0 %v1660
    %1881 = vmatprep.subr.mxu0 %v1665
    %1882 = vmatpush1.msra.mxu0 %v1664
    %1883 = vmatprep.subr.mxu0 %v1669
    %1884 = vmatpush1.msra.mxu0 %v1668
    %1885 = vmatprep.subr.mxu0 %v1673
    %1886 = vmatpush1.msra.mxu0 %v1672
    %1887 = vmatprep.subr.mxu0 %v1677
    %1888 = vmatpush1.msra.mxu0 %v1676
    %1889 = vmatprep.subr.mxu0 %v1681
    %1890 = vmatpush1.msra.mxu0 %v1680
    %1891 = vmatprep.subr.mxu0 %v1685
    %1892 = vmatpush1.msra.mxu0 %v1684
    %1893 = vmatprep.subr.mxu0 %v1689
    %1894 = vmatpush1.msra.mxu0 %v1688
    %1895 = vmatprep.subr.mxu0 %v1693
    %1896 = vmatpush1.msra.mxu0 %v1692
    %1897 = vmatprep.subr.mxu0 %v1697
    %1898 = vmatpush1.msra.mxu0 %v1696
    %1899 = vmatprep.subr.mxu0 %v1701
    %1900 = vmatpush1.msra.mxu0 %v1700
    %1901 = vmatprep.subr.mxu0 %v1705
    %1902 = vmatpush1.msra.mxu0 %v1704
    %1903 = vmatprep.subr.mxu0 %v1709
    %1904 = vmatpush1.msra.mxu0 %v1708
    %1905 = vmatprep.subr.mxu0 %v1713
    %1906 = vmatpush1.msra.mxu0 %v1712
    %1907 = vmatprep.subr.mxu0 %v1717
    %1908 = vmatpush1.msra.mxu0 %v1716
    %1909 = vmatprep.subr.mxu0 %v1721
    %1910 = vmatpush1.msra.mxu0 %v1720
    %1911 = vmatprep.subr.mxu0 %v1725
    %1912 = vmatpush1.msra.mxu0 %v1724
    %1913 = vmatprep.subr.mxu0 %v1729
    %1914 = vmatpush1.msra.mxu0 %v1728
    %1915 = vmatprep.subr.mxu0 %v1733
    %1916 = vmatpush1.msra.mxu0 %v1732
    %1917 = vmatprep.subr.mxu0 %v1737
    %1918 = vmatpush1.msra.mxu0 %v1736
    %1919 = vmatprep.subr.mxu0 %v1741
    %1920 = vmatpush1.msra.mxu0 %v1740
    %1921 = vmatprep.subr.mxu0 %v1745
    %1922 = vmatpush1.msra.mxu0 %v1744
    %1923 = vmatprep.subr.mxu0 %v1749
    %1924 = vmatpush1.msra.mxu0 %v1748
    %1925 = vmatprep.subr.mxu0 %v1753
    %1926 = vmatpush1.msra.mxu0 %v1752
    %1927 = vmatprep.subr.mxu0 %v1757
    %1928 = vmatpush1.msra.mxu0 %v1756
    %1929 = vmatprep.subr.mxu0 %v1761
    %1930 = vmatpush1.msra.mxu0 %v1760
    %1931 = vmatprep.subr.mxu0 %v1765
    %1932 = vmatpush1.msra.mxu0 %v1764
    %1933 = vmatprep.subr.mxu0 %v1769
    %1934 = vmatpush1.msra.mxu0 %v1768
    %1935 = vmatprep.subr.mxu0 %v1773
    %1936 = vmatpush1.msra.mxu0 %v1772
    %1937 = vmatprep.subr.mxu0 %v1777
    %1938 = vmatpush1.msra.mxu0 %v1776
    %1939 = vmatprep.subr.mxu0 %v1781
    %1940 = vmatpush1.msra.mxu0 %v1780
    %1941 = vmatprep.mubr.f32.mxu0 %v1527
    %1942 = vmatmul.mubr.f32.gmra.mrb[0].mxu0 %v1526
    %v1943 = vpop.f32.mrb[0].mxu0
    %v1944 = vadd.f32 %v1873, %v1943
    %v1945 = vpop.f32.mrb[0].mxu0
    %v1946 = vadd.f32 %v1875, %v1945
    %1947 = vdwg.mxu0
    %1948 = vmatprep.subr.mxu0 %v1531
    %1949 = vmatpush1.msra.mxu0 %v1530
    %1950 = vmatprep.subr.mxu0 %v1535
    %1951 = vmatpush1.msra.mxu0 %v1534
    %1952 = vmatprep.subr.mxu0 %v1539
    %1953 = vmatpush1.msra.mxu0 %v1538
    %1954 = vmatprep.subr.mxu0 %v1543
    %1955 = vmatpush1.msra.mxu0 %v1542
    %1956 = vmatprep.subr.mxu0 %v1547
    %1957 = vmatpush1.msra.mxu0 %v1546
    %1958 = vmatprep.subr.mxu0 %v1551
    %1959 = vmatpush1.msra.mxu0 %v1550
    %1960 = vmatprep.subr.mxu0 %v1555
    %1961 = vmatpush1.msra.mxu0 %v1554
    %1962 = vmatprep.subr.mxu0 %v1559
    %1963 = vmatpush1.msra.mxu0 %v1558
    %1964 = vmatprep.subr.mxu0 %v1563
    %1965 = vmatpush1.msra.mxu0 %v1562
    %1966 = vmatprep.subr.mxu0 %v1567
    %1967 = vmatpush1.msra.mxu0 %v1566
    %1968 = vmatprep.subr.mxu0 %v1571
    %1969 = vmatpush1.msra.mxu0 %v1570
    %1970 = vmatprep.subr.mxu0 %v1575
    %1971 = vmatpush1.msra.mxu0 %v1574
    %1972 = vmatprep.subr.mxu0 %v1579
    %1973 = vmatpush1.msra.mxu0 %v1578
    %1974 = vmatprep.subr.mxu0 %v1583
    %1975 = vmatpush1.msra.mxu0 %v1582
    %1976 = vmatprep.subr.mxu0 %v1587
    %1977 = vmatpush1.msra.mxu0 %v1586
    %1978 = vmatprep.subr.mxu0 %v1591
    %1979 = vmatpush1.msra.mxu0 %v1590
    %1980 = vmatprep.subr.mxu0 %v1595
    %1981 = vmatpush1.msra.mxu0 %v1594
    %1982 = vmatprep.subr.mxu0 %v1599
    %1983 = vmatpush1.msra.mxu0 %v1598
    %1984 = vmatprep.subr.mxu0 %v1603
    %1985 = vmatpush1.msra.mxu0 %v1602
    %1986 = vmatprep.subr.mxu0 %v1607
    %1987 = vmatpush1.msra.mxu0 %v1606
    %1988 = vmatprep.subr.mxu0 %v1611
    %1989 = vmatpush1.msra.mxu0 %v1610
    %1990 = vmatprep.subr.mxu0 %v1615
    %1991 = vmatpush1.msra.mxu0 %v1614
    %1992 = vmatprep.subr.mxu0 %v1619
    %1993 = vmatpush1.msra.mxu0 %v1618
    %1994 = vmatprep.subr.mxu0 %v1623
    %1995 = vmatpush1.msra.mxu0 %v1622
    %1996 = vmatprep.subr.mxu0 %v1627
    %1997 = vmatpush1.msra.mxu0 %v1626
    %1998 = vmatprep.subr.mxu0 %v1631
    %1999 = vmatpush1.msra.mxu0 %v1630
    %2000 = vmatprep.subr.mxu0 %v1635
    %2001 = vmatpush1.msra.mxu0 %v1634
    %2002 = vmatprep.subr.mxu0 %v1639
    %2003 = vmatpush1.msra.mxu0 %v1638
    %2004 = vmatprep.subr.mxu0 %v1643
    %2005 = vmatpush1.msra.mxu0 %v1642
    %2006 = vmatprep.subr.mxu0 %v1647
    %2007 = vmatpush1.msra.mxu0 %v1646
    %2008 = vmatprep.subr.mxu0 %v1651
    %2009 = vmatpush1.msra.mxu0 %v1650
    %2010 = vmatprep.subr.mxu0 %v1655
    %2011 = vmatpush1.msra.mxu0 %v1654
    %2012 = vmatprep.mubr.f32.mxu0 %v1525
    %2013 = vmatmul.mubr.f32.gmra.mrb[0].mxu0 %v1524
    %v2014 = vpop.f32.mrb[0].mxu0
    %v2015 = vadd.f32 %v1797, %v2014
    %v2016 = vpop.f32.mrb[0].mxu0
    %v2017 = vadd.f32 %v1801, %v2016
    %2018 = vdwg.mxu0
    %2019 = vmatprep.subr.mxu0 %v1659
    %2020 = vmatpush1.msra.mxu0 %v1658
    %2021 = vmatprep.subr.mxu0 %v1663
    %2022 = vmatpush1.msra.mxu0 %v1662
    %2023 = vmatprep.subr.mxu0 %v1667
    %2024 = vmatpush1.msra.mxu0 %v1666
    %2025 = vmatprep.subr.mxu0 %v1671
    %2026 = vmatpush1.msra.mxu0 %v1670
    %2027 = vmatprep.subr.mxu0 %v1675
    %2028 = vmatpush1.msra.mxu0 %v1674
    %2029 = vmatprep.subr.mxu0 %v1679
    %2030 = vmatpush1.msra.mxu0 %v1678
    %2031 = vmatprep.subr.mxu0 %v1683
    %2032 = vmatpush1.msra.mxu0 %v1682
    %2033 = vmatprep.subr.mxu0 %v1687
    %2034 = vmatpush1.msra.mxu0 %v1686
    %2035 = vmatprep.subr.mxu0 %v1691
    %2036 = vmatpush1.msra.mxu0 %v1690
    %2037 = vmatprep.subr.mxu0 %v1695
    %2038 = vmatpush1.msra.mxu0 %v1694
    %2039 = vmatprep.subr.mxu0 %v1699
    %2040 = vmatpush1.msra.mxu0 %v1698
    %2041 = vmatprep.subr.mxu0 %v1703
    %2042 = vmatpush1.msra.mxu0 %v1702
    %2043 = vmatprep.subr.mxu0 %v1707
    %2044 = vmatpush1.msra.mxu0 %v1706
    %2045 = vmatprep.subr.mxu0 %v1711
    %2046 = vmatpush1.msra.mxu0 %v1710
    %2047 = vmatprep.subr.mxu0 %v1715
    %2048 = vmatpush1.msra.mxu0 %v1714
    %2049 = vmatprep.subr.mxu0 %v1719
    %2050 = vmatpush1.msra.mxu0 %v1718
    %2051 = vmatprep.subr.mxu0 %v1723
    %2052 = vmatpush1.msra.mxu0 %v1722
    %2053 = vmatprep.subr.mxu0 %v1727
    %2054 = vmatpush1.msra.mxu0 %v1726
    %2055 = vmatprep.subr.mxu0 %v1731
    %2056 = vmatpush1.msra.mxu0 %v1730
    %2057 = vmatprep.subr.mxu0 %v1735
    %2058 = vmatpush1.msra.mxu0 %v1734
    %2059 = vmatprep.subr.mxu0 %v1739
    %2060 = vmatpush1.msra.mxu0 %v1738
    %2061 = vmatprep.subr.mxu0 %v1743
    %2062 = vmatpush1.msra.mxu0 %v1742
    %2063 = vmatprep.subr.mxu0 %v1747
    %2064 = vmatpush1.msra.mxu0 %v1746
    %2065 = vmatprep.subr.mxu0 %v1751
    %2066 = vmatpush1.msra.mxu0 %v1750
    %2067 = vmatprep.subr.mxu0 %v1755
    %2068 = vmatpush1.msra.mxu0 %v1754
    %2069 = vmatprep.subr.mxu0 %v1759
    %2070 = vmatpush1.msra.mxu0 %v1758
    %2071 = vmatprep.subr.mxu0 %v1763
    %2072 = vmatpush1.msra.mxu0 %v1762
    %2073 = vmatprep.subr.mxu0 %v1767
    %2074 = vmatpush1.msra.mxu0 %v1766
    %2075 = vmatprep.subr.mxu0 %v1771
    %2076 = vmatpush1.msra.mxu0 %v1770
    %2077 = vmatprep.subr.mxu0 %v1775
    %2078 = vmatpush1.msra.mxu0 %v1774
    %2079 = vmatprep.subr.mxu0 %v1779
    %2080 = vmatpush1.msra.mxu0 %v1778
    %2081 = vmatprep.subr.mxu0 %v1783
    %2082 = vmatpush1.msra.mxu0 %v1782
    %2083 = vmatprep.mubr.f32.mxu0 %v1527
    %2084 = vmatmul.mubr.f32.gmra.mrb[0].mxu0 %v1526
    %v2085 = vpop.f32.mrb[0].mxu0
    %v2086 = vadd.f32 %v2015, %v2085
    %v2087 = vpop.f32.mrb[0].mxu0
    %v2088 = vadd.f32 %v2017, %v2087
    %2089 = vdwg.mxu0
    %v2090 = vmax.f32 %v1944, 0.0
    %v2091 = vmax.f32 %v1946, 0.0
    %v2092 = vmax.f32 %v2086, 0.0
    %v2093 = vmax.f32 %v2088, 0.0
    %v2094 = vld [vmem:[#allocation17] sm:$0xff]
    %v2095 = vld [vmem:[#allocation17 + $0x8] sm:$0xff]
    %v2096 = vld [vmem:[#allocation17 + $0x10] sm:$0xff]
    %v2097 = vld [vmem:[#allocation17 + $0x18] sm:$0xff]
    %v2098 = vld [vmem:[#allocation17 + $0x20] sm:$0xff]
    %v2099 = vld [vmem:[#allocation17 + $0x28] sm:$0xff]
    %v2100 = vld [vmem:[#allocation17 + $0x30] sm:$0xff]
    %v2101 = vld [vmem:[#allocation17 + $0x38] sm:$0xff]
    %v2102 = vld [vmem:[#allocation17 + $0x40] sm:$0xff]
    %v2103 = vld [vmem:[#allocation17 + $0x48] sm:$0xff]
    %v2104 = vld [vmem:[#allocation17 + $0x50] sm:$0xff]
    %v2105 = vld [vmem:[#allocation17 + $0x58] sm:$0xff]
    %v2106 = vld [vmem:[#allocation17 + $0x60] sm:$0xff]
    %v2107 = vld [vmem:[#allocation17 + $0x68] sm:$0xff]
    %v2108 = vld [vmem:[#allocation17 + $0x70] sm:$0xff]
    %v2109 = vld [vmem:[#allocation17 + $0x78] sm:$0xff]
    %v2110 = vld [vmem:[#allocation17 + $0x80] sm:$0xff]
    %v2111 = vld [vmem:[#allocation17 + $0x88] sm:$0xff]
    %v2112 = vld [vmem:[#allocation17 + $0x90] sm:$0xff]
    %v2113 = vld [vmem:[#allocation17 + $0x98] sm:$0xff]
    %v2114 = vld [vmem:[#allocation17 + $0xa0] sm:$0xff]
    %v2115 = vld [vmem:[#allocation17 + $0xa8] sm:$0xff]
    %v2116 = vld [vmem:[#allocation17 + $0xb0] sm:$0xff]
    %v2117 = vld [vmem:[#allocation17 + $0xb8] sm:$0xff]
    %v2118 = vld [vmem:[#allocation17 + $0xc0] sm:$0xff]
    %v2119 = vld [vmem:[#allocation17 + $0xc8] sm:$0xff]
    %v2120 = vld [vmem:[#allocation17 + $0xd0] sm:$0xff]
    %v2121 = vld [vmem:[#allocation17 + $0xd8] sm:$0xff]
    %v2122 = vld [vmem:[#allocation17 + $0xe0] sm:$0xff]
    %v2123 = vld [vmem:[#allocation17 + $0xe8] sm:$0xff]
    %v2124 = vld [vmem:[#allocation17 + $0xf0] sm:$0xff]
    %v2125 = vld [vmem:[#allocation17 + $0xf8] sm:$0xff]
    %v2126 = vld [vmem:[#allocation17 + $0x100] sm:$0xff]
    %v2127 = vld [vmem:[#allocation17 + $0x108] sm:$0xff]
    %v2128 = vld [vmem:[#allocation17 + $0x110] sm:$0xff]
    %v2129 = vld [vmem:[#allocation17 + $0x118] sm:$0xff]
    %v2130 = vld [vmem:[#allocation17 + $0x120] sm:$0xff]
    %v2131 = vld [vmem:[#allocation17 + $0x128] sm:$0xff]
    %v2132 = vld [vmem:[#allocation17 + $0x130] sm:$0xff]
    %v2133 = vld [vmem:[#allocation17 + $0x138] sm:$0xff]
    %v2134 = vld [vmem:[#allocation17 + $0x140] sm:$0xff]
    %v2135 = vld [vmem:[#allocation17 + $0x148] sm:$0xff]
    %v2136 = vld [vmem:[#allocation17 + $0x150] sm:$0xff]
    %v2137 = vld [vmem:[#allocation17 + $0x158] sm:$0xff]
    %v2138 = vld [vmem:[#allocation17 + $0x160] sm:$0xff]
    %v2139 = vld [vmem:[#allocation17 + $0x168] sm:$0xff]
    %v2140 = vld [vmem:[#allocation17 + $0x170] sm:$0xff]
    %v2141 = vld [vmem:[#allocation17 + $0x178] sm:$0xff]
    %v2142 = vld [vmem:[#allocation17 + $0x180] sm:$0xff]
    %v2143 = vld [vmem:[#allocation17 + $0x188] sm:$0xff]
    %v2144 = vld [vmem:[#allocation17 + $0x190] sm:$0xff]
    %v2145 = vld [vmem:[#allocation17 + $0x198] sm:$0xff]
    %v2146 = vld [vmem:[#allocation17 + $0x1a0] sm:$0xff]
    %v2147 = vld [vmem:[#allocation17 + $0x1a8] sm:$0xff]
    %v2148 = vld [vmem:[#allocation17 + $0x1b0] sm:$0xff]
    %v2149 = vld [vmem:[#allocation17 + $0x1b8] sm:$0xff]
    %v2150 = vld [vmem:[#allocation17 + $0x1c0] sm:$0xff]
    %v2151 = vld [vmem:[#allocation17 + $0x1c8] sm:$0xff]
    %v2152 = vld [vmem:[#allocation17 + $0x1d0] sm:$0xff]
    %v2153 = vld [vmem:[#allocation17 + $0x1d8] sm:$0xff]
    %v2154 = vld [vmem:[#allocation17 + $0x1e0] sm:$0xff]
    %v2155 = vld [vmem:[#allocation17 + $0x1e8] sm:$0xff]
    %v2156 = vld [vmem:[#allocation17 + $0x1f0] sm:$0xff]
    %v2157 = vld [vmem:[#allocation17 + $0x1f8] sm:$0xff]
    %v2158 = vld [vmem:[#allocation17 + $0x200] sm:$0xff]
    %v2159 = vld [vmem:[#allocation17 + $0x208] sm:$0xff]
    %v2160 = vld [vmem:[#allocation17 + $0x210] sm:$0xff]
    %v2161 = vld [vmem:[#allocation17 + $0x218] sm:$0xff]
    %v2162 = vld [vmem:[#allocation17 + $0x220] sm:$0xff]
    %v2163 = vld [vmem:[#allocation17 + $0x228] sm:$0xff]
    %v2164 = vld [vmem:[#allocation17 + $0x230] sm:$0xff]
    %v2165 = vld [vmem:[#allocation17 + $0x238] sm:$0xff]
    %v2166 = vld [vmem:[#allocation17 + $0x240] sm:$0xff]
    %v2167 = vld [vmem:[#allocation17 + $0x248] sm:$0xff]
    %v2168 = vld [vmem:[#allocation17 + $0x250] sm:$0xff]
    %v2169 = vld [vmem:[#allocation17 + $0x258] sm:$0xff]
    %v2170 = vld [vmem:[#allocation17 + $0x260] sm:$0xff]
    %v2171 = vld [vmem:[#allocation17 + $0x268] sm:$0xff]
    %v2172 = vld [vmem:[#allocation17 + $0x270] sm:$0xff]
    %v2173 = vld [vmem:[#allocation17 + $0x278] sm:$0xff]
    %v2174 = vld [vmem:[#allocation17 + $0x280] sm:$0xff]
    %v2175 = vld [vmem:[#allocation17 + $0x288] sm:$0xff]
    %v2176 = vld [vmem:[#allocation17 + $0x290] sm:$0xff]
    %v2177 = vld [vmem:[#allocation17 + $0x298] sm:$0xff]
    %v2178 = vld [vmem:[#allocation17 + $0x2a0] sm:$0xff]
    %v2179 = vld [vmem:[#allocation17 + $0x2a8] sm:$0xff]
    %v2180 = vld [vmem:[#allocation17 + $0x2b0] sm:$0xff]
    %v2181 = vld [vmem:[#allocation17 + $0x2b8] sm:$0xff]
    %v2182 = vld [vmem:[#allocation17 + $0x2c0] sm:$0xff]
    %v2183 = vld [vmem:[#allocation17 + $0x2c8] sm:$0xff]
    %v2184 = vld [vmem:[#allocation17 + $0x2d0] sm:$0xff]
    %v2185 = vld [vmem:[#allocation17 + $0x2d8] sm:$0xff]
    %v2186 = vld [vmem:[#allocation17 + $0x2e0] sm:$0xff]
    %v2187 = vld [vmem:[#allocation17 + $0x2e8] sm:$0xff]
    %v2188 = vld [vmem:[#allocation17 + $0x2f0] sm:$0xff]
    %v2189 = vld [vmem:[#allocation17 + $0x2f8] sm:$0xff]
    %v2190 = vld [vmem:[#allocation17 + $0x300] sm:$0xff]
    %v2191 = vld [vmem:[#allocation17 + $0x308] sm:$0xff]
    %v2192 = vld [vmem:[#allocation17 + $0x310] sm:$0xff]
    %v2193 = vld [vmem:[#allocation17 + $0x318] sm:$0xff]
    %v2194 = vld [vmem:[#allocation17 + $0x320] sm:$0xff]
    %v2195 = vld [vmem:[#allocation17 + $0x328] sm:$0xff]
    %v2196 = vld [vmem:[#allocation17 + $0x330] sm:$0xff]
    %v2197 = vld [vmem:[#allocation17 + $0x338] sm:$0xff]
    %v2198 = vld [vmem:[#allocation17 + $0x340] sm:$0xff]
    %v2199 = vld [vmem:[#allocation17 + $0x348] sm:$0xff]
    %v2200 = vld [vmem:[#allocation17 + $0x350] sm:$0xff]
    %v2201 = vld [vmem:[#allocation17 + $0x358] sm:$0xff]
    %v2202 = vld [vmem:[#allocation17 + $0x360] sm:$0xff]
    %v2203 = vld [vmem:[#allocation17 + $0x368] sm:$0xff]
    %v2204 = vld [vmem:[#allocation17 + $0x370] sm:$0xff]
    %v2205 = vld [vmem:[#allocation17 + $0x378] sm:$0xff]
    %v2206 = vld [vmem:[#allocation17 + $0x380] sm:$0xff]
    %v2207 = vld [vmem:[#allocation17 + $0x388] sm:$0xff]
    %v2208 = vld [vmem:[#allocation17 + $0x390] sm:$0xff]
    %v2209 = vld [vmem:[#allocation17 + $0x398] sm:$0xff]
    %v2210 = vld [vmem:[#allocation17 + $0x3a0] sm:$0xff]
    %v2211 = vld [vmem:[#allocation17 + $0x3a8] sm:$0xff]
    %v2212 = vld [vmem:[#allocation17 + $0x3b0] sm:$0xff]
    %v2213 = vld [vmem:[#allocation17 + $0x3b8] sm:$0xff]
    %v2214 = vld [vmem:[#allocation17 + $0x3c0] sm:$0xff]
    %v2215 = vld [vmem:[#allocation17 + $0x3c8] sm:$0xff]
    %v2216 = vld [vmem:[#allocation17 + $0x3d0] sm:$0xff]
    %v2217 = vld [vmem:[#allocation17 + $0x3d8] sm:$0xff]
    %v2218 = vld [vmem:[#allocation17 + $0x3e0] sm:$0xff]
    %v2219 = vld [vmem:[#allocation17 + $0x3e8] sm:$0xff]
    %v2220 = vld [vmem:[#allocation17 + $0x3f0] sm:$0xff]
    %v2221 = vld [vmem:[#allocation17 + $0x3f8] sm:$0xff]
    %v2222 = vld [vmem:[#allocation17 + $0x400] sm:$0xff]
    %v2223 = vld [vmem:[#allocation17 + $0x408] sm:$0xff]
    %v2224 = vld [vmem:[#allocation17 + $0x410] sm:$0xff]
    %v2225 = vld [vmem:[#allocation17 + $0x418] sm:$0xff]
    %v2226 = vld [vmem:[#allocation17 + $0x420] sm:$0xff]
    %v2227 = vld [vmem:[#allocation17 + $0x428] sm:$0xff]
    %v2228 = vld [vmem:[#allocation17 + $0x430] sm:$0xff]
    %v2229 = vld [vmem:[#allocation17 + $0x438] sm:$0xff]
    %v2230 = vld [vmem:[#allocation17 + $0x440] sm:$0xff]
    %v2231 = vld [vmem:[#allocation17 + $0x448] sm:$0xff]
    %v2232 = vld [vmem:[#allocation17 + $0x450] sm:$0xff]
    %v2233 = vld [vmem:[#allocation17 + $0x458] sm:$0xff]
    %v2234 = vld [vmem:[#allocation17 + $0x460] sm:$0xff]
    %v2235 = vld [vmem:[#allocation17 + $0x468] sm:$0xff]
    %v2236 = vld [vmem:[#allocation17 + $0x470] sm:$0xff]
    %v2237 = vld [vmem:[#allocation17 + $0x478] sm:$0xff]
    %v2238 = vld [vmem:[#allocation17 + $0x480] sm:$0xff]
    %v2239 = vld [vmem:[#allocation17 + $0x488] sm:$0xff]
    %v2240 = vld [vmem:[#allocation17 + $0x490] sm:$0xff]
    %v2241 = vld [vmem:[#allocation17 + $0x498] sm:$0xff]
    %v2242 = vld [vmem:[#allocation17 + $0x4a0] sm:$0xff]
    %v2243 = vld [vmem:[#allocation17 + $0x4a8] sm:$0xff]
    %v2244 = vld [vmem:[#allocation17 + $0x4b0] sm:$0xff]
    %v2245 = vld [vmem:[#allocation17 + $0x4b8] sm:$0xff]
    %v2246 = vld [vmem:[#allocation17 + $0x4c0] sm:$0xff]
    %v2247 = vld [vmem:[#allocation17 + $0x4c8] sm:$0xff]
    %v2248 = vld [vmem:[#allocation17 + $0x4d0] sm:$0xff]
    %v2249 = vld [vmem:[#allocation17 + $0x4d8] sm:$0xff]
    %v2250 = vld [vmem:[#allocation17 + $0x4e0] sm:$0xff]
    %v2251 = vld [vmem:[#allocation17 + $0x4e8] sm:$0xff]
    %v2252 = vld [vmem:[#allocation17 + $0x4f0] sm:$0xff]
    %v2253 = vld [vmem:[#allocation17 + $0x4f8] sm:$0xff]
    %v2254 = vld [vmem:[#allocation17 + $0x500] sm:$0xff]
    %v2255 = vld [vmem:[#allocation17 + $0x508] sm:$0xff]
    %v2256 = vld [vmem:[#allocation17 + $0x510] sm:$0xff]
    %v2257 = vld [vmem:[#allocation17 + $0x518] sm:$0xff]
    %v2258 = vld [vmem:[#allocation17 + $0x520] sm:$0xff]
    %v2259 = vld [vmem:[#allocation17 + $0x528] sm:$0xff]
    %v2260 = vld [vmem:[#allocation17 + $0x530] sm:$0xff]
    %v2261 = vld [vmem:[#allocation17 + $0x538] sm:$0xff]
    %v2262 = vld [vmem:[#allocation17 + $0x540] sm:$0xff]
    %v2263 = vld [vmem:[#allocation17 + $0x548] sm:$0xff]
    %v2264 = vld [vmem:[#allocation17 + $0x550] sm:$0xff]
    %v2265 = vld [vmem:[#allocation17 + $0x558] sm:$0xff]
    %v2266 = vld [vmem:[#allocation17 + $0x560] sm:$0xff]
    %v2267 = vld [vmem:[#allocation17 + $0x568] sm:$0xff]
    %v2268 = vld [vmem:[#allocation17 + $0x570] sm:$0xff]
    %v2269 = vld [vmem:[#allocation17 + $0x578] sm:$0xff]
    %v2270 = vld [vmem:[#allocation17 + $0x580] sm:$0xff]
    %v2271 = vld [vmem:[#allocation17 + $0x588] sm:$0xff]
    %v2272 = vld [vmem:[#allocation17 + $0x590] sm:$0xff]
    %v2273 = vld [vmem:[#allocation17 + $0x598] sm:$0xff]
    %v2274 = vld [vmem:[#allocation17 + $0x5a0] sm:$0xff]
    %v2275 = vld [vmem:[#allocation17 + $0x5a8] sm:$0xff]
    %v2276 = vld [vmem:[#allocation17 + $0x5b0] sm:$0xff]
    %v2277 = vld [vmem:[#allocation17 + $0x5b8] sm:$0xff]
    %v2278 = vld [vmem:[#allocation17 + $0x5c0] sm:$0xff]
    %v2279 = vld [vmem:[#allocation17 + $0x5c8] sm:$0xff]
    %v2280 = vld [vmem:[#allocation17 + $0x5d0] sm:$0xff]
    %v2281 = vld [vmem:[#allocation17 + $0x5d8] sm:$0xff]
    %v2282 = vld [vmem:[#allocation17 + $0x5e0] sm:$0xff]
    %v2283 = vld [vmem:[#allocation17 + $0x5e8] sm:$0xff]
    %v2284 = vld [vmem:[#allocation17 + $0x5f0] sm:$0xff]
    %v2285 = vld [vmem:[#allocation17 + $0x5f8] sm:$0xff]
    %v2286 = vld [vmem:[#allocation17 + $0x600] sm:$0xff]
    %v2287 = vld [vmem:[#allocation17 + $0x608] sm:$0xff]
    %v2288 = vld [vmem:[#allocation17 + $0x610] sm:$0xff]
    %v2289 = vld [vmem:[#allocation17 + $0x618] sm:$0xff]
    %v2290 = vld [vmem:[#allocation17 + $0x620] sm:$0xff]
    %v2291 = vld [vmem:[#allocation17 + $0x628] sm:$0xff]
    %v2292 = vld [vmem:[#allocation17 + $0x630] sm:$0xff]
    %v2293 = vld [vmem:[#allocation17 + $0x638] sm:$0xff]
    %v2294 = vld [vmem:[#allocation17 + $0x640] sm:$0xff]
    %v2295 = vld [vmem:[#allocation17 + $0x648] sm:$0xff]
    %v2296 = vld [vmem:[#allocation17 + $0x650] sm:$0xff]
    %v2297 = vld [vmem:[#allocation17 + $0x658] sm:$0xff]
    %v2298 = vld [vmem:[#allocation17 + $0x660] sm:$0xff]
    %v2299 = vld [vmem:[#allocation17 + $0x668] sm:$0xff]
    %v2300 = vld [vmem:[#allocation17 + $0x670] sm:$0xff]
    %v2301 = vld [vmem:[#allocation17 + $0x678] sm:$0xff]
    %v2302 = vld [vmem:[#allocation17 + $0x680] sm:$0xff]
    %v2303 = vld [vmem:[#allocation17 + $0x688] sm:$0xff]
    %v2304 = vld [vmem:[#allocation17 + $0x690] sm:$0xff]
    %v2305 = vld [vmem:[#allocation17 + $0x698] sm:$0xff]
    %v2306 = vld [vmem:[#allocation17 + $0x6a0] sm:$0xff]
    %v2307 = vld [vmem:[#allocation17 + $0x6a8] sm:$0xff]
    %v2308 = vld [vmem:[#allocation17 + $0x6b0] sm:$0xff]
    %v2309 = vld [vmem:[#allocation17 + $0x6b8] sm:$0xff]
    %v2310 = vld [vmem:[#allocation17 + $0x6c0] sm:$0xff]
    %v2311 = vld [vmem:[#allocation17 + $0x6c8] sm:$0xff]
    %v2312 = vld [vmem:[#allocation17 + $0x6d0] sm:$0xff]
    %v2313 = vld [vmem:[#allocation17 + $0x6d8] sm:$0xff]
    %v2314 = vld [vmem:[#allocation17 + $0x6e0] sm:$0xff]
    %v2315 = vld [vmem:[#allocation17 + $0x6e8] sm:$0xff]
    %v2316 = vld [vmem:[#allocation17 + $0x6f0] sm:$0xff]
    %v2317 = vld [vmem:[#allocation17 + $0x6f8] sm:$0xff]
    %v2318 = vld [vmem:[#allocation17 + $0x700] sm:$0xff]
    %v2319 = vld [vmem:[#allocation17 + $0x708] sm:$0xff]
    %v2320 = vld [vmem:[#allocation17 + $0x710] sm:$0xff]
    %v2321 = vld [vmem:[#allocation17 + $0x718] sm:$0xff]
    %v2322 = vld [vmem:[#allocation17 + $0x720] sm:$0xff]
    %v2323 = vld [vmem:[#allocation17 + $0x728] sm:$0xff]
    %v2324 = vld [vmem:[#allocation17 + $0x730] sm:$0xff]
    %v2325 = vld [vmem:[#allocation17 + $0x738] sm:$0xff]
    %v2326 = vld [vmem:[#allocation17 + $0x740] sm:$0xff]
    %v2327 = vld [vmem:[#allocation17 + $0x748] sm:$0xff]
    %v2328 = vld [vmem:[#allocation17 + $0x750] sm:$0xff]
    %v2329 = vld [vmem:[#allocation17 + $0x758] sm:$0xff]
    %v2330 = vld [vmem:[#allocation17 + $0x760] sm:$0xff]
    %v2331 = vld [vmem:[#allocation17 + $0x768] sm:$0xff]
    %v2332 = vld [vmem:[#allocation17 + $0x770] sm:$0xff]
    %v2333 = vld [vmem:[#allocation17 + $0x778] sm:$0xff]
    %v2334 = vld [vmem:[#allocation17 + $0x780] sm:$0xff]
    %v2335 = vld [vmem:[#allocation17 + $0x788] sm:$0xff]
    %v2336 = vld [vmem:[#allocation17 + $0x790] sm:$0xff]
    %v2337 = vld [vmem:[#allocation17 + $0x798] sm:$0xff]
    %v2338 = vld [vmem:[#allocation17 + $0x7a0] sm:$0xff]
    %v2339 = vld [vmem:[#allocation17 + $0x7a8] sm:$0xff]
    %v2340 = vld [vmem:[#allocation17 + $0x7b0] sm:$0xff]
    %v2341 = vld [vmem:[#allocation17 + $0x7b8] sm:$0xff]
    %v2342 = vld [vmem:[#allocation17 + $0x7c0] sm:$0xff]
    %v2343 = vld [vmem:[#allocation17 + $0x7c8] sm:$0xff]
    %v2344 = vld [vmem:[#allocation17 + $0x7d0] sm:$0xff]
    %v2345 = vld [vmem:[#allocation17 + $0x7d8] sm:$0xff]
    %v2346 = vld [vmem:[#allocation17 + $0x7e0] sm:$0xff]
    %v2347 = vld [vmem:[#allocation17 + $0x7e8] sm:$0xff]
    %v2348 = vld [vmem:[#allocation17 + $0x7f0] sm:$0xff]
    %v2349 = vld [vmem:[#allocation17 + $0x7f8] sm:$0xff]
    %v2350 = vld [vmem:[#allocation17 + $0x800] sm:$0xff]
    %v2351 = vld [vmem:[#allocation17 + $0x808] sm:$0xff]
    %v2352 = vld [vmem:[#allocation17 + $0x810] sm:$0xff]
    %v2353 = vld [vmem:[#allocation17 + $0x818] sm:$0xff]
    %v2354 = vld [vmem:[#allocation17 + $0x820] sm:$0xff]
    %v2355 = vld [vmem:[#allocation17 + $0x828] sm:$0xff]
    %v2356 = vld [vmem:[#allocation17 + $0x830] sm:$0xff]
    %v2357 = vld [vmem:[#allocation17 + $0x838] sm:$0xff]
    %v2358 = vld [vmem:[#allocation17 + $0x840] sm:$0xff]
    %v2359 = vld [vmem:[#allocation17 + $0x848] sm:$0xff]
    %v2360 = vld [vmem:[#allocation17 + $0x850] sm:$0xff]
    %v2361 = vld [vmem:[#allocation17 + $0x858] sm:$0xff]
    %v2362 = vld [vmem:[#allocation17 + $0x860] sm:$0xff]
    %v2363 = vld [vmem:[#allocation17 + $0x868] sm:$0xff]
    %v2364 = vld [vmem:[#allocation17 + $0x870] sm:$0xff]
    %v2365 = vld [vmem:[#allocation17 + $0x878] sm:$0xff]
    %v2366 = vld [vmem:[#allocation17 + $0x880] sm:$0xff]
    %v2367 = vld [vmem:[#allocation17 + $0x888] sm:$0xff]
    %v2368 = vld [vmem:[#allocation17 + $0x890] sm:$0xff]
    %v2369 = vld [vmem:[#allocation17 + $0x898] sm:$0xff]
    %v2370 = vld [vmem:[#allocation17 + $0x8a0] sm:$0xff]
    %v2371 = vld [vmem:[#allocation17 + $0x8a8] sm:$0xff]
    %v2372 = vld [vmem:[#allocation17 + $0x8b0] sm:$0xff]
    %v2373 = vld [vmem:[#allocation17 + $0x8b8] sm:$0xff]
    %v2374 = vld [vmem:[#allocation17 + $0x8c0] sm:$0xff]
    %v2375 = vld [vmem:[#allocation17 + $0x8c8] sm:$0xff]
    %v2376 = vld [vmem:[#allocation17 + $0x8d0] sm:$0xff]
    %v2377 = vld [vmem:[#allocation17 + $0x8d8] sm:$0xff]
    %v2378 = vld [vmem:[#allocation17 + $0x8e0] sm:$0xff]
    %v2379 = vld [vmem:[#allocation17 + $0x8e8] sm:$0xff]
    %v2380 = vld [vmem:[#allocation17 + $0x8f0] sm:$0xff]
    %v2381 = vld [vmem:[#allocation17 + $0x8f8] sm:$0xff]
    %v2382 = vld [vmem:[#allocation17 + $0x900] sm:$0xff]
    %v2383 = vld [vmem:[#allocation17 + $0x908] sm:$0xff]
    %v2384 = vld [vmem:[#allocation17 + $0x910] sm:$0xff]
    %v2385 = vld [vmem:[#allocation17 + $0x918] sm:$0xff]
    %v2386 = vld [vmem:[#allocation17 + $0x920] sm:$0xff]
    %v2387 = vld [vmem:[#allocation17 + $0x928] sm:$0xff]
    %v2388 = vld [vmem:[#allocation17 + $0x930] sm:$0xff]
    %v2389 = vld [vmem:[#allocation17 + $0x938] sm:$0xff]
    %v2390 = vld [vmem:[#allocation17 + $0x940] sm:$0xff]
    %v2391 = vld [vmem:[#allocation17 + $0x948] sm:$0xff]
    %v2392 = vld [vmem:[#allocation17 + $0x950] sm:$0xff]
    %v2393 = vld [vmem:[#allocation17 + $0x958] sm:$0xff]
    %v2394 = vld [vmem:[#allocation17 + $0x960] sm:$0xff]
    %v2395 = vld [vmem:[#allocation17 + $0x968] sm:$0xff]
    %v2396 = vld [vmem:[#allocation17 + $0x970] sm:$0xff]
    %v2397 = vld [vmem:[#allocation17 + $0x978] sm:$0xff]
    %v2398 = vld [vmem:[#allocation17 + $0x980] sm:$0xff]
    %v2399 = vld [vmem:[#allocation17 + $0x988] sm:$0xff]
    %v2400 = vld [vmem:[#allocation17 + $0x990] sm:$0xff]
    %v2401 = vld [vmem:[#allocation17 + $0x998] sm:$0xff]
    %v2402 = vld [vmem:[#allocation17 + $0x9a0] sm:$0xff]
    %v2403 = vld [vmem:[#allocation17 + $0x9a8] sm:$0xff]
    %v2404 = vld [vmem:[#allocation17 + $0x9b0] sm:$0xff]
    %v2405 = vld [vmem:[#allocation17 + $0x9b8] sm:$0xff]
    %v2406 = vld [vmem:[#allocation17 + $0x9c0] sm:$0xff]
    %v2407 = vld [vmem:[#allocation17 + $0x9c8] sm:$0xff]
    %v2408 = vld [vmem:[#allocation17 + $0x9d0] sm:$0xff]
    %v2409 = vld [vmem:[#allocation17 + $0x9d8] sm:$0xff]
    %v2410 = vld [vmem:[#allocation17 + $0x9e0] sm:$0xff]
    %v2411 = vld [vmem:[#allocation17 + $0x9e8] sm:$0xff]
    %v2412 = vld [vmem:[#allocation17 + $0x9f0] sm:$0xff]
    %v2413 = vld [vmem:[#allocation17 + $0x9f8] sm:$0xff]
    %v2414 = vld [vmem:[#allocation17 + $0xa00] sm:$0xff]
    %v2415 = vld [vmem:[#allocation17 + $0xa08] sm:$0xff]
    %v2416 = vld [vmem:[#allocation17 + $0xa10] sm:$0xff]
    %v2417 = vld [vmem:[#allocation17 + $0xa18] sm:$0xff]
    %v2418 = vld [vmem:[#allocation17 + $0xa20] sm:$0xff]
    %v2419 = vld [vmem:[#allocation17 + $0xa28] sm:$0xff]
    %v2420 = vld [vmem:[#allocation17 + $0xa30] sm:$0xff]
    %v2421 = vld [vmem:[#allocation17 + $0xa38] sm:$0xff]
    %v2422 = vld [vmem:[#allocation17 + $0xa40] sm:$0xff]
    %v2423 = vld [vmem:[#allocation17 + $0xa48] sm:$0xff]
    %v2424 = vld [vmem:[#allocation17 + $0xa50] sm:$0xff]
    %v2425 = vld [vmem:[#allocation17 + $0xa58] sm:$0xff]
    %v2426 = vld [vmem:[#allocation17 + $0xa60] sm:$0xff]
    %v2427 = vld [vmem:[#allocation17 + $0xa68] sm:$0xff]
    %v2428 = vld [vmem:[#allocation17 + $0xa70] sm:$0xff]
    %v2429 = vld [vmem:[#allocation17 + $0xa78] sm:$0xff]
    %v2430 = vld [vmem:[#allocation17 + $0xa80] sm:$0xff]
    %v2431 = vld [vmem:[#allocation17 + $0xa88] sm:$0xff]
    %v2432 = vld [vmem:[#allocation17 + $0xa90] sm:$0xff]
    %v2433 = vld [vmem:[#allocation17 + $0xa98] sm:$0xff]
    %v2434 = vld [vmem:[#allocation17 + $0xaa0] sm:$0xff]
    %v2435 = vld [vmem:[#allocation17 + $0xaa8] sm:$0xff]
    %v2436 = vld [vmem:[#allocation17 + $0xab0] sm:$0xff]
    %v2437 = vld [vmem:[#allocation17 + $0xab8] sm:$0xff]
    %v2438 = vld [vmem:[#allocation17 + $0xac0] sm:$0xff]
    %v2439 = vld [vmem:[#allocation17 + $0xac8] sm:$0xff]
    %v2440 = vld [vmem:[#allocation17 + $0xad0] sm:$0xff]
    %v2441 = vld [vmem:[#allocation17 + $0xad8] sm:$0xff]
    %v2442 = vld [vmem:[#allocation17 + $0xae0] sm:$0xff]
    %v2443 = vld [vmem:[#allocation17 + $0xae8] sm:$0xff]
    %v2444 = vld [vmem:[#allocation17 + $0xaf0] sm:$0xff]
    %v2445 = vld [vmem:[#allocation17 + $0xaf8] sm:$0xff]
    %v2446 = vld [vmem:[#allocation17 + $0xb00] sm:$0xff]
    %v2447 = vld [vmem:[#allocation17 + $0xb08] sm:$0xff]
    %v2448 = vld [vmem:[#allocation17 + $0xb10] sm:$0xff]
    %v2449 = vld [vmem:[#allocation17 + $0xb18] sm:$0xff]
    %v2450 = vld [vmem:[#allocation17 + $0xb20] sm:$0xff]
    %v2451 = vld [vmem:[#allocation17 + $0xb28] sm:$0xff]
    %v2452 = vld [vmem:[#allocation17 + $0xb30] sm:$0xff]
    %v2453 = vld [vmem:[#allocation17 + $0xb38] sm:$0xff]
    %v2454 = vld [vmem:[#allocation17 + $0xb40] sm:$0xff]
    %v2455 = vld [vmem:[#allocation17 + $0xb48] sm:$0xff]
    %v2456 = vld [vmem:[#allocation17 + $0xb50] sm:$0xff]
    %v2457 = vld [vmem:[#allocation17 + $0xb58] sm:$0xff]
    %v2458 = vld [vmem:[#allocation17 + $0xb60] sm:$0xff]
    %v2459 = vld [vmem:[#allocation17 + $0xb68] sm:$0xff]
    %v2460 = vld [vmem:[#allocation17 + $0xb70] sm:$0xff]
    %v2461 = vld [vmem:[#allocation17 + $0xb78] sm:$0xff]
    %v2462 = vld [vmem:[#allocation17 + $0xb80] sm:$0xff]
    %v2463 = vld [vmem:[#allocation17 + $0xb88] sm:$0xff]
    %v2464 = vld [vmem:[#allocation17 + $0xb90] sm:$0xff]
    %v2465 = vld [vmem:[#allocation17 + $0xb98] sm:$0xff]
    %v2466 = vld [vmem:[#allocation17 + $0xba0] sm:$0xff]
    %v2467 = vld [vmem:[#allocation17 + $0xba8] sm:$0xff]
    %v2468 = vld [vmem:[#allocation17 + $0xbb0] sm:$0xff]
    %v2469 = vld [vmem:[#allocation17 + $0xbb8] sm:$0xff]
    %v2470 = vld [vmem:[#allocation17 + $0xbc0] sm:$0xff]
    %v2471 = vld [vmem:[#allocation17 + $0xbc8] sm:$0xff]
    %v2472 = vld [vmem:[#allocation17 + $0xbd0] sm:$0xff]
    %v2473 = vld [vmem:[#allocation17 + $0xbd8] sm:$0xff]
    %v2474 = vld [vmem:[#allocation17 + $0xbe0] sm:$0xff]
    %v2475 = vld [vmem:[#allocation17 + $0xbe8] sm:$0xff]
    %v2476 = vld [vmem:[#allocation17 + $0xbf0] sm:$0xff]
    %v2477 = vld [vmem:[#allocation17 + $0xbf8] sm:$0xff]
    %v2478 = vld [vmem:[#allocation17 + $0xc00] sm:$0xff]
    %v2479 = vld [vmem:[#allocation17 + $0xc08] sm:$0xff]
    %v2480 = vld [vmem:[#allocation17 + $0xc10] sm:$0xff]
    %v2481 = vld [vmem:[#allocation17 + $0xc18] sm:$0xff]
    %v2482 = vld [vmem:[#allocation17 + $0xc20] sm:$0xff]
    %v2483 = vld [vmem:[#allocation17 + $0xc28] sm:$0xff]
    %v2484 = vld [vmem:[#allocation17 + $0xc30] sm:$0xff]
    %v2485 = vld [vmem:[#allocation17 + $0xc38] sm:$0xff]
    %v2486 = vld [vmem:[#allocation17 + $0xc40] sm:$0xff]
    %v2487 = vld [vmem:[#allocation17 + $0xc48] sm:$0xff]
    %v2488 = vld [vmem:[#allocation17 + $0xc50] sm:$0xff]
    %v2489 = vld [vmem:[#allocation17 + $0xc58] sm:$0xff]
    %v2490 = vld [vmem:[#allocation17 + $0xc60] sm:$0xff]
    %v2491 = vld [vmem:[#allocation17 + $0xc68] sm:$0xff]
    %v2492 = vld [vmem:[#allocation17 + $0xc70] sm:$0xff]
    %v2493 = vld [vmem:[#allocation17 + $0xc78] sm:$0xff]
    %v2494 = vld [vmem:[#allocation17 + $0xc80] sm:$0xff]
    %v2495 = vld [vmem:[#allocation17 + $0xc88] sm:$0xff]
    %v2496 = vld [vmem:[#allocation17 + $0xc90] sm:$0xff]
    %v2497 = vld [vmem:[#allocation17 + $0xc98] sm:$0xff]
    %v2498 = vld [vmem:[#allocation17 + $0xca0] sm:$0xff]
    %v2499 = vld [vmem:[#allocation17 + $0xca8] sm:$0xff]
    %v2500 = vld [vmem:[#allocation17 + $0xcb0] sm:$0xff]
    %v2501 = vld [vmem:[#allocation17 + $0xcb8] sm:$0xff]
    %v2502 = vld [vmem:[#allocation17 + $0xcc0] sm:$0xff]
    %v2503 = vld [vmem:[#allocation17 + $0xcc8] sm:$0xff]
    %v2504 = vld [vmem:[#allocation17 + $0xcd0] sm:$0xff]
    %v2505 = vld [vmem:[#allocation17 + $0xcd8] sm:$0xff]
    %v2506 = vld [vmem:[#allocation17 + $0xce0] sm:$0xff]
    %v2507 = vld [vmem:[#allocation17 + $0xce8] sm:$0xff]
    %v2508 = vld [vmem:[#allocation17 + $0xcf0] sm:$0xff]
    %v2509 = vld [vmem:[#allocation17 + $0xcf8] sm:$0xff]
    %v2510 = vld [vmem:[#allocation17 + $0xd00] sm:$0xff]
    %v2511 = vld [vmem:[#allocation17 + $0xd08] sm:$0xff]
    %v2512 = vld [vmem:[#allocation17 + $0xd10] sm:$0xff]
    %v2513 = vld [vmem:[#allocation17 + $0xd18] sm:$0xff]
    %v2514 = vld [vmem:[#allocation17 + $0xd20] sm:$0xff]
    %v2515 = vld [vmem:[#allocation17 + $0xd28] sm:$0xff]
    %v2516 = vld [vmem:[#allocation17 + $0xd30] sm:$0xff]
    %v2517 = vld [vmem:[#allocation17 + $0xd38] sm:$0xff]
    %v2518 = vld [vmem:[#allocation17 + $0xd40] sm:$0xff]
    %v2519 = vld [vmem:[#allocation17 + $0xd48] sm:$0xff]
    %v2520 = vld [vmem:[#allocation17 + $0xd50] sm:$0xff]
    %v2521 = vld [vmem:[#allocation17 + $0xd58] sm:$0xff]
    %v2522 = vld [vmem:[#allocation17 + $0xd60] sm:$0xff]
    %v2523 = vld [vmem:[#allocation17 + $0xd68] sm:$0xff]
    %v2524 = vld [vmem:[#allocation17 + $0xd70] sm:$0xff]
    %v2525 = vld [vmem:[#allocation17 + $0xd78] sm:$0xff]
    %v2526 = vld [vmem:[#allocation17 + $0xd80] sm:$0xff]
    %v2527 = vld [vmem:[#allocation17 + $0xd88] sm:$0xff]
    %v2528 = vld [vmem:[#allocation17 + $0xd90] sm:$0xff]
    %v2529 = vld [vmem:[#allocation17 + $0xd98] sm:$0xff]
    %v2530 = vld [vmem:[#allocation17 + $0xda0] sm:$0xff]
    %v2531 = vld [vmem:[#allocation17 + $0xda8] sm:$0xff]
    %v2532 = vld [vmem:[#allocation17 + $0xdb0] sm:$0xff]
    %v2533 = vld [vmem:[#allocation17 + $0xdb8] sm:$0xff]
    %v2534 = vld [vmem:[#allocation17 + $0xdc0] sm:$0xff]
    %v2535 = vld [vmem:[#allocation17 + $0xdc8] sm:$0xff]
    %v2536 = vld [vmem:[#allocation17 + $0xdd0] sm:$0xff]
    %v2537 = vld [vmem:[#allocation17 + $0xdd8] sm:$0xff]
    %v2538 = vld [vmem:[#allocation17 + $0xde0] sm:$0xff]
    %v2539 = vld [vmem:[#allocation17 + $0xde8] sm:$0xff]
    %v2540 = vld [vmem:[#allocation17 + $0xdf0] sm:$0xff]
    %v2541 = vld [vmem:[#allocation17 + $0xdf8] sm:$0xff]
    %v2542 = vld [vmem:[#allocation17 + $0xe00] sm:$0xff]
    %v2543 = vld [vmem:[#allocation17 + $0xe08] sm:$0xff]
    %v2544 = vld [vmem:[#allocation17 + $0xe10] sm:$0xff]
    %v2545 = vld [vmem:[#allocation17 + $0xe18] sm:$0xff]
    %v2546 = vld [vmem:[#allocation17 + $0xe20] sm:$0xff]
    %v2547 = vld [vmem:[#allocation17 + $0xe28] sm:$0xff]
    %v2548 = vld [vmem:[#allocation17 + $0xe30] sm:$0xff]
    %v2549 = vld [vmem:[#allocation17 + $0xe38] sm:$0xff]
    %v2550 = vld [vmem:[#allocation17 + $0xe40] sm:$0xff]
    %v2551 = vld [vmem:[#allocation17 + $0xe48] sm:$0xff]
    %v2552 = vld [vmem:[#allocation17 + $0xe50] sm:$0xff]
    %v2553 = vld [vmem:[#allocation17 + $0xe58] sm:$0xff]
    %v2554 = vld [vmem:[#allocation17 + $0xe60] sm:$0xff]
    %v2555 = vld [vmem:[#allocation17 + $0xe68] sm:$0xff]
    %v2556 = vld [vmem:[#allocation17 + $0xe70] sm:$0xff]
    %v2557 = vld [vmem:[#allocation17 + $0xe78] sm:$0xff]
    %v2558 = vld [vmem:[#allocation17 + $0xe80] sm:$0xff]
    %v2559 = vld [vmem:[#allocation17 + $0xe88] sm:$0xff]
    %v2560 = vld [vmem:[#allocation17 + $0xe90] sm:$0xff]
    %v2561 = vld [vmem:[#allocation17 + $0xe98] sm:$0xff]
    %v2562 = vld [vmem:[#allocation17 + $0xea0] sm:$0xff]
    %v2563 = vld [vmem:[#allocation17 + $0xea8] sm:$0xff]
    %v2564 = vld [vmem:[#allocation17 + $0xeb0] sm:$0xff]
    %v2565 = vld [vmem:[#allocation17 + $0xeb8] sm:$0xff]
    %v2566 = vld [vmem:[#allocation17 + $0xec0] sm:$0xff]
    %v2567 = vld [vmem:[#allocation17 + $0xec8] sm:$0xff]
    %v2568 = vld [vmem:[#allocation17 + $0xed0] sm:$0xff]
    %v2569 = vld [vmem:[#allocation17 + $0xed8] sm:$0xff]
    %v2570 = vld [vmem:[#allocation17 + $0xee0] sm:$0xff]
    %v2571 = vld [vmem:[#allocation17 + $0xee8] sm:$0xff]
    %v2572 = vld [vmem:[#allocation17 + $0xef0] sm:$0xff]
    %v2573 = vld [vmem:[#allocation17 + $0xef8] sm:$0xff]
    %v2574 = vld [vmem:[#allocation17 + $0xf00] sm:$0xff]
    %v2575 = vld [vmem:[#allocation17 + $0xf08] sm:$0xff]
    %v2576 = vld [vmem:[#allocation17 + $0xf10] sm:$0xff]
    %v2577 = vld [vmem:[#allocation17 + $0xf18] sm:$0xff]
    %v2578 = vld [vmem:[#allocation17 + $0xf20] sm:$0xff]
    %v2579 = vld [vmem:[#allocation17 + $0xf28] sm:$0xff]
    %v2580 = vld [vmem:[#allocation17 + $0xf30] sm:$0xff]
    %v2581 = vld [vmem:[#allocation17 + $0xf38] sm:$0xff]
    %v2582 = vld [vmem:[#allocation17 + $0xf40] sm:$0xff]
    %v2583 = vld [vmem:[#allocation17 + $0xf48] sm:$0xff]
    %v2584 = vld [vmem:[#allocation17 + $0xf50] sm:$0xff]
    %v2585 = vld [vmem:[#allocation17 + $0xf58] sm:$0xff]
    %v2586 = vld [vmem:[#allocation17 + $0xf60] sm:$0xff]
    %v2587 = vld [vmem:[#allocation17 + $0xf68] sm:$0xff]
    %v2588 = vld [vmem:[#allocation17 + $0xf70] sm:$0xff]
    %v2589 = vld [vmem:[#allocation17 + $0xf78] sm:$0xff]
    %v2590 = vld [vmem:[#allocation17 + $0xf80] sm:$0xff]
    %v2591 = vld [vmem:[#allocation17 + $0xf88] sm:$0xff]
    %v2592 = vld [vmem:[#allocation17 + $0xf90] sm:$0xff]
    %v2593 = vld [vmem:[#allocation17 + $0xf98] sm:$0xff]
    %v2594 = vld [vmem:[#allocation17 + $0xfa0] sm:$0xff]
    %v2595 = vld [vmem:[#allocation17 + $0xfa8] sm:$0xff]
    %v2596 = vld [vmem:[#allocation17 + $0xfb0] sm:$0xff]
    %v2597 = vld [vmem:[#allocation17 + $0xfb8] sm:$0xff]
    %v2598 = vld [vmem:[#allocation17 + $0xfc0] sm:$0xff]
    %v2599 = vld [vmem:[#allocation17 + $0xfc8] sm:$0xff]
    %v2600 = vld [vmem:[#allocation17 + $0xfd0] sm:$0xff]
    %v2601 = vld [vmem:[#allocation17 + $0xfd8] sm:$0xff]
    %v2602 = vld [vmem:[#allocation17 + $0xfe0] sm:$0xff]
    %v2603 = vld [vmem:[#allocation17 + $0xfe8] sm:$0xff]
    %v2604 = vld [vmem:[#allocation17 + $0xff0] sm:$0xff]
    %v2605 = vld [vmem:[#allocation17 + $0xff8] sm:$0xff]
    %v2606 = vld [vmem:[#allocation19] sm:$0xff]
    %v2608 = vlaneseq
    %v2609 = vshrl.u32 %v2608, 7
    %v2610 = vsub.s32 0, %v2609
    %v2611 = vrot.slane %v2606, %v2610
    %v2612 = vlaneseq
    %v2613 = vshrl.u32 %v2612, 7
    %v2614 = vsub.s32 1, %v2613
    %v2615 = vrot.slane %v2606, %v2614
    %v2616 = vlaneseq
    %v2617 = vshrl.u32 %v2616, 7
    %v2618 = vsub.s32 2, %v2617
    %v2619 = vrot.slane %v2606, %v2618
    %v2620 = vlaneseq
    %v2621 = vshrl.u32 %v2620, 7
    %v2622 = vsub.s32 3, %v2621
    %v2623 = vrot.slane %v2606, %v2622
    %v2624 = vlaneseq
    %v2625 = vshrl.u32 %v2624, 7
    %v2626 = vsub.s32 4, %v2625
    %v2627 = vrot.slane %v2606, %v2626
    %v2628 = vlaneseq
    %v2629 = vshrl.u32 %v2628, 7
    %v2630 = vsub.s32 5, %v2629
    %v2631 = vrot.slane %v2606, %v2630
    %v2632 = vlaneseq
    %v2633 = vshrl.u32 %v2632, 7
    %v2634 = vsub.s32 6, %v2633
    %v2635 = vrot.slane %v2606, %v2634
    %v2636 = vlaneseq
    %v2637 = vshrl.u32 %v2636, 7
    %v2638 = vsub.s32 7, %v2637
    %v2639 = vrot.slane %v2606, %v2638
    %2648 = vmatprep.subr.mxu0 %v2095
    %2649 = vmatpush1.msra.mxu0 %v2094
    %2650 = vmatprep.subr.mxu0 %v2103
    %2651 = vmatpush1.msra.mxu0 %v2102
    %2652 = vmatprep.subr.mxu0 %v2111
    %2653 = vmatpush1.msra.mxu0 %v2110
    %2654 = vmatprep.subr.mxu0 %v2119
    %2655 = vmatpush1.msra.mxu0 %v2118
    %2656 = vmatprep.subr.mxu0 %v2127
    %2657 = vmatpush1.msra.mxu0 %v2126
    %2658 = vmatprep.subr.mxu0 %v2135
    %2659 = vmatpush1.msra.mxu0 %v2134
    %2660 = vmatprep.subr.mxu0 %v2143
    %2661 = vmatpush1.msra.mxu0 %v2142
    %2662 = vmatprep.subr.mxu0 %v2151
    %2663 = vmatpush1.msra.mxu0 %v2150
    %2664 = vmatprep.subr.mxu0 %v2159
    %2665 = vmatpush1.msra.mxu0 %v2158
    %2666 = vmatprep.subr.mxu0 %v2167
    %2667 = vmatpush1.msra.mxu0 %v2166
    %2668 = vmatprep.subr.mxu0 %v2175
    %2669 = vmatpush1.msra.mxu0 %v2174
    %2670 = vmatprep.subr.mxu0 %v2183
    %2671 = vmatpush1.msra.mxu0 %v2182
    %2672 = vmatprep.subr.mxu0 %v2191
    %2673 = vmatpush1.msra.mxu0 %v2190
    %2674 = vmatprep.subr.mxu0 %v2199
    %2675 = vmatpush1.msra.mxu0 %v2198
    %2676 = vmatprep.subr.mxu0 %v2207
    %2677 = vmatpush1.msra.mxu0 %v2206
    %2678 = vmatprep.subr.mxu0 %v2215
    %2679 = vmatpush1.msra.mxu0 %v2214
    %2680 = vmatprep.subr.mxu0 %v2223
    %2681 = vmatpush1.msra.mxu0 %v2222
    %2682 = vmatprep.subr.mxu0 %v2231
    %2683 = vmatpush1.msra.mxu0 %v2230
    %2684 = vmatprep.subr.mxu0 %v2239
    %2685 = vmatpush1.msra.mxu0 %v2238
    %2686 = vmatprep.subr.mxu0 %v2247
    %2687 = vmatpush1.msra.mxu0 %v2246
    %2688 = vmatprep.subr.mxu0 %v2255
    %2689 = vmatpush1.msra.mxu0 %v2254
    %2690 = vmatprep.subr.mxu0 %v2263
    %2691 = vmatpush1.msra.mxu0 %v2262
    %2692 = vmatprep.subr.mxu0 %v2271
    %2693 = vmatpush1.msra.mxu0 %v2270
    %2694 = vmatprep.subr.mxu0 %v2279
    %2695 = vmatpush1.msra.mxu0 %v2278
    %2696 = vmatprep.subr.mxu0 %v2287
    %2697 = vmatpush1.msra.mxu0 %v2286
    %2698 = vmatprep.subr.mxu0 %v2295
    %2699 = vmatpush1.msra.mxu0 %v2294
    %2700 = vmatprep.subr.mxu0 %v2303
    %2701 = vmatpush1.msra.mxu0 %v2302
    %2702 = vmatprep.subr.mxu0 %v2311
    %2703 = vmatpush1.msra.mxu0 %v2310
    %2704 = vmatprep.subr.mxu0 %v2319
    %2705 = vmatpush1.msra.mxu0 %v2318
    %2706 = vmatprep.subr.mxu0 %v2327
    %2707 = vmatpush1.msra.mxu0 %v2326
    %2708 = vmatprep.subr.mxu0 %v2335
    %2709 = vmatpush1.msra.mxu0 %v2334
    %2710 = vmatprep.subr.mxu0 %v2343
    %2711 = vmatpush1.msra.mxu0 %v2342
    %2712 = vmatprep.mubr.f32.mxu0 %v2091
    %2713 = vmatmul.mubr.f32.gmra.mrb[0].mxu0 %v2090
    %v2714 = vpop.f32.mrb[0].mxu0
    %v2715 = vadd.f32 %v2611, %v2714
    %v2716 = vpop.f32.mrb[0].mxu0
    %v2717 = vadd.f32 %v2615, %v2716
    %2718 = vdwg.mxu0
    %2719 = vmatprep.subr.mxu0 %v2351
    %2720 = vmatpush1.msra.mxu0 %v2350
    %2721 = vmatprep.subr.mxu0 %v2359
    %2722 = vmatpush1.msra.mxu0 %v2358
    %2723 = vmatprep.subr.mxu0 %v2367
    %2724 = vmatpush1.msra.mxu0 %v2366
    %2725 = vmatprep.subr.mxu0 %v2375
    %2726 = vmatpush1.msra.mxu0 %v2374
    %2727 = vmatprep.subr.mxu0 %v2383
    %2728 = vmatpush1.msra.mxu0 %v2382
    %2729 = vmatprep.subr.mxu0 %v2391
    %2730 = vmatpush1.msra.mxu0 %v2390
    %2731 = vmatprep.subr.mxu0 %v2399
    %2732 = vmatpush1.msra.mxu0 %v2398
    %2733 = vmatprep.subr.mxu0 %v2407
    %2734 = vmatpush1.msra.mxu0 %v2406
    %2735 = vmatprep.subr.mxu0 %v2415
    %2736 = vmatpush1.msra.mxu0 %v2414
    %2737 = vmatprep.subr.mxu0 %v2423
    %2738 = vmatpush1.msra.mxu0 %v2422
    %2739 = vmatprep.subr.mxu0 %v2431
    %2740 = vmatpush1.msra.mxu0 %v2430
    %2741 = vmatprep.subr.mxu0 %v2439
    %2742 = vmatpush1.msra.mxu0 %v2438
    %2743 = vmatprep.subr.mxu0 %v2447
    %2744 = vmatpush1.msra.mxu0 %v2446
    %2745 = vmatprep.subr.mxu0 %v2455
    %2746 = vmatpush1.msra.mxu0 %v2454
    %2747 = vmatprep.subr.mxu0 %v2463
    %2748 = vmatpush1.msra.mxu0 %v2462
    %2749 = vmatprep.subr.mxu0 %v2471
    %2750 = vmatpush1.msra.mxu0 %v2470
    %2751 = vmatprep.subr.mxu0 %v2479
    %2752 = vmatpush1.msra.mxu0 %v2478
    %2753 = vmatprep.subr.mxu0 %v2487
    %2754 = vmatpush1.msra.mxu0 %v2486
    %2755 = vmatprep.subr.mxu0 %v2495
    %2756 = vmatpush1.msra.mxu0 %v2494
    %2757 = vmatprep.subr.mxu0 %v2503
    %2758 = vmatpush1.msra.mxu0 %v2502
    %2759 = vmatprep.subr.mxu0 %v2511
    %2760 = vmatpush1.msra.mxu0 %v2510
    %2761 = vmatprep.subr.mxu0 %v2519
    %2762 = vmatpush1.msra.mxu0 %v2518
    %2763 = vmatprep.subr.mxu0 %v2527
    %2764 = vmatpush1.msra.mxu0 %v2526
    %2765 = vmatprep.subr.mxu0 %v2535
    %2766 = vmatpush1.msra.mxu0 %v2534
    %2767 = vmatprep.subr.mxu0 %v2543
    %2768 = vmatpush1.msra.mxu0 %v2542
    %2769 = vmatprep.subr.mxu0 %v2551
    %2770 = vmatpush1.msra.mxu0 %v2550
    %2771 = vmatprep.subr.mxu0 %v2559
    %2772 = vmatpush1.msra.mxu0 %v2558
    %2773 = vmatprep.subr.mxu0 %v2567
    %2774 = vmatpush1.msra.mxu0 %v2566
    %2775 = vmatprep.subr.mxu0 %v2575
    %2776 = vmatpush1.msra.mxu0 %v2574
    %2777 = vmatprep.subr.mxu0 %v2583
    %2778 = vmatpush1.msra.mxu0 %v2582
    %2779 = vmatprep.subr.mxu0 %v2591
    %2780 = vmatpush1.msra.mxu0 %v2590
    %2781 = vmatprep.subr.mxu0 %v2599
    %2782 = vmatpush1.msra.mxu0 %v2598
    %2783 = vmatprep.mubr.f32.mxu0 %v2093
    %2784 = vmatmul.mubr.f32.gmra.mrb[0].mxu0 %v2092
    %v2785 = vpop.f32.mrb[0].mxu0
    %v2786 = vadd.f32 %v2715, %v2785
    %v2787 = vpop.f32.mrb[0].mxu0
    %v2788 = vadd.f32 %v2717, %v2787
    %2789 = vdwg.mxu0
    %2790 = vmatprep.subr.mxu0 %v2097
    %2791 = vmatpush1.msra.mxu0 %v2096
    %2792 = vmatprep.subr.mxu0 %v2105
    %2793 = vmatpush1.msra.mxu0 %v2104
    %2794 = vmatprep.subr.mxu0 %v2113
    %2795 = vmatpush1.msra.mxu0 %v2112
    %2796 = vmatprep.subr.mxu0 %v2121
    %2797 = vmatpush1.msra.mxu0 %v2120
    %2798 = vmatprep.subr.mxu0 %v2129
    %2799 = vmatpush1.msra.mxu0 %v2128
    %2800 = vmatprep.subr.mxu0 %v2137
    %2801 = vmatpush1.msra.mxu0 %v2136
    %2802 = vmatprep.subr.mxu0 %v2145
    %2803 = vmatpush1.msra.mxu0 %v2144
    %2804 = vmatprep.subr.mxu0 %v2153
    %2805 = vmatpush1.msra.mxu0 %v2152
    %2806 = vmatprep.subr.mxu0 %v2161
    %2807 = vmatpush1.msra.mxu0 %v2160
    %2808 = vmatprep.subr.mxu0 %v2169
    %2809 = vmatpush1.msra.mxu0 %v2168
    %2810 = vmatprep.subr.mxu0 %v2177
    %2811 = vmatpush1.msra.mxu0 %v2176
    %2812 = vmatprep.subr.mxu0 %v2185
    %2813 = vmatpush1.msra.mxu0 %v2184
    %2814 = vmatprep.subr.mxu0 %v2193
    %2815 = vmatpush1.msra.mxu0 %v2192
    %2816 = vmatprep.subr.mxu0 %v2201
    %2817 = vmatpush1.msra.mxu0 %v2200
    %2818 = vmatprep.subr.mxu0 %v2209
    %2819 = vmatpush1.msra.mxu0 %v2208
    %2820 = vmatprep.subr.mxu0 %v2217
    %2821 = vmatpush1.msra.mxu0 %v2216
    %2822 = vmatprep.subr.mxu0 %v2225
    %2823 = vmatpush1.msra.mxu0 %v2224
    %2824 = vmatprep.subr.mxu0 %v2233
    %2825 = vmatpush1.msra.mxu0 %v2232
    %2826 = vmatprep.subr.mxu0 %v2241
    %2827 = vmatpush1.msra.mxu0 %v2240
    %2828 = vmatprep.subr.mxu0 %v2249
    %2829 = vmatpush1.msra.mxu0 %v2248
    %2830 = vmatprep.subr.mxu0 %v2257
    %2831 = vmatpush1.msra.mxu0 %v2256
    %2832 = vmatprep.subr.mxu0 %v2265
    %2833 = vmatpush1.msra.mxu0 %v2264
    %2834 = vmatprep.subr.mxu0 %v2273
    %2835 = vmatpush1.msra.mxu0 %v2272
    %2836 = vmatprep.subr.mxu0 %v2281
    %2837 = vmatpush1.msra.mxu0 %v2280
    %2838 = vmatprep.subr.mxu0 %v2289
    %2839 = vmatpush1.msra.mxu0 %v2288
    %2840 = vmatprep.subr.mxu0 %v2297
    %2841 = vmatpush1.msra.mxu0 %v2296
    %2842 = vmatprep.subr.mxu0 %v2305
    %2843 = vmatpush1.msra.mxu0 %v2304
    %2844 = vmatprep.subr.mxu0 %v2313
    %2845 = vmatpush1.msra.mxu0 %v2312
    %2846 = vmatprep.subr.mxu0 %v2321
    %2847 = vmatpush1.msra.mxu0 %v2320
    %2848 = vmatprep.subr.mxu0 %v2329
    %2849 = vmatpush1.msra.mxu0 %v2328
    %2850 = vmatprep.subr.mxu0 %v2337
    %2851 = vmatpush1.msra.mxu0 %v2336
    %2852 = vmatprep.subr.mxu0 %v2345
    %2853 = vmatpush1.msra.mxu0 %v2344
    %2854 = vmatprep.mubr.f32.mxu0 %v2091
    %2855 = vmatmul.mubr.f32.gmra.mrb[0].mxu0 %v2090
    %v2856 = vpop.f32.mrb[0].mxu0
    %v2857 = vadd.f32 %v2619, %v2856
    %v2858 = vpop.f32.mrb[0].mxu0
    %v2859 = vadd.f32 %v2623, %v2858
    %2860 = vdwg.mxu0
    %2861 = vmatprep.subr.mxu0 %v2353
    %2862 = vmatpush1.msra.mxu0 %v2352
    %2863 = vmatprep.subr.mxu0 %v2361
    %2864 = vmatpush1.msra.mxu0 %v2360
    %2865 = vmatprep.subr.mxu0 %v2369
    %2866 = vmatpush1.msra.mxu0 %v2368
    %2867 = vmatprep.subr.mxu0 %v2377
    %2868 = vmatpush1.msra.mxu0 %v2376
    %2869 = vmatprep.subr.mxu0 %v2385
    %2870 = vmatpush1.msra.mxu0 %v2384
    %2871 = vmatprep.subr.mxu0 %v2393
    %2872 = vmatpush1.msra.mxu0 %v2392
    %2873 = vmatprep.subr.mxu0 %v2401
    %2874 = vmatpush1.msra.mxu0 %v2400
    %2875 = vmatprep.subr.mxu0 %v2409
    %2876 = vmatpush1.msra.mxu0 %v2408
    %2877 = vmatprep.subr.mxu0 %v2417
    %2878 = vmatpush1.msra.mxu0 %v2416
    %2879 = vmatprep.subr.mxu0 %v2425
    %2880 = vmatpush1.msra.mxu0 %v2424
    %2881 = vmatprep.subr.mxu0 %v2433
    %2882 = vmatpush1.msra.mxu0 %v2432
    %2883 = vmatprep.subr.mxu0 %v2441
    %2884 = vmatpush1.msra.mxu0 %v2440
    %2885 = vmatprep.subr.mxu0 %v2449
    %2886 = vmatpush1.msra.mxu0 %v2448
    %2887 = vmatprep.subr.mxu0 %v2457
    %2888 = vmatpush1.msra.mxu0 %v2456
    %2889 = vmatprep.subr.mxu0 %v2465
    %2890 = vmatpush1.msra.mxu0 %v2464
    %2891 = vmatprep.subr.mxu0 %v2473
    %2892 = vmatpush1.msra.mxu0 %v2472
    %2893 = vmatprep.subr.mxu0 %v2481
    %2894 = vmatpush1.msra.mxu0 %v2480
    %2895 = vmatprep.subr.mxu0 %v2489
    %2896 = vmatpush1.msra.mxu0 %v2488
    %2897 = vmatprep.subr.mxu0 %v2497
    %2898 = vmatpush1.msra.mxu0 %v2496
    %2899 = vmatprep.subr.mxu0 %v2505
    %2900 = vmatpush1.msra.mxu0 %v2504
    %2901 = vmatprep.subr.mxu0 %v2513
    %2902 = vmatpush1.msra.mxu0 %v2512
    %2903 = vmatprep.subr.mxu0 %v2521
    %2904 = vmatpush1.msra.mxu0 %v2520
    %2905 = vmatprep.subr.mxu0 %v2529
    %2906 = vmatpush1.msra.mxu0 %v2528
    %2907 = vmatprep.subr.mxu0 %v2537
    %2908 = vmatpush1.msra.mxu0 %v2536
    %2909 = vmatprep.subr.mxu0 %v2545
    %2910 = vmatpush1.msra.mxu0 %v2544
    %2911 = vmatprep.subr.mxu0 %v2553
    %2912 = vmatpush1.msra.mxu0 %v2552
    %2913 = vmatprep.subr.mxu0 %v2561
    %2914 = vmatpush1.msra.mxu0 %v2560
    %2915 = vmatprep.subr.mxu0 %v2569
    %2916 = vmatpush1.msra.mxu0 %v2568
    %2917 = vmatprep.subr.mxu0 %v2577
    %2918 = vmatpush1.msra.mxu0 %v2576
    %2919 = vmatprep.subr.mxu0 %v2585
    %2920 = vmatpush1.msra.mxu0 %v2584
    %2921 = vmatprep.subr.mxu0 %v2593
    %2922 = vmatpush1.msra.mxu0 %v2592
    %2923 = vmatprep.subr.mxu0 %v2601
    %2924 = vmatpush1.msra.mxu0 %v2600
    %2925 = vmatprep.mubr.f32.mxu0 %v2093
    %2926 = vmatmul.mubr.f32.gmra.mrb[0].mxu0 %v2092
    %v2927 = vpop.f32.mrb[0].mxu0
    %v2928 = vadd.f32 %v2857, %v2927
    %v2929 = vpop.f32.mrb[0].mxu0
    %v2930 = vadd.f32 %v2859, %v2929
    %2931 = vdwg.mxu0
    %2932 = vmatprep.subr.mxu0 %v2099
    %2933 = vmatpush1.msra.mxu0 %v2098
    %2934 = vmatprep.subr.mxu0 %v2107
    %2935 = vmatpush1.msra.mxu0 %v2106
    %2936 = vmatprep.subr.mxu0 %v2115
    %2937 = vmatpush1.msra.mxu0 %v2114
    %2938 = vmatprep.subr.mxu0 %v2123
    %2939 = vmatpush1.msra.mxu0 %v2122
    %2940 = vmatprep.subr.mxu0 %v2131
    %2941 = vmatpush1.msra.mxu0 %v2130
    %2942 = vmatprep.subr.mxu0 %v2139
    %2943 = vmatpush1.msra.mxu0 %v2138
    %2944 = vmatprep.subr.mxu0 %v2147
    %2945 = vmatpush1.msra.mxu0 %v2146
    %2946 = vmatprep.subr.mxu0 %v2155
    %2947 = vmatpush1.msra.mxu0 %v2154
    %2948 = vmatprep.subr.mxu0 %v2163
    %2949 = vmatpush1.msra.mxu0 %v2162
    %2950 = vmatprep.subr.mxu0 %v2171
    %2951 = vmatpush1.msra.mxu0 %v2170
    %2952 = vmatprep.subr.mxu0 %v2179
    %2953 = vmatpush1.msra.mxu0 %v2178
    %2954 = vmatprep.subr.mxu0 %v2187
    %2955 = vmatpush1.msra.mxu0 %v2186
    %2956 = vmatprep.subr.mxu0 %v2195
    %2957 = vmatpush1.msra.mxu0 %v2194
    %2958 = vmatprep.subr.mxu0 %v2203
    %2959 = vmatpush1.msra.mxu0 %v2202
    %2960 = vmatprep.subr.mxu0 %v2211
    %2961 = vmatpush1.msra.mxu0 %v2210
    %2962 = vmatprep.subr.mxu0 %v2219
    %2963 = vmatpush1.msra.mxu0 %v2218
    %2964 = vmatprep.subr.mxu0 %v2227
    %2965 = vmatpush1.msra.mxu0 %v2226
    %2966 = vmatprep.subr.mxu0 %v2235
    %2967 = vmatpush1.msra.mxu0 %v2234
    %2968 = vmatprep.subr.mxu0 %v2243
    %2969 = vmatpush1.msra.mxu0 %v2242
    %2970 = vmatprep.subr.mxu0 %v2251
    %2971 = vmatpush1.msra.mxu0 %v2250
    %2972 = vmatprep.subr.mxu0 %v2259
    %2973 = vmatpush1.msra.mxu0 %v2258
    %2974 = vmatprep.subr.mxu0 %v2267
    %2975 = vmatpush1.msra.mxu0 %v2266
    %2976 = vmatprep.subr.mxu0 %v2275
    %2977 = vmatpush1.msra.mxu0 %v2274
    %2978 = vmatprep.subr.mxu0 %v2283
    %2979 = vmatpush1.msra.mxu0 %v2282
    %2980 = vmatprep.subr.mxu0 %v2291
    %2981 = vmatpush1.msra.mxu0 %v2290
    %2982 = vmatprep.subr.mxu0 %v2299
    %2983 = vmatpush1.msra.mxu0 %v2298
    %2984 = vmatprep.subr.mxu0 %v2307
    %2985 = vmatpush1.msra.mxu0 %v2306
    %2986 = vmatprep.subr.mxu0 %v2315
    %2987 = vmatpush1.msra.mxu0 %v2314
    %2988 = vmatprep.subr.mxu0 %v2323
    %2989 = vmatpush1.msra.mxu0 %v2322
    %2990 = vmatprep.subr.mxu0 %v2331
    %2991 = vmatpush1.msra.mxu0 %v2330
    %2992 = vmatprep.subr.mxu0 %v2339
    %2993 = vmatpush1.msra.mxu0 %v2338
    %2994 = vmatprep.subr.mxu0 %v2347
    %2995 = vmatpush1.msra.mxu0 %v2346
    %2996 = vmatprep.mubr.f32.mxu0 %v2091
    %2997 = vmatmul.mubr.f32.gmra.mrb[0].mxu0 %v2090
    %v2998 = vpop.f32.mrb[0].mxu0
    %v2999 = vadd.f32 %v2627, %v2998
    %v3000 = vpop.f32.mrb[0].mxu0
    %v3001 = vadd.f32 %v2631, %v3000
    %3002 = vdwg.mxu0
    %3003 = vmatprep.subr.mxu0 %v2355
    %3004 = vmatpush1.msra.mxu0 %v2354
    %3005 = vmatprep.subr.mxu0 %v2363
    %3006 = vmatpush1.msra.mxu0 %v2362
    %3007 = vmatprep.subr.mxu0 %v2371
    %3008 = vmatpush1.msra.mxu0 %v2370
    %3009 = vmatprep.subr.mxu0 %v2379
    %3010 = vmatpush1.msra.mxu0 %v2378
    %3011 = vmatprep.subr.mxu0 %v2387
    %3012 = vmatpush1.msra.mxu0 %v2386
    %3013 = vmatprep.subr.mxu0 %v2395
    %3014 = vmatpush1.msra.mxu0 %v2394
    %3015 = vmatprep.subr.mxu0 %v2403
    %3016 = vmatpush1.msra.mxu0 %v2402
    %3017 = vmatprep.subr.mxu0 %v2411
    %3018 = vmatpush1.msra.mxu0 %v2410
    %3019 = vmatprep.subr.mxu0 %v2419
    %3020 = vmatpush1.msra.mxu0 %v2418
    %3021 = vmatprep.subr.mxu0 %v2427
    %3022 = vmatpush1.msra.mxu0 %v2426
    %3023 = vmatprep.subr.mxu0 %v2435
    %3024 = vmatpush1.msra.mxu0 %v2434
    %3025 = vmatprep.subr.mxu0 %v2443
    %3026 = vmatpush1.msra.mxu0 %v2442
    %3027 = vmatprep.subr.mxu0 %v2451
    %3028 = vmatpush1.msra.mxu0 %v2450
    %3029 = vmatprep.subr.mxu0 %v2459
    %3030 = vmatpush1.msra.mxu0 %v2458
    %3031 = vmatprep.subr.mxu0 %v2467
    %3032 = vmatpush1.msra.mxu0 %v2466
    %3033 = vmatprep.subr.mxu0 %v2475
    %3034 = vmatpush1.msra.mxu0 %v2474
    %3035 = vmatprep.subr.mxu0 %v2483
    %3036 = vmatpush1.msra.mxu0 %v2482
    %3037 = vmatprep.subr.mxu0 %v2491
    %3038 = vmatpush1.msra.mxu0 %v2490
    %3039 = vmatprep.subr.mxu0 %v2499
    %3040 = vmatpush1.msra.mxu0 %v2498
    %3041 = vmatprep.subr.mxu0 %v2507
    %3042 = vmatpush1.msra.mxu0 %v2506
    %3043 = vmatprep.subr.mxu0 %v2515
    %3044 = vmatpush1.msra.mxu0 %v2514
    %3045 = vmatprep.subr.mxu0 %v2523
    %3046 = vmatpush1.msra.mxu0 %v2522
    %3047 = vmatprep.subr.mxu0 %v2531
    %3048 = vmatpush1.msra.mxu0 %v2530
    %3049 = vmatprep.subr.mxu0 %v2539
    %3050 = vmatpush1.msra.mxu0 %v2538
    %3051 = vmatprep.subr.mxu0 %v2547
    %3052 = vmatpush1.msra.mxu0 %v2546
    %3053 = vmatprep.subr.mxu0 %v2555
    %3054 = vmatpush1.msra.mxu0 %v2554
    %3055 = vmatprep.subr.mxu0 %v2563
    %3056 = vmatpush1.msra.mxu0 %v2562
    %3057 = vmatprep.subr.mxu0 %v2571
    %3058 = vmatpush1.msra.mxu0 %v2570
    %3059 = vmatprep.subr.mxu0 %v2579
    %3060 = vmatpush1.msra.mxu0 %v2578
    %3061 = vmatprep.subr.mxu0 %v2587
    %3062 = vmatpush1.msra.mxu0 %v2586
    %3063 = vmatprep.subr.mxu0 %v2595
    %3064 = vmatpush1.msra.mxu0 %v2594
    %3065 = vmatprep.subr.mxu0 %v2603
    %3066 = vmatpush1.msra.mxu0 %v2602
    %3067 = vmatprep.mubr.f32.mxu0 %v2093
    %3068 = vmatmul.mubr.f32.gmra.mrb[0].mxu0 %v2092
    %v3069 = vpop.f32.mrb[0].mxu0
    %v3070 = vadd.f32 %v2999, %v3069
    %v3071 = vpop.f32.mrb[0].mxu0
    %v3072 = vadd.f32 %v3001, %v3071
    %3073 = vdwg.mxu0
    %3074 = vmatprep.subr.mxu0 %v2101
    %3075 = vmatpush1.msra.mxu0 %v2100
    %3076 = vmatprep.subr.mxu0 %v2109
    %3077 = vmatpush1.msra.mxu0 %v2108
    %3078 = vmatprep.subr.mxu0 %v2117
    %3079 = vmatpush1.msra.mxu0 %v2116
    %3080 = vmatprep.subr.mxu0 %v2125
    %3081 = vmatpush1.msra.mxu0 %v2124
    %3082 = vmatprep.subr.mxu0 %v2133
    %3083 = vmatpush1.msra.mxu0 %v2132
    %3084 = vmatprep.subr.mxu0 %v2141
    %3085 = vmatpush1.msra.mxu0 %v2140
    %3086 = vmatprep.subr.mxu0 %v2149
    %3087 = vmatpush1.msra.mxu0 %v2148
    %3088 = vmatprep.subr.mxu0 %v2157
    %3089 = vmatpush1.msra.mxu0 %v2156
    %3090 = vmatprep.subr.mxu0 %v2165
    %3091 = vmatpush1.msra.mxu0 %v2164
    %3092 = vmatprep.subr.mxu0 %v2173
    %3093 = vmatpush1.msra.mxu0 %v2172
    %3094 = vmatprep.subr.mxu0 %v2181
    %3095 = vmatpush1.msra.mxu0 %v2180
    %3096 = vmatprep.subr.mxu0 %v2189
    %3097 = vmatpush1.msra.mxu0 %v2188
    %3098 = vmatprep.subr.mxu0 %v2197
    %3099 = vmatpush1.msra.mxu0 %v2196
    %3100 = vmatprep.subr.mxu0 %v2205
    %3101 = vmatpush1.msra.mxu0 %v2204
    %3102 = vmatprep.subr.mxu0 %v2213
    %3103 = vmatpush1.msra.mxu0 %v2212
    %3104 = vmatprep.subr.mxu0 %v2221
    %3105 = vmatpush1.msra.mxu0 %v2220
    %3106 = vmatprep.subr.mxu0 %v2229
    %3107 = vmatpush1.msra.mxu0 %v2228
    %3108 = vmatprep.subr.mxu0 %v2237
    %3109 = vmatpush1.msra.mxu0 %v2236
    %3110 = vmatprep.subr.mxu0 %v2245
    %3111 = vmatpush1.msra.mxu0 %v2244
    %3112 = vmatprep.subr.mxu0 %v2253
    %3113 = vmatpush1.msra.mxu0 %v2252
    %3114 = vmatprep.subr.mxu0 %v2261
    %3115 = vmatpush1.msra.mxu0 %v2260
    %3116 = vmatprep.subr.mxu0 %v2269
    %3117 = vmatpush1.msra.mxu0 %v2268
    %3118 = vmatprep.subr.mxu0 %v2277
    %3119 = vmatpush1.msra.mxu0 %v2276
    %3120 = vmatprep.subr.mxu0 %v2285
    %3121 = vmatpush1.msra.mxu0 %v2284
    %3122 = vmatprep.subr.mxu0 %v2293
    %3123 = vmatpush1.msra.mxu0 %v2292
    %3124 = vmatprep.subr.mxu0 %v2301
    %3125 = vmatpush1.msra.mxu0 %v2300
    %3126 = vmatprep.subr.mxu0 %v2309
    %3127 = vmatpush1.msra.mxu0 %v2308
    %3128 = vmatprep.subr.mxu0 %v2317
    %3129 = vmatpush1.msra.mxu0 %v2316
    %3130 = vmatprep.subr.mxu0 %v2325
    %3131 = vmatpush1.msra.mxu0 %v2324
    %3132 = vmatprep.subr.mxu0 %v2333
    %3133 = vmatpush1.msra.mxu0 %v2332
    %3134 = vmatprep.subr.mxu0 %v2341
    %3135 = vmatpush1.msra.mxu0 %v2340
    %3136 = vmatprep.subr.mxu0 %v2349
    %3137 = vmatpush1.msra.mxu0 %v2348
    %3138 = vmatprep.mubr.f32.mxu0 %v2091
    %3139 = vmatmul.mubr.f32.gmra.mrb[0].mxu0 %v2090
    %v3140 = vpop.f32.mrb[0].mxu0
    %v3141 = vadd.f32 %v2635, %v3140
    %v3142 = vpop.f32.mrb[0].mxu0
    %v3143 = vadd.f32 %v2639, %v3142
    %3144 = vdwg.mxu0
    %3145 = vmatprep.subr.mxu0 %v2357
    %3146 = vmatpush1.msra.mxu0 %v2356
    %3147 = vmatprep.subr.mxu0 %v2365
    %3148 = vmatpush1.msra.mxu0 %v2364
    %3149 = vmatprep.subr.mxu0 %v2373
    %3150 = vmatpush1.msra.mxu0 %v2372
    %3151 = vmatprep.subr.mxu0 %v2381
    %3152 = vmatpush1.msra.mxu0 %v2380
    %3153 = vmatprep.subr.mxu0 %v2389
    %3154 = vmatpush1.msra.mxu0 %v2388
    %3155 = vmatprep.subr.mxu0 %v2397
    %3156 = vmatpush1.msra.mxu0 %v2396
    %3157 = vmatprep.subr.mxu0 %v2405
    %3158 = vmatpush1.msra.mxu0 %v2404
    %3159 = vmatprep.subr.mxu0 %v2413
    %3160 = vmatpush1.msra.mxu0 %v2412
    %3161 = vmatprep.subr.mxu0 %v2421
    %3162 = vmatpush1.msra.mxu0 %v2420
    %3163 = vmatprep.subr.mxu0 %v2429
    %3164 = vmatpush1.msra.mxu0 %v2428
    %3165 = vmatprep.subr.mxu0 %v2437
    %3166 = vmatpush1.msra.mxu0 %v2436
    %3167 = vmatprep.subr.mxu0 %v2445
    %3168 = vmatpush1.msra.mxu0 %v2444
    %3169 = vmatprep.subr.mxu0 %v2453
    %3170 = vmatpush1.msra.mxu0 %v2452
    %3171 = vmatprep.subr.mxu0 %v2461
    %3172 = vmatpush1.msra.mxu0 %v2460
    %3173 = vmatprep.subr.mxu0 %v2469
    %3174 = vmatpush1.msra.mxu0 %v2468
    %3175 = vmatprep.subr.mxu0 %v2477
    %3176 = vmatpush1.msra.mxu0 %v2476
    %3177 = vmatprep.subr.mxu0 %v2485
    %3178 = vmatpush1.msra.mxu0 %v2484
    %3179 = vmatprep.subr.mxu0 %v2493
    %3180 = vmatpush1.msra.mxu0 %v2492
    %3181 = vmatprep.subr.mxu0 %v2501
    %3182 = vmatpush1.msra.mxu0 %v2500
    %3183 = vmatprep.subr.mxu0 %v2509
    %3184 = vmatpush1.msra.mxu0 %v2508
    %3185 = vmatprep.subr.mxu0 %v2517
    %3186 = vmatpush1.msra.mxu0 %v2516
    %3187 = vmatprep.subr.mxu0 %v2525
    %3188 = vmatpush1.msra.mxu0 %v2524
    %3189 = vmatprep.subr.mxu0 %v2533
    %3190 = vmatpush1.msra.mxu0 %v2532
    %3191 = vmatprep.subr.mxu0 %v2541
    %3192 = vmatpush1.msra.mxu0 %v2540
    %3193 = vmatprep.subr.mxu0 %v2549
    %3194 = vmatpush1.msra.mxu0 %v2548
    %3195 = vmatprep.subr.mxu0 %v2557
    %3196 = vmatpush1.msra.mxu0 %v2556
    %3197 = vmatprep.subr.mxu0 %v2565
    %3198 = vmatpush1.msra.mxu0 %v2564
    %3199 = vmatprep.subr.mxu0 %v2573
    %3200 = vmatpush1.msra.mxu0 %v2572
    %3201 = vmatprep.subr.mxu0 %v2581
    %3202 = vmatpush1.msra.mxu0 %v2580
    %3203 = vmatprep.subr.mxu0 %v2589
    %3204 = vmatpush1.msra.mxu0 %v2588
    %3205 = vmatprep.subr.mxu0 %v2597
    %3206 = vmatpush1.msra.mxu0 %v2596
    %3207 = vmatprep.subr.mxu0 %v2605
    %3208 = vmatpush1.msra.mxu0 %v2604
    %3209 = vmatprep.mubr.f32.mxu0 %v2093
    %3210 = vmatmul.mubr.f32.gmra.mrb[0].mxu0 %v2092
    %v3211 = vpop.f32.mrb[0].mxu0
    %v3212 = vadd.f32 %v3141, %v3211
    %v3213 = vpop.f32.mrb[0].mxu0
    %v3214 = vadd.f32 %v3143, %v3213
    %3215 = vdwg.mxu0
    %v3216 = vld [vmem:[#allocation20] sm:$0xff]
    %v3217 = vld [vmem:[#allocation20 + $0x8] sm:$0xff]
    %v3218 = vld [vmem:[#allocation20 + $0x10] sm:$0xff]
    %v3219 = vld [vmem:[#allocation20 + $0x18] sm:$0xff]
    %v3220 = vld [vmem:[#allocation20 + $0x20] sm:$0xff]
    %v3221 = vld [vmem:[#allocation20 + $0x28] sm:$0xff]
    %v3222 = vld [vmem:[#allocation20 + $0x30] sm:$0xff]
    %v3223 = vld [vmem:[#allocation20 + $0x38] sm:$0xff]
    %v3224 = vld [vmem:[#allocation20 + $0x40] sm:$0xff]
    %v3225 = vld [vmem:[#allocation20 + $0x48] sm:$0xff]
    %v3226 = vld [vmem:[#allocation20 + $0x50] sm:$0xff]
    %v3227 = vld [vmem:[#allocation20 + $0x58] sm:$0xff]
    %v3228 = vld [vmem:[#allocation20 + $0x60] sm:$0xff]
    %v3229 = vld [vmem:[#allocation20 + $0x68] sm:$0xff]
    %v3230 = vld [vmem:[#allocation20 + $0x70] sm:$0xff]
    %v3231 = vld [vmem:[#allocation20 + $0x78] sm:$0xff]
    %v3232 = vld [vmem:[#allocation20 + $0x80] sm:$0xff]
    %v3233 = vld [vmem:[#allocation20 + $0x88] sm:$0xff]
    %v3234 = vld [vmem:[#allocation20 + $0x90] sm:$0xff]
    %v3235 = vld [vmem:[#allocation20 + $0x98] sm:$0xff]
    %v3236 = vld [vmem:[#allocation20 + $0xa0] sm:$0xff]
    %v3237 = vld [vmem:[#allocation20 + $0xa8] sm:$0xff]
    %v3238 = vld [vmem:[#allocation20 + $0xb0] sm:$0xff]
    %v3239 = vld [vmem:[#allocation20 + $0xb8] sm:$0xff]
    %v3240 = vld [vmem:[#allocation20 + $0xc0] sm:$0xff]
    %v3241 = vld [vmem:[#allocation20 + $0xc8] sm:$0xff]
    %v3242 = vld [vmem:[#allocation20 + $0xd0] sm:$0xff]
    %v3243 = vld [vmem:[#allocation20 + $0xd8] sm:$0xff]
    %v3244 = vld [vmem:[#allocation20 + $0xe0] sm:$0xff]
    %v3245 = vld [vmem:[#allocation20 + $0xe8] sm:$0xff]
    %v3246 = vld [vmem:[#allocation20 + $0xf0] sm:$0xff]
    %v3247 = vld [vmem:[#allocation20 + $0xf8] sm:$0xff]
    %v3248 = vld [vmem:[#allocation20 + $0x100] sm:$0xff]
    %v3249 = vld [vmem:[#allocation20 + $0x108] sm:$0xff]
    %v3250 = vld [vmem:[#allocation20 + $0x110] sm:$0xff]
    %v3251 = vld [vmem:[#allocation20 + $0x118] sm:$0xff]
    %v3252 = vld [vmem:[#allocation20 + $0x120] sm:$0xff]
    %v3253 = vld [vmem:[#allocation20 + $0x128] sm:$0xff]
    %v3254 = vld [vmem:[#allocation20 + $0x130] sm:$0xff]
    %v3255 = vld [vmem:[#allocation20 + $0x138] sm:$0xff]
    %v3256 = vld [vmem:[#allocation20 + $0x140] sm:$0xff]
    %v3257 = vld [vmem:[#allocation20 + $0x148] sm:$0xff]
    %v3258 = vld [vmem:[#allocation20 + $0x150] sm:$0xff]
    %v3259 = vld [vmem:[#allocation20 + $0x158] sm:$0xff]
    %v3260 = vld [vmem:[#allocation20 + $0x160] sm:$0xff]
    %v3261 = vld [vmem:[#allocation20 + $0x168] sm:$0xff]
    %v3262 = vld [vmem:[#allocation20 + $0x170] sm:$0xff]
    %v3263 = vld [vmem:[#allocation20 + $0x178] sm:$0xff]
    %v3264 = vld [vmem:[#allocation20 + $0x180] sm:$0xff]
    %v3265 = vld [vmem:[#allocation20 + $0x188] sm:$0xff]
    %v3266 = vld [vmem:[#allocation20 + $0x190] sm:$0xff]
    %v3267 = vld [vmem:[#allocation20 + $0x198] sm:$0xff]
    %v3268 = vld [vmem:[#allocation20 + $0x1a0] sm:$0xff]
    %v3269 = vld [vmem:[#allocation20 + $0x1a8] sm:$0xff]
    %v3270 = vld [vmem:[#allocation20 + $0x1b0] sm:$0xff]
    %v3271 = vld [vmem:[#allocation20 + $0x1b8] sm:$0xff]
    %v3272 = vld [vmem:[#allocation20 + $0x1c0] sm:$0xff]
    %v3273 = vld [vmem:[#allocation20 + $0x1c8] sm:$0xff]
    %v3274 = vld [vmem:[#allocation20 + $0x1d0] sm:$0xff]
    %v3275 = vld [vmem:[#allocation20 + $0x1d8] sm:$0xff]
    %v3276 = vld [vmem:[#allocation20 + $0x1e0] sm:$0xff]
    %v3277 = vld [vmem:[#allocation20 + $0x1e8] sm:$0xff]
    %v3278 = vld [vmem:[#allocation20 + $0x1f0] sm:$0xff]
    %v3279 = vld [vmem:[#allocation20 + $0x1f8] sm:$0xff]
    %v3280 = vld [vmem:[#allocation20 + $0x200] sm:$0xff]
    %v3281 = vld [vmem:[#allocation20 + $0x208] sm:$0xff]
    %v3282 = vld [vmem:[#allocation20 + $0x210] sm:$0xff]
    %v3283 = vld [vmem:[#allocation20 + $0x218] sm:$0xff]
    %v3284 = vld [vmem:[#allocation20 + $0x220] sm:$0xff]
    %v3285 = vld [vmem:[#allocation20 + $0x228] sm:$0xff]
    %v3286 = vld [vmem:[#allocation20 + $0x230] sm:$0xff]
    %v3287 = vld [vmem:[#allocation20 + $0x238] sm:$0xff]
    %v3288 = vld [vmem:[#allocation20 + $0x240] sm:$0xff]
    %v3289 = vld [vmem:[#allocation20 + $0x248] sm:$0xff]
    %v3290 = vld [vmem:[#allocation20 + $0x250] sm:$0xff]
    %v3291 = vld [vmem:[#allocation20 + $0x258] sm:$0xff]
    %v3292 = vld [vmem:[#allocation20 + $0x260] sm:$0xff]
    %v3293 = vld [vmem:[#allocation20 + $0x268] sm:$0xff]
    %v3294 = vld [vmem:[#allocation20 + $0x270] sm:$0xff]
    %v3295 = vld [vmem:[#allocation20 + $0x278] sm:$0xff]
    %v3296 = vld [vmem:[#allocation20 + $0x280] sm:$0xff]
    %v3297 = vld [vmem:[#allocation20 + $0x288] sm:$0xff]
    %v3298 = vld [vmem:[#allocation20 + $0x290] sm:$0xff]
    %v3299 = vld [vmem:[#allocation20 + $0x298] sm:$0xff]
    %v3300 = vld [vmem:[#allocation20 + $0x2a0] sm:$0xff]
    %v3301 = vld [vmem:[#allocation20 + $0x2a8] sm:$0xff]
    %v3302 = vld [vmem:[#allocation20 + $0x2b0] sm:$0xff]
    %v3303 = vld [vmem:[#allocation20 + $0x2b8] sm:$0xff]
    %v3304 = vld [vmem:[#allocation20 + $0x2c0] sm:$0xff]
    %v3305 = vld [vmem:[#allocation20 + $0x2c8] sm:$0xff]
    %v3306 = vld [vmem:[#allocation20 + $0x2d0] sm:$0xff]
    %v3307 = vld [vmem:[#allocation20 + $0x2d8] sm:$0xff]
    %v3308 = vld [vmem:[#allocation20 + $0x2e0] sm:$0xff]
    %v3309 = vld [vmem:[#allocation20 + $0x2e8] sm:$0xff]
    %v3310 = vld [vmem:[#allocation20 + $0x2f0] sm:$0xff]
    %v3311 = vld [vmem:[#allocation20 + $0x2f8] sm:$0xff]
    %v3312 = vld [vmem:[#allocation20 + $0x300] sm:$0xff]
    %v3313 = vld [vmem:[#allocation20 + $0x308] sm:$0xff]
    %v3314 = vld [vmem:[#allocation20 + $0x310] sm:$0xff]
    %v3315 = vld [vmem:[#allocation20 + $0x318] sm:$0xff]
    %v3316 = vld [vmem:[#allocation20 + $0x320] sm:$0xff]
    %v3317 = vld [vmem:[#allocation20 + $0x328] sm:$0xff]
    %v3318 = vld [vmem:[#allocation20 + $0x330] sm:$0xff]
    %v3319 = vld [vmem:[#allocation20 + $0x338] sm:$0xff]
    %v3320 = vld [vmem:[#allocation20 + $0x340] sm:$0xff]
    %v3321 = vld [vmem:[#allocation20 + $0x348] sm:$0xff]
    %v3322 = vld [vmem:[#allocation20 + $0x350] sm:$0xff]
    %v3323 = vld [vmem:[#allocation20 + $0x358] sm:$0xff]
    %v3324 = vld [vmem:[#allocation20 + $0x360] sm:$0xff]
    %v3325 = vld [vmem:[#allocation20 + $0x368] sm:$0xff]
    %v3326 = vld [vmem:[#allocation20 + $0x370] sm:$0xff]
    %v3327 = vld [vmem:[#allocation20 + $0x378] sm:$0xff]
    %v3328 = vld [vmem:[#allocation20 + $0x380] sm:$0xff]
    %v3329 = vld [vmem:[#allocation20 + $0x388] sm:$0xff]
    %v3330 = vld [vmem:[#allocation20 + $0x390] sm:$0xff]
    %v3331 = vld [vmem:[#allocation20 + $0x398] sm:$0xff]
    %v3332 = vld [vmem:[#allocation20 + $0x3a0] sm:$0xff]
    %v3333 = vld [vmem:[#allocation20 + $0x3a8] sm:$0xff]
    %v3334 = vld [vmem:[#allocation20 + $0x3b0] sm:$0xff]
    %v3335 = vld [vmem:[#allocation20 + $0x3b8] sm:$0xff]
    %v3336 = vld [vmem:[#allocation20 + $0x3c0] sm:$0xff]
    %v3337 = vld [vmem:[#allocation20 + $0x3c8] sm:$0xff]
    %v3338 = vld [vmem:[#allocation20 + $0x3d0] sm:$0xff]
    %v3339 = vld [vmem:[#allocation20 + $0x3d8] sm:$0xff]
    %v3340 = vld [vmem:[#allocation20 + $0x3e0] sm:$0xff]
    %v3341 = vld [vmem:[#allocation20 + $0x3e8] sm:$0xff]
    %v3342 = vld [vmem:[#allocation20 + $0x3f0] sm:$0xff]
    %v3343 = vld [vmem:[#allocation20 + $0x3f8] sm:$0xff]
    %v3344 = vld [vmem:[#allocation22] sm:$0x1]
    %v3346 = vlaneseq
    %v3347 = vshrl.u32 %v3346, 7
    %v3348 = vsub.s32 0, %v3347
    %v3349 = vrot.slane %v3344, %v3348
    %3351 = vmatprep.subr.mxu0 0.0
    %3352 = vmatpush1.msra.mxu0 %v3216
    %3353 = vmatprep.subr.mxu0 0.0
    %3354 = vmatpush1.msra.mxu0 %v3217
    %3355 = vmatprep.subr.mxu0 0.0
    %3356 = vmatpush1.msra.mxu0 %v3218
    %3357 = vmatprep.subr.mxu0 0.0
    %3358 = vmatpush1.msra.mxu0 %v3219
    %3359 = vmatprep.subr.mxu0 0.0
    %3360 = vmatpush1.msra.mxu0 %v3220
    %3361 = vmatprep.subr.mxu0 0.0
    %3362 = vmatpush1.msra.mxu0 %v3221
    %3363 = vmatprep.subr.mxu0 0.0
    %3364 = vmatpush1.msra.mxu0 %v3222
    %3365 = vmatprep.subr.mxu0 0.0
    %3366 = vmatpush1.msra.mxu0 %v3223
    %3367 = vmatprep.subr.mxu0 0.0
    %3368 = vmatpush1.msra.mxu0 %v3224
    %3369 = vmatprep.subr.mxu0 0.0
    %3370 = vmatpush1.msra.mxu0 %v3225
    %3371 = vmatprep.subr.mxu0 0.0
    %3372 = vmatpush1.msra.mxu0 %v3226
    %3373 = vmatprep.subr.mxu0 0.0
    %3374 = vmatpush1.msra.mxu0 %v3227
    %3375 = vmatprep.subr.mxu0 0.0
    %3376 = vmatpush1.msra.mxu0 %v3228
    %3377 = vmatprep.subr.mxu0 0.0
    %3378 = vmatpush1.msra.mxu0 %v3229
    %3379 = vmatprep.subr.mxu0 0.0
    %3380 = vmatpush1.msra.mxu0 %v3230
    %3381 = vmatprep.subr.mxu0 0.0
    %3382 = vmatpush1.msra.mxu0 %v3231
    %3383 = vmatprep.subr.mxu0 0.0
    %3384 = vmatpush1.msra.mxu0 %v3232
    %3385 = vmatprep.subr.mxu0 0.0
    %3386 = vmatpush1.msra.mxu0 %v3233
    %3387 = vmatprep.subr.mxu0 0.0
    %3388 = vmatpush1.msra.mxu0 %v3234
    %3389 = vmatprep.subr.mxu0 0.0
    %3390 = vmatpush1.msra.mxu0 %v3235
    %3391 = vmatprep.subr.mxu0 0.0
    %3392 = vmatpush1.msra.mxu0 %v3236
    %3393 = vmatprep.subr.mxu0 0.0
    %3394 = vmatpush1.msra.mxu0 %v3237
    %3395 = vmatprep.subr.mxu0 0.0
    %3396 = vmatpush1.msra.mxu0 %v3238
    %3397 = vmatprep.subr.mxu0 0.0
    %3398 = vmatpush1.msra.mxu0 %v3239
    %3399 = vmatprep.subr.mxu0 0.0
    %3400 = vmatpush1.msra.mxu0 %v3240
    %3401 = vmatprep.subr.mxu0 0.0
    %3402 = vmatpush1.msra.mxu0 %v3241
    %3403 = vmatprep.subr.mxu0 0.0
    %3404 = vmatpush1.msra.mxu0 %v3242
    %3405 = vmatprep.subr.mxu0 0.0
    %3406 = vmatpush1.msra.mxu0 %v3243
    %3407 = vmatprep.subr.mxu0 0.0
    %3408 = vmatpush1.msra.mxu0 %v3244
    %3409 = vmatprep.subr.mxu0 0.0
    %3410 = vmatpush1.msra.mxu0 %v3245
    %3411 = vmatprep.subr.mxu0 0.0
    %3412 = vmatpush1.msra.mxu0 %v3246
    %3413 = vmatprep.subr.mxu0 0.0
    %3414 = vmatpush1.msra.mxu0 %v3247
    %3415 = vmatprep.mubr.f32.mxu0 %v2788
    %3416 = vmatmul.mubr.f32.gmra.mrb[0].mxu0 %v2786
    %v3417 = vpop.f32.mrb[0].mxu0
    %v3418 = vadd.f32 %v3349, %v3417
    %v3419 = vpop.f32.mrb[0].mxu0
    %3420 = vdwg.mxu0
    %3421 = vmatprep.subr.mxu0 0.0
    %3422 = vmatpush1.msra.mxu0 %v3248
    %3423 = vmatprep.subr.mxu0 0.0
    %3424 = vmatpush1.msra.mxu0 %v3249
    %3425 = vmatprep.subr.mxu0 0.0
    %3426 = vmatpush1.msra.mxu0 %v3250
    %3427 = vmatprep.subr.mxu0 0.0
    %3428 = vmatpush1.msra.mxu0 %v3251
    %3429 = vmatprep.subr.mxu0 0.0
    %3430 = vmatpush1.msra.mxu0 %v3252
    %3431 = vmatprep.subr.mxu0 0.0
    %3432 = vmatpush1.msra.mxu0 %v3253
    %3433 = vmatprep.subr.mxu0 0.0
    %3434 = vmatpush1.msra.mxu0 %v3254
    %3435 = vmatprep.subr.mxu0 0.0
    %3436 = vmatpush1.msra.mxu0 %v3255
    %3437 = vmatprep.subr.mxu0 0.0
    %3438 = vmatpush1.msra.mxu0 %v3256
    %3439 = vmatprep.subr.mxu0 0.0
    %3440 = vmatpush1.msra.mxu0 %v3257
    %3441 = vmatprep.subr.mxu0 0.0
    %3442 = vmatpush1.msra.mxu0 %v3258
    %3443 = vmatprep.subr.mxu0 0.0
    %3444 = vmatpush1.msra.mxu0 %v3259
    %3445 = vmatprep.subr.mxu0 0.0
    %3446 = vmatpush1.msra.mxu0 %v3260
    %3447 = vmatprep.subr.mxu0 0.0
    %3448 = vmatpush1.msra.mxu0 %v3261
    %3449 = vmatprep.subr.mxu0 0.0
    %3450 = vmatpush1.msra.mxu0 %v3262
    %3451 = vmatprep.subr.mxu0 0.0
    %3452 = vmatpush1.msra.mxu0 %v3263
    %3453 = vmatprep.subr.mxu0 0.0
    %3454 = vmatpush1.msra.mxu0 %v3264
    %3455 = vmatprep.subr.mxu0 0.0
    %3456 = vmatpush1.msra.mxu0 %v3265
    %3457 = vmatprep.subr.mxu0 0.0
    %3458 = vmatpush1.msra.mxu0 %v3266
    %3459 = vmatprep.subr.mxu0 0.0
    %3460 = vmatpush1.msra.mxu0 %v3267
    %3461 = vmatprep.subr.mxu0 0.0
    %3462 = vmatpush1.msra.mxu0 %v3268
    %3463 = vmatprep.subr.mxu0 0.0
    %3464 = vmatpush1.msra.mxu0 %v3269
    %3465 = vmatprep.subr.mxu0 0.0
    %3466 = vmatpush1.msra.mxu0 %v3270
    %3467 = vmatprep.subr.mxu0 0.0
    %3468 = vmatpush1.msra.mxu0 %v3271
    %3469 = vmatprep.subr.mxu0 0.0
    %3470 = vmatpush1.msra.mxu0 %v3272
    %3471 = vmatprep.subr.mxu0 0.0
    %3472 = vmatpush1.msra.mxu0 %v3273
    %3473 = vmatprep.subr.mxu0 0.0
    %3474 = vmatpush1.msra.mxu0 %v3274
    %3475 = vmatprep.subr.mxu0 0.0
    %3476 = vmatpush1.msra.mxu0 %v3275
    %3477 = vmatprep.subr.mxu0 0.0
    %3478 = vmatpush1.msra.mxu0 %v3276
    %3479 = vmatprep.subr.mxu0 0.0
    %3480 = vmatpush1.msra.mxu0 %v3277
    %3481 = vmatprep.subr.mxu0 0.0
    %3482 = vmatpush1.msra.mxu0 %v3278
    %3483 = vmatprep.subr.mxu0 0.0
    %3484 = vmatpush1.msra.mxu0 %v3279
    %3485 = vmatprep.mubr.f32.mxu0 %v2930
    %3486 = vmatmul.mubr.f32.gmra.mrb[0].mxu0 %v2928
    %v3487 = vpop.f32.mrb[0].mxu0
    %v3488 = vadd.f32 %v3418, %v3487
    %v3489 = vpop.f32.mrb[0].mxu0
    %3490 = vdwg.mxu0
    %3491 = vmatprep.subr.mxu0 0.0
    %3492 = vmatpush1.msra.mxu0 %v3280
    %3493 = vmatprep.subr.mxu0 0.0
    %3494 = vmatpush1.msra.mxu0 %v3281
    %3495 = vmatprep.subr.mxu0 0.0
    %3496 = vmatpush1.msra.mxu0 %v3282
    %3497 = vmatprep.subr.mxu0 0.0
    %3498 = vmatpush1.msra.mxu0 %v3283
    %3499 = vmatprep.subr.mxu0 0.0
    %3500 = vmatpush1.msra.mxu0 %v3284
    %3501 = vmatprep.subr.mxu0 0.0
    %3502 = vmatpush1.msra.mxu0 %v3285
    %3503 = vmatprep.subr.mxu0 0.0
    %3504 = vmatpush1.msra.mxu0 %v3286
    %3505 = vmatprep.subr.mxu0 0.0
    %3506 = vmatpush1.msra.mxu0 %v3287
    %3507 = vmatprep.subr.mxu0 0.0
    %3508 = vmatpush1.msra.mxu0 %v3288
    %3509 = vmatprep.subr.mxu0 0.0
    %3510 = vmatpush1.msra.mxu0 %v3289
    %3511 = vmatprep.subr.mxu0 0.0
    %3512 = vmatpush1.msra.mxu0 %v3290
    %3513 = vmatprep.subr.mxu0 0.0
    %3514 = vmatpush1.msra.mxu0 %v3291
    %3515 = vmatprep.subr.mxu0 0.0
    %3516 = vmatpush1.msra.mxu0 %v3292
    %3517 = vmatprep.subr.mxu0 0.0
    %3518 = vmatpush1.msra.mxu0 %v3293
    %3519 = vmatprep.subr.mxu0 0.0
    %3520 = vmatpush1.msra.mxu0 %v3294
    %3521 = vmatprep.subr.mxu0 0.0
    %3522 = vmatpush1.msra.mxu0 %v3295
    %3523 = vmatprep.subr.mxu0 0.0
    %3524 = vmatpush1.msra.mxu0 %v3296
    %3525 = vmatprep.subr.mxu0 0.0
    %3526 = vmatpush1.msra.mxu0 %v3297
    %3527 = vmatprep.subr.mxu0 0.0
    %3528 = vmatpush1.msra.mxu0 %v3298
    %3529 = vmatprep.subr.mxu0 0.0
    %3530 = vmatpush1.msra.mxu0 %v3299
    %3531 = vmatprep.subr.mxu0 0.0
    %3532 = vmatpush1.msra.mxu0 %v3300
    %3533 = vmatprep.subr.mxu0 0.0
    %3534 = vmatpush1.msra.mxu0 %v3301
    %3535 = vmatprep.subr.mxu0 0.0
    %3536 = vmatpush1.msra.mxu0 %v3302
    %3537 = vmatprep.subr.mxu0 0.0
    %3538 = vmatpush1.msra.mxu0 %v3303
    %3539 = vmatprep.subr.mxu0 0.0
    %3540 = vmatpush1.msra.mxu0 %v3304
    %3541 = vmatprep.subr.mxu0 0.0
    %3542 = vmatpush1.msra.mxu0 %v3305
    %3543 = vmatprep.subr.mxu0 0.0
    %3544 = vmatpush1.msra.mxu0 %v3306
    %3545 = vmatprep.subr.mxu0 0.0
    %3546 = vmatpush1.msra.mxu0 %v3307
    %3547 = vmatprep.subr.mxu0 0.0
    %3548 = vmatpush1.msra.mxu0 %v3308
    %3549 = vmatprep.subr.mxu0 0.0
    %3550 = vmatpush1.msra.mxu0 %v3309
    %3551 = vmatprep.subr.mxu0 0.0
    %3552 = vmatpush1.msra.mxu0 %v3310
    %3553 = vmatprep.subr.mxu0 0.0
    %3554 = vmatpush1.msra.mxu0 %v3311
    %3555 = vmatprep.mubr.f32.mxu0 %v3072
    %3556 = vmatmul.mubr.f32.gmra.mrb[0].mxu0 %v3070
    %v3557 = vpop.f32.mrb[0].mxu0
    %v3558 = vadd.f32 %v3488, %v3557
    %v3559 = vpop.f32.mrb[0].mxu0
    %3560 = vdwg.mxu0
    %3561 = vmatprep.subr.mxu0 0.0
    %3562 = vmatpush1.msra.mxu0 %v3312
    %3563 = vmatprep.subr.mxu0 0.0
    %3564 = vmatpush1.msra.mxu0 %v3313
    %3565 = vmatprep.subr.mxu0 0.0
    %3566 = vmatpush1.msra.mxu0 %v3314
    %3567 = vmatprep.subr.mxu0 0.0
    %3568 = vmatpush1.msra.mxu0 %v3315
    %3569 = vmatprep.subr.mxu0 0.0
    %3570 = vmatpush1.msra.mxu0 %v3316
    %3571 = vmatprep.subr.mxu0 0.0
    %3572 = vmatpush1.msra.mxu0 %v3317
    %3573 = vmatprep.subr.mxu0 0.0
    %3574 = vmatpush1.msra.mxu0 %v3318
    %3575 = vmatprep.subr.mxu0 0.0
    %3576 = vmatpush1.msra.mxu0 %v3319
    %3577 = vmatprep.subr.mxu0 0.0
    %3578 = vmatpush1.msra.mxu0 %v3320
    %3579 = vmatprep.subr.mxu0 0.0
    %3580 = vmatpush1.msra.mxu0 %v3321
    %3581 = vmatprep.subr.mxu0 0.0
    %3582 = vmatpush1.msra.mxu0 %v3322
    %3583 = vmatprep.subr.mxu0 0.0
    %3584 = vmatpush1.msra.mxu0 %v3323
    %3585 = vmatprep.subr.mxu0 0.0
    %3586 = vmatpush1.msra.mxu0 %v3324
    %3587 = vmatprep.subr.mxu0 0.0
    %3588 = vmatpush1.msra.mxu0 %v3325
    %3589 = vmatprep.subr.mxu0 0.0
    %3590 = vmatpush1.msra.mxu0 %v3326
    %3591 = vmatprep.subr.mxu0 0.0
    %3592 = vmatpush1.msra.mxu0 %v3327
    %3593 = vmatprep.subr.mxu0 0.0
    %3594 = vmatpush1.msra.mxu0 %v3328
    %3595 = vmatprep.subr.mxu0 0.0
    %3596 = vmatpush1.msra.mxu0 %v3329
    %3597 = vmatprep.subr.mxu0 0.0
    %3598 = vmatpush1.msra.mxu0 %v3330
    %3599 = vmatprep.subr.mxu0 0.0
    %3600 = vmatpush1.msra.mxu0 %v3331
    %3601 = vmatprep.subr.mxu0 0.0
    %3602 = vmatpush1.msra.mxu0 %v3332
    %3603 = vmatprep.subr.mxu0 0.0
    %3604 = vmatpush1.msra.mxu0 %v3333
    %3605 = vmatprep.subr.mxu0 0.0
    %3606 = vmatpush1.msra.mxu0 %v3334
    %3607 = vmatprep.subr.mxu0 0.0
    %3608 = vmatpush1.msra.mxu0 %v3335
    %3609 = vmatprep.subr.mxu0 0.0
    %3610 = vmatpush1.msra.mxu0 %v3336
    %3611 = vmatprep.subr.mxu0 0.0
    %3612 = vmatpush1.msra.mxu0 %v3337
    %3613 = vmatprep.subr.mxu0 0.0
    %3614 = vmatpush1.msra.mxu0 %v3338
    %3615 = vmatprep.subr.mxu0 0.0
    %3616 = vmatpush1.msra.mxu0 %v3339
    %3617 = vmatprep.subr.mxu0 0.0
    %3618 = vmatpush1.msra.mxu0 %v3340
    %3619 = vmatprep.subr.mxu0 0.0
    %3620 = vmatpush1.msra.mxu0 %v3341
    %3621 = vmatprep.subr.mxu0 0.0
    %3622 = vmatpush1.msra.mxu0 %v3342
    %3623 = vmatprep.subr.mxu0 0.0
    %3624 = vmatpush1.msra.mxu0 %v3343
    %3625 = vmatprep.mubr.f32.mxu0 %v3214
    %3626 = vmatmul.mubr.f32.gmra.mrb[0].mxu0 %v3212
    %v3627 = vpop.f32.mrb[0].mxu0
    %v3628 = vadd.f32 %v3558, %v3627
    %v3629 = vpop.f32.mrb[0].mxu0
    %3630 = vdwg.mxu0
    %3631 = vst [vmem:[#allocation23] sm:$0xff] %v3628
    // Predicated region
    $region106: #{tpu_custom_call.1} parent=1 // pred_check
      _
    $region107: #{tpu_custom_call.1} parent=1 // pred_check_branch
      %3633 = sbr.rel (0) target = $region109
    $region108: #{tpu_custom_call.1} parent=1 // pred_region
      %s3635 = ssub.s32 128, 128
      %3636 = vsyncadd [#allocation4], %s3635
      %s3638 = sshll.u32 [#allocation23], 4
      %s3639 = int_to_ptr.vmem [resolvable:$true] %s3638
      %3641 = dma.vmem_to_hbm [thread:$0]  %s3639, 128, %s13, [#allocation4]
    $region109: #{tpu_custom_call.1} parent=1 // pred_fallthru
      _
    // Predicated region
    $region110: #{tpu_custom_call.1} parent=1 // pred_check
      _
    $region111: #{tpu_custom_call.1} parent=1 // pred_check_branch
      %3643 = sbr.rel (0) target = $region113
    $region112: #{tpu_custom_call.1} parent=1 // pred_region
      %3644 = dma.done [#allocation4], 128
    $region113: #{tpu_custom_call.1} parent=1 // pred_fallthru
      _
    %3645 = vsyncpa [#allocation3], 1
    %3646 = vsyncpa [#allocation6], 1
    %3647 = vsyncpa [#allocation9], 1
    %3648 = vsyncpa [#allocation12], 1
    %3649 = vsyncpa [#allocation15], 1
    %3650 = vsyncpa [#allocation18], 1
    %3651 = vsyncpa [#allocation21], 1
    %3652 = vsyncpa [#allocation4], 1

</llo_original>
